<compile_context>
chip_gen: v7x
topology: tpu7x:2x2x1
jax: 0.10.0
libtpu: 0.0.40
codegen_flags: <defaults>
</compile_context>

<pallas_src>
import functools

import jax
import jax.numpy as jnp
from jax import lax
from jax.experimental import pallas as pl
from jax.experimental.pallas import tpu as pltpu


# ----------------------------- helpers --------------------------------------

def _layer_norm(x, g, b, eps=1e-5):
    # LayerNorm over last dim, biased variance, eps=1e-5 (torch default). f32 math.
    mu = jnp.mean(x, axis=-1, keepdims=True)
    var = jnp.mean((x - mu) ** 2, axis=-1, keepdims=True)
    return (x - mu) * lax.rsqrt(var + eps) * g + b


# ----------------------------- fused kernel ----------------------------------

def _frame_predictor_kernel(
    # --- inputs (one grid step == one batch element; weights constant-indexed) ---
    patches_ref,            # [1, N, K]        bf16  patchified frames for batch b
    emb_w_ref,              # [K, D]           bf16  Conv2d(k=p,s=p) as matmul
    pos_ref,                # [N, D]           f32   positional encoding (+ conv bias)
    norms_ref,              # [depth, 8, D]    f32   rows: ln1_g,ln1_b,proj_b,ln2_g,ln2_b,ff_b2,pad,pad
    ffb1_ref,               # [depth, 1, FF]   f32
    wqkv_ref,               # [depth, D, 3D]   bf16  (Wq pre-scaled by dim**-0.5)
    wproj_ref,              # [depth, D, D]    bf16  attn out-projection
    ffw1_ref,               # [depth, D, FF]   bf16
    ffw2_ref,               # [depth, FF, D]   bf16
    lnf_ref,                # [2, D]           f32   final LayerNorm gamma/beta
    dec_w_ref,              # [D, PP]          bf16  ConvTranspose2d(k=p,s=p) as matmul
    dec_b_ref,              # [1, PP]          f32
    # --- outputs ---
    out_ref,                # [1, 1, N*PP]     f32   lane-dense flattened patches
    # --- scratch ---
    ctx_sc,                 # [N, D]           f32   per-head context assembly buffer
    *, heads,
):
    N, D = pos_ref.shape
    hs = D // heads
    PP = dec_w_ref.shape[1]
    depth = norms_ref.shape[0]

    # ---- patch embedding + positional encoding (conv bias pre-folded into pos) ----
    x = jnp.dot(patches_ref[0], emb_w_ref[...],
                preferred_element_type=jnp.float32) + pos_ref[...]        # [N, D] f32

    # ---- transformer layers (fully unrolled in-kernel; activations stay in vregs) ----
    for l in range(depth):
        nrm = norms_ref[l]                                                # [8, D] f32
        ln1_g, ln1_b = nrm[0:1], nrm[1:2]
        bproj = nrm[2:3]
        ln2_g, ln2_b = nrm[3:4], nrm[4:5]
        ffb2 = nrm[5:6]
        ffb1 = ffb1_ref[l]                                                # [1, FF] f32

        # -- multi-head self-attention (pre-LN, residual) --
        h1 = _layer_norm(x, ln1_g, ln1_b).astype(jnp.bfloat16)            # [N, D]
        qkv = jnp.dot(h1, wqkv_ref[l],
                      preferred_element_type=jnp.float32)                 # [N, 3D] f32
        q = qkv[:, :D].astype(jnp.bfloat16)      # dim**-0.5 already folded into Wq
        k = qkv[:, D:2 * D].astype(jnp.bfloat16)
        v = qkv[:, 2 * D:].astype(jnp.bfloat16)

        # Per-head scores / softmax / context. Heads are tiny here (hs=8); the heavy
        # matmuls (QKV, proj, FF) are full-width.
        for hd in range(heads):
            sl = slice(hd * hs, (hd + 1) * hs)
            s = lax.dot_general(q[:, sl], k[:, sl], (((1,), (1,)), ((), ())),
                                preferred_element_type=jnp.float32)       # [N, N] f32
            s = s - jnp.max(s, axis=-1, keepdims=True)
            p = jnp.exp(s)
            p = p * pl.reciprocal(jnp.sum(p, axis=-1, keepdims=True), approx=True)
            ctx_sc[:, sl] = jnp.dot(p.astype(jnp.bfloat16), v[:, sl],
                                    preferred_element_type=jnp.float32)   # [N, hs]

        # Output projection: ONE [N,D]@[D,D] matmul (== nn.Linear(dim, dim) on the
        # head-concatenated context), residual add in-kernel.
        ctx = ctx_sc[...].astype(jnp.bfloat16)                            # [N, D]
        x = x + jnp.dot(ctx, wproj_ref[l],
                        preferred_element_type=jnp.float32) + bproj

        # -- feed-forward (pre-LN, residual) --
        h2 = _layer_norm(x, ln2_g, ln2_b).astype(jnp.bfloat16)
        ff = jnp.dot(h2, ffw1_ref[l],
                     preferred_element_type=jnp.float32) + ffb1           # [N, FF]
        ff = jnp.maximum(ff, 0.0).astype(jnp.bfloat16)
        ff = jnp.dot(ff, ffw2_ref[l],
                     preferred_element_type=jnp.float32) + ffb2           # [N, D]
        x = x + ff

    # ---- final LayerNorm + ConvTranspose2d decoder (as matmul) ----
    xf = _layer_norm(x, lnf_ref[0:1], lnf_ref[1:2]).astype(jnp.bfloat16)
    out = jnp.dot(xf, dec_w_ref[...],
                  preferred_element_type=jnp.float32) + dec_b_ref[...]    # [N, PP] f32

    # Lane-dense writeback: flatten [N, PP] into the [1, N*PP] (>=128 lanes) output slab
    # with static row stores (no in-kernel relayout reshape needed); the pure-layout
    # un-patchify happens in the wrapper.
    for n in range(N):
        out_ref[0, 0:1, n * PP:(n + 1) * PP] = out[n:n + 1, :]


# ----------------------------- parameters ------------------------------------

def init_params(key, *, seq_size, channels, img_size, patch_size, dim, depth, heads):
    del heads  # feature layout is head-agnostic: columns ordered [h0 e0.., h1 e0.., ...]
    N = (img_size // patch_size) ** 2
    K = seq_size * channels * patch_size * patch_size
    PP = patch_size * patch_size
    FF = 4 * dim
    ks = jax.random.split(key, 14)

    def nrm(k, shape, s=0.02):
        return s * jax.random.normal(k, shape, dtype=jnp.float32)

    # Attention scale folded into Wq at init (torch Head: scale = dim ** -0.5).
    scale = dim ** (-0.5)
    wq = nrm(ks[0], (depth, dim, dim)) * scale
    wk = nrm(ks[1], (depth, dim, dim))
    wv = nrm(ks[2], (depth, dim, dim))
    wqkv = jnp.concatenate([wq, wk, wv], axis=-1).astype(jnp.bfloat16)    # [depth, D, 3D]

    ones = jnp.ones((depth, 1, dim), jnp.float32)
    zeros = jnp.zeros((depth, 1, dim), jnp.float32)
    # Coalesced small per-layer f32 params (single DMA per stack):
    # rows = [ln1_g, ln1_b, proj_b, ln2_g, ln2_b, ff_b2, pad, pad]
    norms = jnp.concatenate(
        [ones, zeros, nrm(ks[3], (depth, 1, dim)), ones, zeros,
         nrm(ks[4], (depth, 1, dim)), zeros, zeros], axis=1)              # [depth, 8, D]

    return {
        # Conv2d(seq*chan, dim, k=p, s=p).weight reshaped to [K, dim] (K order = c,pi,pj)
        "emb_w": nrm(ks[5], (K, dim)).astype(jnp.bfloat16),
        "emb_b": nrm(ks[6], (1, dim)),
        "pos": jax.random.normal(ks[7], (N, dim), dtype=jnp.float32),
        "norms": norms,
        "ffb1": nrm(ks[8], (depth, 1, FF)),
        "wqkv": wqkv,
        # attn out-proj stored as [D_in, D_out] (== proj.weight.T)
        "wproj": nrm(ks[9], (depth, dim, dim)).astype(jnp.bfloat16),
        "ffw1": nrm(ks[10], (depth, dim, FF)).astype(jnp.bfloat16),
        "ffw2": nrm(ks[11], (depth, FF, dim)).astype(jnp.bfloat16),
        # final LayerNorm: row 0 = gamma, row 1 = beta
        "lnf": jnp.concatenate([jnp.ones((1, dim), jnp.float32),
                                jnp.zeros((1, dim), jnp.float32)], axis=0),
        # ConvTranspose2d(dim, 1, k=p, s=p).weight reshaped to [dim, p*p]
        "dec_w": nrm(ks[12], (dim, PP)).astype(jnp.bfloat16),
        "dec_b": nrm(ks[13], (1, PP)),
    }


# ----------------------------- forward pass ----------------------------------

def frame_predictor(params, x, *, patch_size, dim, depth, heads):
    # x: [B, seq, C, H, W]; the torch module views it as Conv2d input with seq*C channels.
    B, S, C, H, W = x.shape
    SC = S * C
    p = patch_size
    hp, wp = H // p, W // p
    N = hp * wp
    K = SC * p * p
    PP = p * p
    FF = 4 * dim

    # Patchify (Conv2d k=p, s=p == non-overlapping patch extraction); pure layout op.
    patches = (
        x.reshape(B, SC, hp, p, wp, p)
        .transpose(0, 2, 4, 1, 3, 5)            # [B, hp, wp, SC, p, p]
        .reshape(B, N, K)
        .astype(jnp.bfloat16)
    )

    # Fold the conv bias into the positional table: one fewer DMA + add in-kernel.
    pos_b = params["pos"] + params["emb_b"]

    kern = functools.partial(_frame_predictor_kernel, heads=heads)

    out_flat = pl.pallas_call(
        kern,
        out_shape=jax.ShapeDtypeStruct((B, 1, N * PP), jnp.float32),
        grid_spec=pltpu.PrefetchScalarGridSpec(
            num_scalar_prefetch=0,
            grid=(B,),
            in_specs=[
                pl.BlockSpec((1, N, K), lambda b: (b, 0, 0)),              # patches
                pl.BlockSpec((K, dim), lambda b: (0, 0)),                  # emb_w
                pl.BlockSpec((N, dim), lambda b: (0, 0)),                  # pos (+bias)
                pl.BlockSpec((depth, 8, dim), lambda b: (0, 0, 0)),        # norms stack
                pl.BlockSpec((depth, 1, FF), lambda b: (0, 0, 0)),         # ffb1 stack
                pl.BlockSpec((depth, dim, 3 * dim), lambda b: (0, 0, 0)),  # wqkv
                pl.BlockSpec((depth, dim, dim), lambda b: (0, 0, 0)),      # wproj
                pl.BlockSpec((depth, dim, FF), lambda b: (0, 0, 0)),       # ff_w1
                pl.BlockSpec((depth, FF, dim), lambda b: (0, 0, 0)),       # ff_w2
                pl.BlockSpec((2, dim), lambda b: (0, 0)),                  # final LN
                pl.BlockSpec((dim, PP), lambda b: (0, 0)),                 # dec_w
                pl.BlockSpec((1, PP), lambda b: (0, 0)),                   # dec_b
            ],
            out_specs=pl.BlockSpec((1, 1, N * PP), lambda b: (b, 0, 0)),
            scratch_shapes=[pltpu.VMEM((N, dim), jnp.float32)],
        ),
        compiler_params=pltpu.CompilerParams(
            dimension_semantics=("parallel",),       # batch -> megacore on v7x
            vmem_limit_bytes=32 * 1024 * 1024,
        ),
    )(
        patches, params["emb_w"], pos_b,
        params["norms"], params["ffb1"],
        params["wqkv"], params["wproj"],
        params["ffw1"], params["ffw2"],
        params["lnf"], params["dec_w"], params["dec_b"],
    )

    # Un-patchify (ConvTranspose2d k=p, s=p inverse layout), back to NCHW.
    out = (
        out_flat.reshape(B, hp, wp, p, p)
        .transpose(0, 1, 3, 2, 4)                    # [B, hp, p, wp, p]
        .reshape(B, 1, H, W)
    )
    return out


# ----------------------------- main -------------------------------------------

if __name__ == "__main__":
    # Small config consistent with the module (channels=1 so Conv2d in-channels == seq).
    seq_size, channels = 4, 1
    img_size, patch_size = 16, 4
    dim, depth, heads = 32, 2, 4
    B = 2

    key = jax.random.PRNGKey(0)
    kx, kp = jax.random.split(key)
    x = jax.random.normal(kx, (B, seq_size, channels, img_size, img_size),
                          dtype=jnp.float32)
    params = init_params(kp, seq_size=seq_size, channels=channels, img_size=img_size,
                         patch_size=patch_size, dim=dim, depth=depth, heads=heads)

    fwd = jax.jit(functools.partial(frame_predictor, patch_size=patch_size,
                                    dim=dim, depth=depth, heads=heads))
    out = fwd(params, x)
    jax.block_until_ready(out)
    assert out.shape == (B, 1, img_size, img_size), out.shape
    assert bool(jnp.all(jnp.isfinite(out)))
    print("KERNEL_OK")
</pallas_src>

<mosaic_0001>
module attributes {stable_mosaic.version = 11 : i64} {
  func.func @_frame_predictor_kernel(%arg0: i32, %arg1: memref<1x16x64xbf16, #tpu.memory_space<vmem>>, %arg2: memref<64x32xbf16, #tpu.memory_space<vmem>>, %arg3: memref<16x32xf32, #tpu.memory_space<vmem>>, %arg4: memref<2x8x32xf32, #tpu.memory_space<vmem>>, %arg5: memref<2x1x128xf32, #tpu.memory_space<vmem>>, %arg6: memref<2x32x96xbf16, #tpu.memory_space<vmem>>, %arg7: memref<2x32x32xbf16, #tpu.memory_space<vmem>>, %arg8: memref<2x32x128xbf16, #tpu.memory_space<vmem>>, %arg9: memref<2x128x32xbf16, #tpu.memory_space<vmem>>, %arg10: memref<2x32xf32, #tpu.memory_space<vmem>>, %arg11: memref<32x16xbf16, #tpu.memory_space<vmem>>, %arg12: memref<1x16xf32, #tpu.memory_space<vmem>>, %arg13: memref<1x1x256xf32, #tpu.memory_space<vmem>>, %arg14: memref<16x32xf32, #tpu.memory_space<vmem>>) attributes {dimension_semantics = [#tpu.dimension_semantics<parallel>], iteration_bounds = array<i64: 2>, scalar_prefetch = 0 : i64, scratch_operands = 1 : i64, tpu.core_type = #tpu.core_type<tc>, window_params = [{transform_indices = @transform_0, window_bounds = array<i64: 1, 16, 64>}, {pipeline_mode = #tpu.pipeline_mode<synchronous>, transform_indices = @transform_1, window_bounds = array<i64: 64, 32>}, {pipeline_mode = #tpu.pipeline_mode<synchronous>, transform_indices = @transform_2, window_bounds = array<i64: 16, 32>}, {pipeline_mode = #tpu.pipeline_mode<synchronous>, transform_indices = @transform_3, window_bounds = array<i64: 2, 8, 32>}, {pipeline_mode = #tpu.pipeline_mode<synchronous>, transform_indices = @transform_4, window_bounds = array<i64: 2, 1, 128>}, {pipeline_mode = #tpu.pipeline_mode<synchronous>, transform_indices = @transform_5, window_bounds = array<i64: 2, 32, 96>}, {pipeline_mode = #tpu.pipeline_mode<synchronous>, transform_indices = @transform_6, window_bounds = array<i64: 2, 32, 32>}, {pipeline_mode = #tpu.pipeline_mode<synchronous>, transform_indices = @transform_7, window_bounds = array<i64: 2, 32, 128>}, {pipeline_mode = #tpu.pipeline_mode<synchronous>, transform_indices = @transform_8, window_bounds = array<i64: 2, 128, 32>}, {pipeline_mode = #tpu.pipeline_mode<synchronous>, transform_indices = @transform_9, window_bounds = array<i64: 2, 32>}, {pipeline_mode = #tpu.pipeline_mode<synchronous>, transform_indices = @transform_10, window_bounds = array<i64: 32, 16>}, {pipeline_mode = #tpu.pipeline_mode<synchronous>, transform_indices = @transform_11, window_bounds = array<i64: 1, 16>}, {transform_indices = @transform_12, window_bounds = array<i64: 1, 1, 256>}]} {
    %c0 = arith.constant 0 : index
    %c0_0 = arith.constant 0 : index
    %c0_1 = arith.constant 0 : index
    %0 = vector.load %arg1[%c0, %c0_0, %c0_1] : memref<1x16x64xbf16, #tpu.memory_space<vmem>>, vector<1x16x64xbf16>
    %1 = vector.shape_cast %0 : vector<1x16x64xbf16> to vector<16x64xbf16>
    %c0_2 = arith.constant 0 : index
    %c0_3 = arith.constant 0 : index
    %2 = vector.load %arg2[%c0_2, %c0_3] : memref<64x32xbf16, #tpu.memory_space<vmem>>, vector<64x32xbf16>
    %cst = arith.constant dense<0.000000e+00> : vector<16x32xf32>
    %3 = tpu.matmul %1, %2, %cst {dimension_numbers = #tpu.dot_dimension_numbers<[1], [0], [0], [1], [0, 0, 1, 1], [], []>} : vector<16x64xbf16>, vector<64x32xbf16>, vector<16x32xf32> -> vector<16x32xf32>
    %c0_4 = arith.constant 0 : index
    %c0_5 = arith.constant 0 : index
    %4 = vector.load %arg3[%c0_4, %c0_5] : memref<16x32xf32, #tpu.memory_space<vmem>>, vector<16x32xf32>
    %5 = arith.addf %3, %4 : vector<16x32xf32>
    %c0_6 = arith.constant 0 : index
    %c0_7 = arith.constant 0 : index
    %c0_8 = arith.constant 0 : index
    %6 = vector.load %arg4[%c0_6, %c0_7, %c0_8] : memref<2x8x32xf32, #tpu.memory_space<vmem>>, vector<1x8x32xf32>
    %7 = vector.shape_cast %6 : vector<1x8x32xf32> to vector<8x32xf32>
    %8 = vector.extract_strided_slice %7 {offsets = [0, 0], sizes = [1, 32], strides = [1, 1]} : vector<8x32xf32> to vector<1x32xf32>
    %9 = vector.extract_strided_slice %7 {offsets = [1, 0], sizes = [1, 32], strides = [1, 1]} : vector<8x32xf32> to vector<1x32xf32>
    %10 = vector.extract_strided_slice %7 {offsets = [2, 0], sizes = [1, 32], strides = [1, 1]} : vector<8x32xf32> to vector<1x32xf32>
    %11 = vector.extract_strided_slice %7 {offsets = [3, 0], sizes = [1, 32], strides = [1, 1]} : vector<8x32xf32> to vector<1x32xf32>
    %12 = vector.extract_strided_slice %7 {offsets = [4, 0], sizes = [1, 32], strides = [1, 1]} : vector<8x32xf32> to vector<1x32xf32>
    %13 = vector.extract_strided_slice %7 {offsets = [5, 0], sizes = [1, 32], strides = [1, 1]} : vector<8x32xf32> to vector<1x32xf32>
    %c0_9 = arith.constant 0 : index
    %c0_10 = arith.constant 0 : index
    %c0_11 = arith.constant 0 : index
    %14 = vector.load %arg5[%c0_9, %c0_10, %c0_11] : memref<2x1x128xf32, #tpu.memory_space<vmem>>, vector<1x1x128xf32>
    %15 = vector.shape_cast %14 : vector<1x1x128xf32> to vector<1x128xf32>
    %cst_12 = arith.constant dense<0.000000e+00> : vector<16xf32>
    %16 = vector.multi_reduction <add>, %5, %cst_12 [1] : vector<16x32xf32> to vector<16xf32>
    %17 = vector.shape_cast %16 : vector<16xf32> to vector<16x1xf32>
    %cst_13 = arith.constant 3.200000e+01 : f32
    %18 = vector.broadcast %cst_13 : f32 to vector<16x1xf32>
    %19 = arith.divf %17, %18 : vector<16x1xf32>
    %20 = vector.broadcast %19 : vector<16x1xf32> to vector<16x32xf32>
    %21 = arith.subf %5, %20 : vector<16x32xf32>
    %22 = arith.mulf %21, %21 : vector<16x32xf32>
    %cst_14 = arith.constant dense<0.000000e+00> : vector<16xf32>
    %23 = vector.multi_reduction <add>, %22, %cst_14 [1] : vector<16x32xf32> to vector<16xf32>
    %24 = vector.shape_cast %23 : vector<16xf32> to vector<16x1xf32>
    %cst_15 = arith.constant 3.200000e+01 : f32
    %25 = vector.broadcast %cst_15 : f32 to vector<16x1xf32>
    %26 = arith.divf %24, %25 : vector<16x1xf32>
    %27 = vector.broadcast %19 : vector<16x1xf32> to vector<16x32xf32>
    %28 = arith.subf %5, %27 : vector<16x32xf32>
    %cst_16 = arith.constant 9.99999974E-6 : f32
    %29 = vector.broadcast %cst_16 : f32 to vector<16x1xf32>
    %30 = arith.addf %26, %29 : vector<16x1xf32>
    %31 = math.rsqrt %30 : vector<16x1xf32>
    %32 = vector.broadcast %31 : vector<16x1xf32> to vector<16x32xf32>
    %33 = arith.mulf %28, %32 : vector<16x32xf32>
    %34 = vector.broadcast %8 : vector<1x32xf32> to vector<16x32xf32>
    %35 = arith.mulf %33, %34 : vector<16x32xf32>
    %36 = vector.broadcast %9 : vector<1x32xf32> to vector<16x32xf32>
    %37 = arith.addf %35, %36 : vector<16x32xf32>
    %38 = arith.truncf %37 : vector<16x32xf32> to vector<16x32xbf16>
    %c0_17 = arith.constant 0 : index
    %c0_18 = arith.constant 0 : index
    %c0_19 = arith.constant 0 : index
    %39 = vector.load %arg6[%c0_17, %c0_18, %c0_19] : memref<2x32x96xbf16, #tpu.memory_space<vmem>>, vector<1x32x96xbf16>
    %40 = vector.shape_cast %39 : vector<1x32x96xbf16> to vector<32x96xbf16>
    %cst_20 = arith.constant dense<0.000000e+00> : vector<16x96xf32>
    %41 = tpu.matmul %38, %40, %cst_20 {dimension_numbers = #tpu.dot_dimension_numbers<[1], [0], [0], [1], [0, 0, 1, 1], [], []>} : vector<16x32xbf16>, vector<32x96xbf16>, vector<16x96xf32> -> vector<16x96xf32>
    %42 = vector.extract_strided_slice %41 {offsets = [0, 0], sizes = [16, 32], strides = [1, 1]} : vector<16x96xf32> to vector<16x32xf32>
    %43 = arith.truncf %42 : vector<16x32xf32> to vector<16x32xbf16>
    %44 = vector.extract_strided_slice %41 {offsets = [0, 32], sizes = [16, 32], strides = [1, 1]} : vector<16x96xf32> to vector<16x32xf32>
    %45 = arith.truncf %44 : vector<16x32xf32> to vector<16x32xbf16>
    %46 = vector.extract_strided_slice %41 {offsets = [0, 64], sizes = [16, 32], strides = [1, 1]} : vector<16x96xf32> to vector<16x32xf32>
    %47 = arith.truncf %46 : vector<16x32xf32> to vector<16x32xbf16>
    %48 = vector.extract_strided_slice %43 {offsets = [0, 0], sizes = [16, 8], strides = [1, 1]} : vector<16x32xbf16> to vector<16x8xbf16>
    %49 = vector.extract_strided_slice %45 {offsets = [0, 0], sizes = [16, 8], strides = [1, 1]} : vector<16x32xbf16> to vector<16x8xbf16>
    %cst_21 = arith.constant dense<0.000000e+00> : vector<16x16xf32>
    %50 = tpu.matmul %48, %49, %cst_21 {dimension_numbers = #tpu.dot_dimension_numbers<[1], [1], [0], [0], [0, 0, 1, 0], [], []>} : vector<16x8xbf16>, vector<16x8xbf16>, vector<16x16xf32> -> vector<16x16xf32>
    %cst_22 = arith.constant dense<0xFF800000> : vector<16xf32>
    %51 = vector.multi_reduction <maximumf>, %50, %cst_22 [1] : vector<16x16xf32> to vector<16xf32>
    %52 = vector.shape_cast %51 : vector<16xf32> to vector<16x1xf32>
    %53 = vector.broadcast %52 : vector<16x1xf32> to vector<16x16xf32>
    %54 = arith.subf %50, %53 : vector<16x16xf32>
    %55 = math.exp %54 : vector<16x16xf32>
    %cst_23 = arith.constant dense<0.000000e+00> : vector<16xf32>
    %56 = vector.multi_reduction <add>, %55, %cst_23 [1] : vector<16x16xf32> to vector<16xf32>
    %57 = vector.shape_cast %56 : vector<16xf32> to vector<16x1xf32>
    %58 = tpu.reciprocal %57 {approx = true} : vector<16x1xf32> -> vector<16x1xf32>
    %59 = vector.broadcast %58 : vector<16x1xf32> to vector<16x16xf32>
    %60 = arith.mulf %55, %59 : vector<16x16xf32>
    %61 = arith.truncf %60 : vector<16x16xf32> to vector<16x16xbf16>
    %62 = vector.extract_strided_slice %47 {offsets = [0, 0], sizes = [16, 8], strides = [1, 1]} : vector<16x32xbf16> to vector<16x8xbf16>
    %cst_24 = arith.constant dense<0.000000e+00> : vector<16x8xf32>
    %63 = tpu.matmul %61, %62, %cst_24 {dimension_numbers = #tpu.dot_dimension_numbers<[1], [0], [0], [1], [0, 0, 1, 1], [], []>} : vector<16x16xbf16>, vector<16x8xbf16>, vector<16x8xf32> -> vector<16x8xf32>
    %c0_25 = arith.constant 0 : index
    %c0_26 = arith.constant 0 : index
    %64 = vector.load %arg14[%c0_25, %c0_26] : memref<16x32xf32, #tpu.memory_space<vmem>>, vector<16x8xf32>
    tpu.vector_store %arg14[%c0_25, %c0_26], %63 {strides = array<i32>} : memref<16x32xf32, #tpu.memory_space<vmem>>, vector<16x8xf32>,
    %65 = vector.extract_strided_slice %43 {offsets = [0, 8], sizes = [16, 8], strides = [1, 1]} : vector<16x32xbf16> to vector<16x8xbf16>
    %66 = vector.extract_strided_slice %45 {offsets = [0, 8], sizes = [16, 8], strides = [1, 1]} : vector<16x32xbf16> to vector<16x8xbf16>
    %cst_27 = arith.constant dense<0.000000e+00> : vector<16x16xf32>
    %67 = tpu.matmul %65, %66, %cst_27 {dimension_numbers = #tpu.dot_dimension_numbers<[1], [1], [0], [0], [0, 0, 1, 0], [], []>} : vector<16x8xbf16>, vector<16x8xbf16>, vector<16x16xf32> -> vector<16x16xf32>
    %cst_28 = arith.constant dense<0xFF800000> : vector<16xf32>
    %68 = vector.multi_reduction <maximumf>, %67, %cst_28 [1] : vector<16x16xf32> to vector<16xf32>
    %69 = vector.shape_cast %68 : vector<16xf32> to vector<16x1xf32>
    %70 = vector.broadcast %69 : vector<16x1xf32> to vector<16x16xf32>
    %71 = arith.subf %67, %70 : vector<16x16xf32>
    %72 = math.exp %71 : vector<16x16xf32>
    %cst_29 = arith.constant dense<0.000000e+00> : vector<16xf32>
    %73 = vector.multi_reduction <add>, %72, %cst_29 [1] : vector<16x16xf32> to vector<16xf32>
    %74 = vector.shape_cast %73 : vector<16xf32> to vector<16x1xf32>
    %75 = tpu.reciprocal %74 {approx = true} : vector<16x1xf32> -> vector<16x1xf32>
    %76 = vector.broadcast %75 : vector<16x1xf32> to vector<16x16xf32>
    %77 = arith.mulf %72, %76 : vector<16x16xf32>
    %78 = arith.truncf %77 : vector<16x16xf32> to vector<16x16xbf16>
    %79 = vector.extract_strided_slice %47 {offsets = [0, 8], sizes = [16, 8], strides = [1, 1]} : vector<16x32xbf16> to vector<16x8xbf16>
    %cst_30 = arith.constant dense<0.000000e+00> : vector<16x8xf32>
    %80 = tpu.matmul %78, %79, %cst_30 {dimension_numbers = #tpu.dot_dimension_numbers<[1], [0], [0], [1], [0, 0, 1, 1], [], []>} : vector<16x16xbf16>, vector<16x8xbf16>, vector<16x8xf32> -> vector<16x8xf32>
    %c0_31 = arith.constant 0 : index
    %c8 = arith.constant 8 : index
    %81 = vector.load %arg14[%c0_31, %c8] : memref<16x32xf32, #tpu.memory_space<vmem>>, vector<16x8xf32>
    tpu.vector_store %arg14[%c0_31, %c8], %80 {strides = array<i32>} : memref<16x32xf32, #tpu.memory_space<vmem>>, vector<16x8xf32>,
    %82 = vector.extract_strided_slice %43 {offsets = [0, 16], sizes = [16, 8], strides = [1, 1]} : vector<16x32xbf16> to vector<16x8xbf16>
    %83 = vector.extract_strided_slice %45 {offsets = [0, 16], sizes = [16, 8], strides = [1, 1]} : vector<16x32xbf16> to vector<16x8xbf16>
    %cst_32 = arith.constant dense<0.000000e+00> : vector<16x16xf32>
    %84 = tpu.matmul %82, %83, %cst_32 {dimension_numbers = #tpu.dot_dimension_numbers<[1], [1], [0], [0], [0, 0, 1, 0], [], []>} : vector<16x8xbf16>, vector<16x8xbf16>, vector<16x16xf32> -> vector<16x16xf32>
    %cst_33 = arith.constant dense<0xFF800000> : vector<16xf32>
    %85 = vector.multi_reduction <maximumf>, %84, %cst_33 [1] : vector<16x16xf32> to vector<16xf32>
    %86 = vector.shape_cast %85 : vector<16xf32> to vector<16x1xf32>
    %87 = vector.broadcast %86 : vector<16x1xf32> to vector<16x16xf32>
    %88 = arith.subf %84, %87 : vector<16x16xf32>
    %89 = math.exp %88 : vector<16x16xf32>
    %cst_34 = arith.constant dense<0.000000e+00> : vector<16xf32>
    %90 = vector.multi_reduction <add>, %89, %cst_34 [1] : vector<16x16xf32> to vector<16xf32>
    %91 = vector.shape_cast %90 : vector<16xf32> to vector<16x1xf32>
    %92 = tpu.reciprocal %91 {approx = true} : vector<16x1xf32> -> vector<16x1xf32>
    %93 = vector.broadcast %92 : vector<16x1xf32> to vector<16x16xf32>
    %94 = arith.mulf %89, %93 : vector<16x16xf32>
    %95 = arith.truncf %94 : vector<16x16xf32> to vector<16x16xbf16>
    %96 = vector.extract_strided_slice %47 {offsets = [0, 16], sizes = [16, 8], strides = [1, 1]} : vector<16x32xbf16> to vector<16x8xbf16>
    %cst_35 = arith.constant dense<0.000000e+00> : vector<16x8xf32>
    %97 = tpu.matmul %95, %96, %cst_35 {dimension_numbers = #tpu.dot_dimension_numbers<[1], [0], [0], [1], [0, 0, 1, 1], [], []>} : vector<16x16xbf16>, vector<16x8xbf16>, vector<16x8xf32> -> vector<16x8xf32>
    %c0_36 = arith.constant 0 : index
    %c16 = arith.constant 16 : index
    %98 = vector.load %arg14[%c0_36, %c16] : memref<16x32xf32, #tpu.memory_space<vmem>>, vector<16x8xf32>
    tpu.vector_store %arg14[%c0_36, %c16], %97 {strides = array<i32>} : memref<16x32xf32, #tpu.memory_space<vmem>>, vector<16x8xf32>,
    %99 = vector.extract_strided_slice %43 {offsets = [0, 24], sizes = [16, 8], strides = [1, 1]} : vector<16x32xbf16> to vector<16x8xbf16>
    %100 = vector.extract_strided_slice %45 {offsets = [0, 24], sizes = [16, 8], strides = [1, 1]} : vector<16x32xbf16> to vector<16x8xbf16>
    %cst_37 = arith.constant dense<0.000000e+00> : vector<16x16xf32>
    %101 = tpu.matmul %99, %100, %cst_37 {dimension_numbers = #tpu.dot_dimension_numbers<[1], [1], [0], [0], [0, 0, 1, 0], [], []>} : vector<16x8xbf16>, vector<16x8xbf16>, vector<16x16xf32> -> vector<16x16xf32>
    %cst_38 = arith.constant dense<0xFF800000> : vector<16xf32>
    %102 = vector.multi_reduction <maximumf>, %101, %cst_38 [1] : vector<16x16xf32> to vector<16xf32>
    %103 = vector.shape_cast %102 : vector<16xf32> to vector<16x1xf32>
    %104 = vector.broadcast %103 : vector<16x1xf32> to vector<16x16xf32>
    %105 = arith.subf %101, %104 : vector<16x16xf32>
    %106 = math.exp %105 : vector<16x16xf32>
    %cst_39 = arith.constant dense<0.000000e+00> : vector<16xf32>
    %107 = vector.multi_reduction <add>, %106, %cst_39 [1] : vector<16x16xf32> to vector<16xf32>
    %108 = vector.shape_cast %107 : vector<16xf32> to vector<16x1xf32>
    %109 = tpu.reciprocal %108 {approx = true} : vector<16x1xf32> -> vector<16x1xf32>
    %110 = vector.broadcast %109 : vector<16x1xf32> to vector<16x16xf32>
    %111 = arith.mulf %106, %110 : vector<16x16xf32>
    %112 = arith.truncf %111 : vector<16x16xf32> to vector<16x16xbf16>
    %113 = vector.extract_strided_slice %47 {offsets = [0, 24], sizes = [16, 8], strides = [1, 1]} : vector<16x32xbf16> to vector<16x8xbf16>
    %cst_40 = arith.constant dense<0.000000e+00> : vector<16x8xf32>
    %114 = tpu.matmul %112, %113, %cst_40 {dimension_numbers = #tpu.dot_dimension_numbers<[1], [0], [0], [1], [0, 0, 1, 1], [], []>} : vector<16x16xbf16>, vector<16x8xbf16>, vector<16x8xf32> -> vector<16x8xf32>
    %c0_41 = arith.constant 0 : index
    %c24 = arith.constant 24 : index
    %115 = vector.load %arg14[%c0_41, %c24] : memref<16x32xf32, #tpu.memory_space<vmem>>, vector<16x8xf32>
    tpu.vector_store %arg14[%c0_41, %c24], %114 {strides = array<i32>} : memref<16x32xf32, #tpu.memory_space<vmem>>, vector<16x8xf32>,
    %c0_42 = arith.constant 0 : index
    %c0_43 = arith.constant 0 : index
    %116 = vector.load %arg14[%c0_42, %c0_43] : memref<16x32xf32, #tpu.memory_space<vmem>>, vector<16x32xf32>
    %117 = arith.truncf %116 : vector<16x32xf32> to vector<16x32xbf16>
    %c0_44 = arith.constant 0 : index
    %c0_45 = arith.constant 0 : index
    %c0_46 = arith.constant 0 : index
    %118 = vector.load %arg7[%c0_44, %c0_45, %c0_46] : memref<2x32x32xbf16, #tpu.memory_space<vmem>>, vector<1x32x32xbf16>
    %119 = vector.shape_cast %118 : vector<1x32x32xbf16> to vector<32x32xbf16>
    %cst_47 = arith.constant dense<0.000000e+00> : vector<16x32xf32>
    %120 = tpu.matmul %117, %119, %cst_47 {dimension_numbers = #tpu.dot_dimension_numbers<[1], [0], [0], [1], [0, 0, 1, 1], [], []>} : vector<16x32xbf16>, vector<32x32xbf16>, vector<16x32xf32> -> vector<16x32xf32>
    %121 = arith.addf %5, %120 : vector<16x32xf32>
    %122 = vector.broadcast %10 : vector<1x32xf32> to vector<16x32xf32>
    %123 = arith.addf %121, %122 : vector<16x32xf32>
    %cst_48 = arith.constant dense<0.000000e+00> : vector<16xf32>
    %124 = vector.multi_reduction <add>, %123, %cst_48 [1] : vector<16x32xf32> to vector<16xf32>
    %125 = vector.shape_cast %124 : vector<16xf32> to vector<16x1xf32>
    %cst_49 = arith.constant 3.200000e+01 : f32
    %126 = vector.broadcast %cst_49 : f32 to vector<16x1xf32>
    %127 = arith.divf %125, %126 : vector<16x1xf32>
    %128 = vector.broadcast %127 : vector<16x1xf32> to vector<16x32xf32>
    %129 = arith.subf %123, %128 : vector<16x32xf32>
    %130 = arith.mulf %129, %129 : vector<16x32xf32>
    %cst_50 = arith.constant dense<0.000000e+00> : vector<16xf32>
    %131 = vector.multi_reduction <add>, %130, %cst_50 [1] : vector<16x32xf32> to vector<16xf32>
    %132 = vector.shape_cast %131 : vector<16xf32> to vector<16x1xf32>
    %cst_51 = arith.constant 3.200000e+01 : f32
    %133 = vector.broadcast %cst_51 : f32 to vector<16x1xf32>
    %134 = arith.divf %132, %133 : vector<16x1xf32>
    %135 = vector.broadcast %127 : vector<16x1xf32> to vector<16x32xf32>
    %136 = arith.subf %123, %135 : vector<16x32xf32>
    %cst_52 = arith.constant 9.99999974E-6 : f32
    %137 = vector.broadcast %cst_52 : f32 to vector<16x1xf32>
    %138 = arith.addf %134, %137 : vector<16x1xf32>
    %139 = math.rsqrt %138 : vector<16x1xf32>
    %140 = vector.broadcast %139 : vector<16x1xf32> to vector<16x32xf32>
    %141 = arith.mulf %136, %140 : vector<16x32xf32>
    %142 = vector.broadcast %11 : vector<1x32xf32> to vector<16x32xf32>
    %143 = arith.mulf %141, %142 : vector<16x32xf32>
    %144 = vector.broadcast %12 : vector<1x32xf32> to vector<16x32xf32>
    %145 = arith.addf %143, %144 : vector<16x32xf32>
    %146 = arith.truncf %145 : vector<16x32xf32> to vector<16x32xbf16>
    %c0_53 = arith.constant 0 : index
    %c0_54 = arith.constant 0 : index
    %c0_55 = arith.constant 0 : index
    %147 = vector.load %arg8[%c0_53, %c0_54, %c0_55] : memref<2x32x128xbf16, #tpu.memory_space<vmem>>, vector<1x32x128xbf16>
    %148 = vector.shape_cast %147 : vector<1x32x128xbf16> to vector<32x128xbf16>
    %cst_56 = arith.constant dense<0.000000e+00> : vector<16x128xf32>
    %149 = tpu.matmul %146, %148, %cst_56 {dimension_numbers = #tpu.dot_dimension_numbers<[1], [0], [0], [1], [0, 0, 1, 1], [], []>} : vector<16x32xbf16>, vector<32x128xbf16>, vector<16x128xf32> -> vector<16x128xf32>
    %150 = vector.broadcast %15 : vector<1x128xf32> to vector<16x128xf32>
    %151 = arith.addf %149, %150 : vector<16x128xf32>
    %cst_57 = arith.constant 0.000000e+00 : f32
    %152 = vector.broadcast %cst_57 : f32 to vector<16x128xf32>
    %153 = arith.maximumf %151, %152 : vector<16x128xf32>
    %154 = arith.truncf %153 : vector<16x128xf32> to vector<16x128xbf16>
    %c0_58 = arith.constant 0 : index
    %c0_59 = arith.constant 0 : index
    %c0_60 = arith.constant 0 : index
    %155 = vector.load %arg9[%c0_58, %c0_59, %c0_60] : memref<2x128x32xbf16, #tpu.memory_space<vmem>>, vector<1x128x32xbf16>
    %156 = vector.shape_cast %155 : vector<1x128x32xbf16> to vector<128x32xbf16>
    %cst_61 = arith.constant dense<0.000000e+00> : vector<16x32xf32>
    %157 = tpu.matmul %154, %156, %cst_61 {dimension_numbers = #tpu.dot_dimension_numbers<[1], [0], [0], [1], [0, 0, 1, 1], [], []>} : vector<16x128xbf16>, vector<128x32xbf16>, vector<16x32xf32> -> vector<16x32xf32>
    %158 = vector.broadcast %13 : vector<1x32xf32> to vector<16x32xf32>
    %159 = arith.addf %157, %158 : vector<16x32xf32>
    %160 = arith.addf %123, %159 : vector<16x32xf32>
    %c1 = arith.constant 1 : index
    %c0_62 = arith.constant 0 : index
    %c0_63 = arith.constant 0 : index
    %161 = vector.load %arg4[%c1, %c0_62, %c0_63] : memref<2x8x32xf32, #tpu.memory_space<vmem>>, vector<1x8x32xf32>
    %162 = vector.shape_cast %161 : vector<1x8x32xf32> to vector<8x32xf32>
    %163 = vector.extract_strided_slice %162 {offsets = [0, 0], sizes = [1, 32], strides = [1, 1]} : vector<8x32xf32> to vector<1x32xf32>
    %164 = vector.extract_strided_slice %162 {offsets = [1, 0], sizes = [1, 32], strides = [1, 1]} : vector<8x32xf32> to vector<1x32xf32>
    %165 = vector.extract_strided_slice %162 {offsets = [2, 0], sizes = [1, 32], strides = [1, 1]} : vector<8x32xf32> to vector<1x32xf32>
    %166 = vector.extract_strided_slice %162 {offsets = [3, 0], sizes = [1, 32], strides = [1, 1]} : vector<8x32xf32> to vector<1x32xf32>
    %167 = vector.extract_strided_slice %162 {offsets = [4, 0], sizes = [1, 32], strides = [1, 1]} : vector<8x32xf32> to vector<1x32xf32>
    %168 = vector.extract_strided_slice %162 {offsets = [5, 0], sizes = [1, 32], strides = [1, 1]} : vector<8x32xf32> to vector<1x32xf32>
    %c1_64 = arith.constant 1 : index
    %c0_65 = arith.constant 0 : index
    %c0_66 = arith.constant 0 : index
    %169 = vector.load %arg5[%c1_64, %c0_65, %c0_66] : memref<2x1x128xf32, #tpu.memory_space<vmem>>, vector<1x1x128xf32>
    %170 = vector.shape_cast %169 : vector<1x1x128xf32> to vector<1x128xf32>
    %cst_67 = arith.constant dense<0.000000e+00> : vector<16xf32>
    %171 = vector.multi_reduction <add>, %160, %cst_67 [1] : vector<16x32xf32> to vector<16xf32>
    %172 = vector.shape_cast %171 : vector<16xf32> to vector<16x1xf32>
    %cst_68 = arith.constant 3.200000e+01 : f32
    %173 = vector.broadcast %cst_68 : f32 to vector<16x1xf32>
    %174 = arith.divf %172, %173 : vector<16x1xf32>
    %175 = vector.broadcast %174 : vector<16x1xf32> to vector<16x32xf32>
    %176 = arith.subf %160, %175 : vector<16x32xf32>
    %177 = arith.mulf %176, %176 : vector<16x32xf32>
    %cst_69 = arith.constant dense<0.000000e+00> : vector<16xf32>
    %178 = vector.multi_reduction <add>, %177, %cst_69 [1] : vector<16x32xf32> to vector<16xf32>
    %179 = vector.shape_cast %178 : vector<16xf32> to vector<16x1xf32>
    %cst_70 = arith.constant 3.200000e+01 : f32
    %180 = vector.broadcast %cst_70 : f32 to vector<16x1xf32>
    %181 = arith.divf %179, %180 : vector<16x1xf32>
    %182 = vector.broadcast %174 : vector<16x1xf32> to vector<16x32xf32>
    %183 = arith.subf %160, %182 : vector<16x32xf32>
    %cst_71 = arith.constant 9.99999974E-6 : f32
    %184 = vector.broadcast %cst_71 : f32 to vector<16x1xf32>
    %185 = arith.addf %181, %184 : vector<16x1xf32>
    %186 = math.rsqrt %185 : vector<16x1xf32>
    %187 = vector.broadcast %186 : vector<16x1xf32> to vector<16x32xf32>
    %188 = arith.mulf %183, %187 : vector<16x32xf32>
    %189 = vector.broadcast %163 : vector<1x32xf32> to vector<16x32xf32>
    %190 = arith.mulf %188, %189 : vector<16x32xf32>
    %191 = vector.broadcast %164 : vector<1x32xf32> to vector<16x32xf32>
    %192 = arith.addf %190, %191 : vector<16x32xf32>
    %193 = arith.truncf %192 : vector<16x32xf32> to vector<16x32xbf16>
    %c1_72 = arith.constant 1 : index
    %c0_73 = arith.constant 0 : index
    %c0_74 = arith.constant 0 : index
    %194 = vector.load %arg6[%c1_72, %c0_73, %c0_74] : memref<2x32x96xbf16, #tpu.memory_space<vmem>>, vector<1x32x96xbf16>
    %195 = vector.shape_cast %194 : vector<1x32x96xbf16> to vector<32x96xbf16>
    %cst_75 = arith.constant dense<0.000000e+00> : vector<16x96xf32>
    %196 = tpu.matmul %193, %195, %cst_75 {dimension_numbers = #tpu.dot_dimension_numbers<[1], [0], [0], [1], [0, 0, 1, 1], [], []>} : vector<16x32xbf16>, vector<32x96xbf16>, vector<16x96xf32> -> vector<16x96xf32>
    %197 = vector.extract_strided_slice %196 {offsets = [0, 0], sizes = [16, 32], strides = [1, 1]} : vector<16x96xf32> to vector<16x32xf32>
    %198 = arith.truncf %197 : vector<16x32xf32> to vector<16x32xbf16>
    %199 = vector.extract_strided_slice %196 {offsets = [0, 32], sizes = [16, 32], strides = [1, 1]} : vector<16x96xf32> to vector<16x32xf32>
    %200 = arith.truncf %199 : vector<16x32xf32> to vector<16x32xbf16>
    %201 = vector.extract_strided_slice %196 {offsets = [0, 64], sizes = [16, 32], strides = [1, 1]} : vector<16x96xf32> to vector<16x32xf32>
    %202 = arith.truncf %201 : vector<16x32xf32> to vector<16x32xbf16>
    %203 = vector.extract_strided_slice %198 {offsets = [0, 0], sizes = [16, 8], strides = [1, 1]} : vector<16x32xbf16> to vector<16x8xbf16>
    %204 = vector.extract_strided_slice %200 {offsets = [0, 0], sizes = [16, 8], strides = [1, 1]} : vector<16x32xbf16> to vector<16x8xbf16>
    %cst_76 = arith.constant dense<0.000000e+00> : vector<16x16xf32>
    %205 = tpu.matmul %203, %204, %cst_76 {dimension_numbers = #tpu.dot_dimension_numbers<[1], [1], [0], [0], [0, 0, 1, 0], [], []>} : vector<16x8xbf16>, vector<16x8xbf16>, vector<16x16xf32> -> vector<16x16xf32>
    %cst_77 = arith.constant dense<0xFF800000> : vector<16xf32>
    %206 = vector.multi_reduction <maximumf>, %205, %cst_77 [1] : vector<16x16xf32> to vector<16xf32>
    %207 = vector.shape_cast %206 : vector<16xf32> to vector<16x1xf32>
    %208 = vector.broadcast %207 : vector<16x1xf32> to vector<16x16xf32>
    %209 = arith.subf %205, %208 : vector<16x16xf32>
    %210 = math.exp %209 : vector<16x16xf32>
    %cst_78 = arith.constant dense<0.000000e+00> : vector<16xf32>
    %211 = vector.multi_reduction <add>, %210, %cst_78 [1] : vector<16x16xf32> to vector<16xf32>
    %212 = vector.shape_cast %211 : vector<16xf32> to vector<16x1xf32>
    %213 = tpu.reciprocal %212 {approx = true} : vector<16x1xf32> -> vector<16x1xf32>
    %214 = vector.broadcast %213 : vector<16x1xf32> to vector<16x16xf32>
    %215 = arith.mulf %210, %214 : vector<16x16xf32>
    %216 = arith.truncf %215 : vector<16x16xf32> to vector<16x16xbf16>
    %217 = vector.extract_strided_slice %202 {offsets = [0, 0], sizes = [16, 8], strides = [1, 1]} : vector<16x32xbf16> to vector<16x8xbf16>
    %cst_79 = arith.constant dense<0.000000e+00> : vector<16x8xf32>
    %218 = tpu.matmul %216, %217, %cst_79 {dimension_numbers = #tpu.dot_dimension_numbers<[1], [0], [0], [1], [0, 0, 1, 1], [], []>} : vector<16x16xbf16>, vector<16x8xbf16>, vector<16x8xf32> -> vector<16x8xf32>
    %c0_80 = arith.constant 0 : index
    %c0_81 = arith.constant 0 : index
    %219 = vector.load %arg14[%c0_80, %c0_81] : memref<16x32xf32, #tpu.memory_space<vmem>>, vector<16x8xf32>
    tpu.vector_store %arg14[%c0_80, %c0_81], %218 {strides = array<i32>} : memref<16x32xf32, #tpu.memory_space<vmem>>, vector<16x8xf32>,
    %220 = vector.extract_strided_slice %198 {offsets = [0, 8], sizes = [16, 8], strides = [1, 1]} : vector<16x32xbf16> to vector<16x8xbf16>
    %221 = vector.extract_strided_slice %200 {offsets = [0, 8], sizes = [16, 8], strides = [1, 1]} : vector<16x32xbf16> to vector<16x8xbf16>
    %cst_82 = arith.constant dense<0.000000e+00> : vector<16x16xf32>
    %222 = tpu.matmul %220, %221, %cst_82 {dimension_numbers = #tpu.dot_dimension_numbers<[1], [1], [0], [0], [0, 0, 1, 0], [], []>} : vector<16x8xbf16>, vector<16x8xbf16>, vector<16x16xf32> -> vector<16x16xf32>
    %cst_83 = arith.constant dense<0xFF800000> : vector<16xf32>
    %223 = vector.multi_reduction <maximumf>, %222, %cst_83 [1] : vector<16x16xf32> to vector<16xf32>
    %224 = vector.shape_cast %223 : vector<16xf32> to vector<16x1xf32>
    %225 = vector.broadcast %224 : vector<16x1xf32> to vector<16x16xf32>
    %226 = arith.subf %222, %225 : vector<16x16xf32>
    %227 = math.exp %226 : vector<16x16xf32>
    %cst_84 = arith.constant dense<0.000000e+00> : vector<16xf32>
    %228 = vector.multi_reduction <add>, %227, %cst_84 [1] : vector<16x16xf32> to vector<16xf32>
    %229 = vector.shape_cast %228 : vector<16xf32> to vector<16x1xf32>
    %230 = tpu.reciprocal %229 {approx = true} : vector<16x1xf32> -> vector<16x1xf32>
    %231 = vector.broadcast %230 : vector<16x1xf32> to vector<16x16xf32>
    %232 = arith.mulf %227, %231 : vector<16x16xf32>
    %233 = arith.truncf %232 : vector<16x16xf32> to vector<16x16xbf16>
    %234 = vector.extract_strided_slice %202 {offsets = [0, 8], sizes = [16, 8], strides = [1, 1]} : vector<16x32xbf16> to vector<16x8xbf16>
    %cst_85 = arith.constant dense<0.000000e+00> : vector<16x8xf32>
    %235 = tpu.matmul %233, %234, %cst_85 {dimension_numbers = #tpu.dot_dimension_numbers<[1], [0], [0], [1], [0, 0, 1, 1], [], []>} : vector<16x16xbf16>, vector<16x8xbf16>, vector<16x8xf32> -> vector<16x8xf32>
    %c0_86 = arith.constant 0 : index
    %c8_87 = arith.constant 8 : index
    %236 = vector.load %arg14[%c0_86, %c8_87] : memref<16x32xf32, #tpu.memory_space<vmem>>, vector<16x8xf32>
    tpu.vector_store %arg14[%c0_86, %c8_87], %235 {strides = array<i32>} : memref<16x32xf32, #tpu.memory_space<vmem>>, vector<16x8xf32>,
    %237 = vector.extract_strided_slice %198 {offsets = [0, 16], sizes = [16, 8], strides = [1, 1]} : vector<16x32xbf16> to vector<16x8xbf16>
    %238 = vector.extract_strided_slice %200 {offsets = [0, 16], sizes = [16, 8], strides = [1, 1]} : vector<16x32xbf16> to vector<16x8xbf16>
    %cst_88 = arith.constant dense<0.000000e+00> : vector<16x16xf32>
    %239 = tpu.matmul %237, %238, %cst_88 {dimension_numbers = #tpu.dot_dimension_numbers<[1], [1], [0], [0], [0, 0, 1, 0], [], []>} : vector<16x8xbf16>, vector<16x8xbf16>, vector<16x16xf32> -> vector<16x16xf32>
    %cst_89 = arith.constant dense<0xFF800000> : vector<16xf32>
    %240 = vector.multi_reduction <maximumf>, %239, %cst_89 [1] : vector<16x16xf32> to vector<16xf32>
    %241 = vector.shape_cast %240 : vector<16xf32> to vector<16x1xf32>
    %242 = vector.broadcast %241 : vector<16x1xf32> to vector<16x16xf32>
    %243 = arith.subf %239, %242 : vector<16x16xf32>
    %244 = math.exp %243 : vector<16x16xf32>
    %cst_90 = arith.constant dense<0.000000e+00> : vector<16xf32>
    %245 = vector.multi_reduction <add>, %244, %cst_90 [1] : vector<16x16xf32> to vector<16xf32>
    %246 = vector.shape_cast %245 : vector<16xf32> to vector<16x1xf32>
    %247 = tpu.reciprocal %246 {approx = true} : vector<16x1xf32> -> vector<16x1xf32>
    %248 = vector.broadcast %247 : vector<16x1xf32> to vector<16x16xf32>
    %249 = arith.mulf %244, %248 : vector<16x16xf32>
    %250 = arith.truncf %249 : vector<16x16xf32> to vector<16x16xbf16>
    %251 = vector.extract_strided_slice %202 {offsets = [0, 16], sizes = [16, 8], strides = [1, 1]} : vector<16x32xbf16> to vector<16x8xbf16>
    %cst_91 = arith.constant dense<0.000000e+00> : vector<16x8xf32>
    %252 = tpu.matmul %250, %251, %cst_91 {dimension_numbers = #tpu.dot_dimension_numbers<[1], [0], [0], [1], [0, 0, 1, 1], [], []>} : vector<16x16xbf16>, vector<16x8xbf16>, vector<16x8xf32> -> vector<16x8xf32>
    %c0_92 = arith.constant 0 : index
    %c16_93 = arith.constant 16 : index
    %253 = vector.load %arg14[%c0_92, %c16_93] : memref<16x32xf32, #tpu.memory_space<vmem>>, vector<16x8xf32>
    tpu.vector_store %arg14[%c0_92, %c16_93], %252 {strides = array<i32>} : memref<16x32xf32, #tpu.memory_space<vmem>>, vector<16x8xf32>,
    %254 = vector.extract_strided_slice %198 {offsets = [0, 24], sizes = [16, 8], strides = [1, 1]} : vector<16x32xbf16> to vector<16x8xbf16>
    %255 = vector.extract_strided_slice %200 {offsets = [0, 24], sizes = [16, 8], strides = [1, 1]} : vector<16x32xbf16> to vector<16x8xbf16>
    %cst_94 = arith.constant dense<0.000000e+00> : vector<16x16xf32>
    %256 = tpu.matmul %254, %255, %cst_94 {dimension_numbers = #tpu.dot_dimension_numbers<[1], [1], [0], [0], [0, 0, 1, 0], [], []>} : vector<16x8xbf16>, vector<16x8xbf16>, vector<16x16xf32> -> vector<16x16xf32>
    %cst_95 = arith.constant dense<0xFF800000> : vector<16xf32>
    %257 = vector.multi_reduction <maximumf>, %256, %cst_95 [1] : vector<16x16xf32> to vector<16xf32>
    %258 = vector.shape_cast %257 : vector<16xf32> to vector<16x1xf32>
    %259 = vector.broadcast %258 : vector<16x1xf32> to vector<16x16xf32>
    %260 = arith.subf %256, %259 : vector<16x16xf32>
    %261 = math.exp %260 : vector<16x16xf32>
    %cst_96 = arith.constant dense<0.000000e+00> : vector<16xf32>
    %262 = vector.multi_reduction <add>, %261, %cst_96 [1] : vector<16x16xf32> to vector<16xf32>
    %263 = vector.shape_cast %262 : vector<16xf32> to vector<16x1xf32>
    %264 = tpu.reciprocal %263 {approx = true} : vector<16x1xf32> -> vector<16x1xf32>
    %265 = vector.broadcast %264 : vector<16x1xf32> to vector<16x16xf32>
    %266 = arith.mulf %261, %265 : vector<16x16xf32>
    %267 = arith.truncf %266 : vector<16x16xf32> to vector<16x16xbf16>
    %268 = vector.extract_strided_slice %202 {offsets = [0, 24], sizes = [16, 8], strides = [1, 1]} : vector<16x32xbf16> to vector<16x8xbf16>
    %cst_97 = arith.constant dense<0.000000e+00> : vector<16x8xf32>
    %269 = tpu.matmul %267, %268, %cst_97 {dimension_numbers = #tpu.dot_dimension_numbers<[1], [0], [0], [1], [0, 0, 1, 1], [], []>} : vector<16x16xbf16>, vector<16x8xbf16>, vector<16x8xf32> -> vector<16x8xf32>
    %c0_98 = arith.constant 0 : index
    %c24_99 = arith.constant 24 : index
    %270 = vector.load %arg14[%c0_98, %c24_99] : memref<16x32xf32, #tpu.memory_space<vmem>>, vector<16x8xf32>
    tpu.vector_store %arg14[%c0_98, %c24_99], %269 {strides = array<i32>} : memref<16x32xf32, #tpu.memory_space<vmem>>, vector<16x8xf32>,
    %c0_100 = arith.constant 0 : index
    %c0_101 = arith.constant 0 : index
    %271 = vector.load %arg14[%c0_100, %c0_101] : memref<16x32xf32, #tpu.memory_space<vmem>>, vector<16x32xf32>
    %272 = arith.truncf %271 : vector<16x32xf32> to vector<16x32xbf16>
    %c1_102 = arith.constant 1 : index
    %c0_103 = arith.constant 0 : index
    %c0_104 = arith.constant 0 : index
    %273 = vector.load %arg7[%c1_102, %c0_103, %c0_104] : memref<2x32x32xbf16, #tpu.memory_space<vmem>>, vector<1x32x32xbf16>
    %274 = vector.shape_cast %273 : vector<1x32x32xbf16> to vector<32x32xbf16>
    %cst_105 = arith.constant dense<0.000000e+00> : vector<16x32xf32>
    %275 = tpu.matmul %272, %274, %cst_105 {dimension_numbers = #tpu.dot_dimension_numbers<[1], [0], [0], [1], [0, 0, 1, 1], [], []>} : vector<16x32xbf16>, vector<32x32xbf16>, vector<16x32xf32> -> vector<16x32xf32>
    %276 = arith.addf %160, %275 : vector<16x32xf32>
    %277 = vector.broadcast %165 : vector<1x32xf32> to vector<16x32xf32>
    %278 = arith.addf %276, %277 : vector<16x32xf32>
    %cst_106 = arith.constant dense<0.000000e+00> : vector<16xf32>
    %279 = vector.multi_reduction <add>, %278, %cst_106 [1] : vector<16x32xf32> to vector<16xf32>
    %280 = vector.shape_cast %279 : vector<16xf32> to vector<16x1xf32>
    %cst_107 = arith.constant 3.200000e+01 : f32
    %281 = vector.broadcast %cst_107 : f32 to vector<16x1xf32>
    %282 = arith.divf %280, %281 : vector<16x1xf32>
    %283 = vector.broadcast %282 : vector<16x1xf32> to vector<16x32xf32>
    %284 = arith.subf %278, %283 : vector<16x32xf32>
    %285 = arith.mulf %284, %284 : vector<16x32xf32>
    %cst_108 = arith.constant dense<0.000000e+00> : vector<16xf32>
    %286 = vector.multi_reduction <add>, %285, %cst_108 [1] : vector<16x32xf32> to vector<16xf32>
    %287 = vector.shape_cast %286 : vector<16xf32> to vector<16x1xf32>
    %cst_109 = arith.constant 3.200000e+01 : f32
    %288 = vector.broadcast %cst_109 : f32 to vector<16x1xf32>
    %289 = arith.divf %287, %288 : vector<16x1xf32>
    %290 = vector.broadcast %282 : vector<16x1xf32> to vector<16x32xf32>
    %291 = arith.subf %278, %290 : vector<16x32xf32>
    %cst_110 = arith.constant 9.99999974E-6 : f32
    %292 = vector.broadcast %cst_110 : f32 to vector<16x1xf32>
    %293 = arith.addf %289, %292 : vector<16x1xf32>
    %294 = math.rsqrt %293 : vector<16x1xf32>
    %295 = vector.broadcast %294 : vector<16x1xf32> to vector<16x32xf32>
    %296 = arith.mulf %291, %295 : vector<16x32xf32>
    %297 = vector.broadcast %166 : vector<1x32xf32> to vector<16x32xf32>
    %298 = arith.mulf %296, %297 : vector<16x32xf32>
    %299 = vector.broadcast %167 : vector<1x32xf32> to vector<16x32xf32>
    %300 = arith.addf %298, %299 : vector<16x32xf32>
    %301 = arith.truncf %300 : vector<16x32xf32> to vector<16x32xbf16>
    %c1_111 = arith.constant 1 : index
    %c0_112 = arith.constant 0 : index
    %c0_113 = arith.constant 0 : index
    %302 = vector.load %arg8[%c1_111, %c0_112, %c0_113] : memref<2x32x128xbf16, #tpu.memory_space<vmem>>, vector<1x32x128xbf16>
    %303 = vector.shape_cast %302 : vector<1x32x128xbf16> to vector<32x128xbf16>
    %cst_114 = arith.constant dense<0.000000e+00> : vector<16x128xf32>
    %304 = tpu.matmul %301, %303, %cst_114 {dimension_numbers = #tpu.dot_dimension_numbers<[1], [0], [0], [1], [0, 0, 1, 1], [], []>} : vector<16x32xbf16>, vector<32x128xbf16>, vector<16x128xf32> -> vector<16x128xf32>
    %305 = vector.broadcast %170 : vector<1x128xf32> to vector<16x128xf32>
    %306 = arith.addf %304, %305 : vector<16x128xf32>
    %cst_115 = arith.constant 0.000000e+00 : f32
    %307 = vector.broadcast %cst_115 : f32 to vector<16x128xf32>
    %308 = arith.maximumf %306, %307 : vector<16x128xf32>
    %309 = arith.truncf %308 : vector<16x128xf32> to vector<16x128xbf16>
    %c1_116 = arith.constant 1 : index
    %c0_117 = arith.constant 0 : index
    %c0_118 = arith.constant 0 : index
    %310 = vector.load %arg9[%c1_116, %c0_117, %c0_118] : memref<2x128x32xbf16, #tpu.memory_space<vmem>>, vector<1x128x32xbf16>
    %311 = vector.shape_cast %310 : vector<1x128x32xbf16> to vector<128x32xbf16>
    %cst_119 = arith.constant dense<0.000000e+00> : vector<16x32xf32>
    %312 = tpu.matmul %309, %311, %cst_119 {dimension_numbers = #tpu.dot_dimension_numbers<[1], [0], [0], [1], [0, 0, 1, 1], [], []>} : vector<16x128xbf16>, vector<128x32xbf16>, vector<16x32xf32> -> vector<16x32xf32>
    %313 = vector.broadcast %168 : vector<1x32xf32> to vector<16x32xf32>
    %314 = arith.addf %312, %313 : vector<16x32xf32>
    %315 = arith.addf %278, %314 : vector<16x32xf32>
    %c0_120 = arith.constant 0 : index
    %c0_121 = arith.constant 0 : index
    %316 = vector.load %arg10[%c0_120, %c0_121] : memref<2x32xf32, #tpu.memory_space<vmem>>, vector<1x32xf32>
    %c1_122 = arith.constant 1 : index
    %c0_123 = arith.constant 0 : index
    %317 = vector.load %arg10[%c1_122, %c0_123] : memref<2x32xf32, #tpu.memory_space<vmem>>, vector<1x32xf32>
    %cst_124 = arith.constant dense<0.000000e+00> : vector<16xf32>
    %318 = vector.multi_reduction <add>, %315, %cst_124 [1] : vector<16x32xf32> to vector<16xf32>
    %319 = vector.shape_cast %318 : vector<16xf32> to vector<16x1xf32>
    %cst_125 = arith.constant 3.200000e+01 : f32
    %320 = vector.broadcast %cst_125 : f32 to vector<16x1xf32>
    %321 = arith.divf %319, %320 : vector<16x1xf32>
    %322 = vector.broadcast %321 : vector<16x1xf32> to vector<16x32xf32>
    %323 = arith.subf %315, %322 : vector<16x32xf32>
    %324 = arith.mulf %323, %323 : vector<16x32xf32>
    %cst_126 = arith.constant dense<0.000000e+00> : vector<16xf32>
    %325 = vector.multi_reduction <add>, %324, %cst_126 [1] : vector<16x32xf32> to vector<16xf32>
    %326 = vector.shape_cast %325 : vector<16xf32> to vector<16x1xf32>
    %cst_127 = arith.constant 3.200000e+01 : f32
    %327 = vector.broadcast %cst_127 : f32 to vector<16x1xf32>
    %328 = arith.divf %326, %327 : vector<16x1xf32>
    %329 = vector.broadcast %321 : vector<16x1xf32> to vector<16x32xf32>
    %330 = arith.subf %315, %329 : vector<16x32xf32>
    %cst_128 = arith.constant 9.99999974E-6 : f32
    %331 = vector.broadcast %cst_128 : f32 to vector<16x1xf32>
    %332 = arith.addf %328, %331 : vector<16x1xf32>
    %333 = math.rsqrt %332 : vector<16x1xf32>
    %334 = vector.broadcast %333 : vector<16x1xf32> to vector<16x32xf32>
    %335 = arith.mulf %330, %334 : vector<16x32xf32>
    %336 = vector.broadcast %316 : vector<1x32xf32> to vector<16x32xf32>
    %337 = arith.mulf %335, %336 : vector<16x32xf32>
    %338 = vector.broadcast %317 : vector<1x32xf32> to vector<16x32xf32>
    %339 = arith.addf %337, %338 : vector<16x32xf32>
    %340 = arith.truncf %339 : vector<16x32xf32> to vector<16x32xbf16>
    %c0_129 = arith.constant 0 : index
    %c0_130 = arith.constant 0 : index
    %341 = vector.load %arg11[%c0_129, %c0_130] : memref<32x16xbf16, #tpu.memory_space<vmem>>, vector<32x16xbf16>
    %cst_131 = arith.constant dense<0.000000e+00> : vector<16x16xf32>
    %342 = tpu.matmul %340, %341, %cst_131 {dimension_numbers = #tpu.dot_dimension_numbers<[1], [0], [0], [1], [0, 0, 1, 1], [], []>} : vector<16x32xbf16>, vector<32x16xbf16>, vector<16x16xf32> -> vector<16x16xf32>
    %c0_132 = arith.constant 0 : index
    %c0_133 = arith.constant 0 : index
    %343 = vector.load %arg12[%c0_132, %c0_133] : memref<1x16xf32, #tpu.memory_space<vmem>>, vector<1x16xf32>
    %344 = vector.broadcast %343 : vector<1x16xf32> to vector<16x16xf32>
    %345 = arith.addf %342, %344 : vector<16x16xf32>
    %346 = vector.extract_strided_slice %345 {offsets = [0, 0], sizes = [1, 16], strides = [1, 1]} : vector<16x16xf32> to vector<1x16xf32>
    %c0_134 = arith.constant 0 : index
    %c0_135 = arith.constant 0 : index
    %c0_136 = arith.constant 0 : index
    %347 = vector.load %arg13[%c0_134, %c0_135, %c0_136] : memref<1x1x256xf32, #tpu.memory_space<vmem>>, vector<1x1x16xf32>
    %348 = vector.shape_cast %347 : vector<1x1x16xf32> to vector<1x16xf32>
    %349 = vector.shape_cast %346 : vector<1x16xf32> to vector<1x1x16xf32>
    tpu.vector_store %arg13[%c0_134, %c0_135, %c0_136], %349 {strides = array<i32>} : memref<1x1x256xf32, #tpu.memory_space<vmem>>, vector<1x1x16xf32>,
    %350 = vector.extract_strided_slice %345 {offsets = [1, 0], sizes = [1, 16], strides = [1, 1]} : vector<16x16xf32> to vector<1x16xf32>
    %c0_137 = arith.constant 0 : index
    %c0_138 = arith.constant 0 : index
    %c16_139 = arith.constant 16 : index
    %351 = vector.load %arg13[%c0_137, %c0_138, %c16_139] : memref<1x1x256xf32, #tpu.memory_space<vmem>>, vector<1x1x16xf32>
    %352 = vector.shape_cast %351 : vector<1x1x16xf32> to vector<1x16xf32>
    %353 = vector.shape_cast %350 : vector<1x16xf32> to vector<1x1x16xf32>
    tpu.vector_store %arg13[%c0_137, %c0_138, %c16_139], %353 {strides = array<i32>} : memref<1x1x256xf32, #tpu.memory_space<vmem>>, vector<1x1x16xf32>,
    %354 = vector.extract_strided_slice %345 {offsets = [2, 0], sizes = [1, 16], strides = [1, 1]} : vector<16x16xf32> to vector<1x16xf32>
    %c0_140 = arith.constant 0 : index
    %c0_141 = arith.constant 0 : index
    %c32 = arith.constant 32 : index
    %355 = vector.load %arg13[%c0_140, %c0_141, %c32] : memref<1x1x256xf32, #tpu.memory_space<vmem>>, vector<1x1x16xf32>
    %356 = vector.shape_cast %355 : vector<1x1x16xf32> to vector<1x16xf32>
    %357 = vector.shape_cast %354 : vector<1x16xf32> to vector<1x1x16xf32>
    tpu.vector_store %arg13[%c0_140, %c0_141, %c32], %357 {strides = array<i32>} : memref<1x1x256xf32, #tpu.memory_space<vmem>>, vector<1x1x16xf32>,
    %358 = vector.extract_strided_slice %345 {offsets = [3, 0], sizes = [1, 16], strides = [1, 1]} : vector<16x16xf32> to vector<1x16xf32>
    %c0_142 = arith.constant 0 : index
    %c0_143 = arith.constant 0 : index
    %c48 = arith.constant 48 : index
    %359 = vector.load %arg13[%c0_142, %c0_143, %c48] : memref<1x1x256xf32, #tpu.memory_space<vmem>>, vector<1x1x16xf32>
    %360 = vector.shape_cast %359 : vector<1x1x16xf32> to vector<1x16xf32>
    %361 = vector.shape_cast %358 : vector<1x16xf32> to vector<1x1x16xf32>
    tpu.vector_store %arg13[%c0_142, %c0_143, %c48], %361 {strides = array<i32>} : memref<1x1x256xf32, #tpu.memory_space<vmem>>, vector<1x1x16xf32>,
    %362 = vector.extract_strided_slice %345 {offsets = [4, 0], sizes = [1, 16], strides = [1, 1]} : vector<16x16xf32> to vector<1x16xf32>
    %c0_144 = arith.constant 0 : index
    %c0_145 = arith.constant 0 : index
    %c64 = arith.constant 64 : index
    %363 = vector.load %arg13[%c0_144, %c0_145, %c64] : memref<1x1x256xf32, #tpu.memory_space<vmem>>, vector<1x1x16xf32>
    %364 = vector.shape_cast %363 : vector<1x1x16xf32> to vector<1x16xf32>
    %365 = vector.shape_cast %362 : vector<1x16xf32> to vector<1x1x16xf32>
    tpu.vector_store %arg13[%c0_144, %c0_145, %c64], %365 {strides = array<i32>} : memref<1x1x256xf32, #tpu.memory_space<vmem>>, vector<1x1x16xf32>,
    %366 = vector.extract_strided_slice %345 {offsets = [5, 0], sizes = [1, 16], strides = [1, 1]} : vector<16x16xf32> to vector<1x16xf32>
    %c0_146 = arith.constant 0 : index
    %c0_147 = arith.constant 0 : index
    %c80 = arith.constant 80 : index
    %367 = vector.load %arg13[%c0_146, %c0_147, %c80] : memref<1x1x256xf32, #tpu.memory_space<vmem>>, vector<1x1x16xf32>
    %368 = vector.shape_cast %367 : vector<1x1x16xf32> to vector<1x16xf32>
    %369 = vector.shape_cast %366 : vector<1x16xf32> to vector<1x1x16xf32>
    tpu.vector_store %arg13[%c0_146, %c0_147, %c80], %369 {strides = array<i32>} : memref<1x1x256xf32, #tpu.memory_space<vmem>>, vector<1x1x16xf32>,
    %370 = vector.extract_strided_slice %345 {offsets = [6, 0], sizes = [1, 16], strides = [1, 1]} : vector<16x16xf32> to vector<1x16xf32>
    %c0_148 = arith.constant 0 : index
    %c0_149 = arith.constant 0 : index
    %c96 = arith.constant 96 : index
    %371 = vector.load %arg13[%c0_148, %c0_149, %c96] : memref<1x1x256xf32, #tpu.memory_space<vmem>>, vector<1x1x16xf32>
    %372 = vector.shape_cast %371 : vector<1x1x16xf32> to vector<1x16xf32>
    %373 = vector.shape_cast %370 : vector<1x16xf32> to vector<1x1x16xf32>
    tpu.vector_store %arg13[%c0_148, %c0_149, %c96], %373 {strides = array<i32>} : memref<1x1x256xf32, #tpu.memory_space<vmem>>, vector<1x1x16xf32>,
    %374 = vector.extract_strided_slice %345 {offsets = [7, 0], sizes = [1, 16], strides = [1, 1]} : vector<16x16xf32> to vector<1x16xf32>
    %c0_150 = arith.constant 0 : index
    %c0_151 = arith.constant 0 : index
    %c112 = arith.constant 112 : index
    %375 = vector.load %arg13[%c0_150, %c0_151, %c112] : memref<1x1x256xf32, #tpu.memory_space<vmem>>, vector<1x1x16xf32>
    %376 = vector.shape_cast %375 : vector<1x1x16xf32> to vector<1x16xf32>
    %377 = vector.shape_cast %374 : vector<1x16xf32> to vector<1x1x16xf32>
    tpu.vector_store %arg13[%c0_150, %c0_151, %c112], %377 {strides = array<i32>} : memref<1x1x256xf32, #tpu.memory_space<vmem>>, vector<1x1x16xf32>,
    %378 = vector.extract_strided_slice %345 {offsets = [8, 0], sizes = [1, 16], strides = [1, 1]} : vector<16x16xf32> to vector<1x16xf32>
    %c0_152 = arith.constant 0 : index
    %c0_153 = arith.constant 0 : index
    %c128 = arith.constant 128 : index
    %379 = vector.load %arg13[%c0_152, %c0_153, %c128] : memref<1x1x256xf32, #tpu.memory_space<vmem>>, vector<1x1x16xf32>
    %380 = vector.shape_cast %379 : vector<1x1x16xf32> to vector<1x16xf32>
    %381 = vector.shape_cast %378 : vector<1x16xf32> to vector<1x1x16xf32>
    tpu.vector_store %arg13[%c0_152, %c0_153, %c128], %381 {strides = array<i32>} : memref<1x1x256xf32, #tpu.memory_space<vmem>>, vector<1x1x16xf32>,
    %382 = vector.extract_strided_slice %345 {offsets = [9, 0], sizes = [1, 16], strides = [1, 1]} : vector<16x16xf32> to vector<1x16xf32>
    %c0_154 = arith.constant 0 : index
    %c0_155 = arith.constant 0 : index
    %c144 = arith.constant 144 : index
    %383 = vector.load %arg13[%c0_154, %c0_155, %c144] : memref<1x1x256xf32, #tpu.memory_space<vmem>>, vector<1x1x16xf32>
    %384 = vector.shape_cast %383 : vector<1x1x16xf32> to vector<1x16xf32>
    %385 = vector.shape_cast %382 : vector<1x16xf32> to vector<1x1x16xf32>
    tpu.vector_store %arg13[%c0_154, %c0_155, %c144], %385 {strides = array<i32>} : memref<1x1x256xf32, #tpu.memory_space<vmem>>, vector<1x1x16xf32>,
    %386 = vector.extract_strided_slice %345 {offsets = [10, 0], sizes = [1, 16], strides = [1, 1]} : vector<16x16xf32> to vector<1x16xf32>
    %c0_156 = arith.constant 0 : index
    %c0_157 = arith.constant 0 : index
    %c160 = arith.constant 160 : index
    %387 = vector.load %arg13[%c0_156, %c0_157, %c160] : memref<1x1x256xf32, #tpu.memory_space<vmem>>, vector<1x1x16xf32>
    %388 = vector.shape_cast %387 : vector<1x1x16xf32> to vector<1x16xf32>
    %389 = vector.shape_cast %386 : vector<1x16xf32> to vector<1x1x16xf32>
    tpu.vector_store %arg13[%c0_156, %c0_157, %c160], %389 {strides = array<i32>} : memref<1x1x256xf32, #tpu.memory_space<vmem>>, vector<1x1x16xf32>,
    %390 = vector.extract_strided_slice %345 {offsets = [11, 0], sizes = [1, 16], strides = [1, 1]} : vector<16x16xf32> to vector<1x16xf32>
    %c0_158 = arith.constant 0 : index
    %c0_159 = arith.constant 0 : index
    %c176 = arith.constant 176 : index
    %391 = vector.load %arg13[%c0_158, %c0_159, %c176] : memref<1x1x256xf32, #tpu.memory_space<vmem>>, vector<1x1x16xf32>
    %392 = vector.shape_cast %391 : vector<1x1x16xf32> to vector<1x16xf32>
    %393 = vector.shape_cast %390 : vector<1x16xf32> to vector<1x1x16xf32>
    tpu.vector_store %arg13[%c0_158, %c0_159, %c176], %393 {strides = array<i32>} : memref<1x1x256xf32, #tpu.memory_space<vmem>>, vector<1x1x16xf32>,
    %394 = vector.extract_strided_slice %345 {offsets = [12, 0], sizes = [1, 16], strides = [1, 1]} : vector<16x16xf32> to vector<1x16xf32>
    %c0_160 = arith.constant 0 : index
    %c0_161 = arith.constant 0 : index
    %c192 = arith.constant 192 : index
    %395 = vector.load %arg13[%c0_160, %c0_161, %c192] : memref<1x1x256xf32, #tpu.memory_space<vmem>>, vector<1x1x16xf32>
    %396 = vector.shape_cast %395 : vector<1x1x16xf32> to vector<1x16xf32>
    %397 = vector.shape_cast %394 : vector<1x16xf32> to vector<1x1x16xf32>
    tpu.vector_store %arg13[%c0_160, %c0_161, %c192], %397 {strides = array<i32>} : memref<1x1x256xf32, #tpu.memory_space<vmem>>, vector<1x1x16xf32>,
    %398 = vector.extract_strided_slice %345 {offsets = [13, 0], sizes = [1, 16], strides = [1, 1]} : vector<16x16xf32> to vector<1x16xf32>
    %c0_162 = arith.constant 0 : index
    %c0_163 = arith.constant 0 : index
    %c208 = arith.constant 208 : index
    %399 = vector.load %arg13[%c0_162, %c0_163, %c208] : memref<1x1x256xf32, #tpu.memory_space<vmem>>, vector<1x1x16xf32>
    %400 = vector.shape_cast %399 : vector<1x1x16xf32> to vector<1x16xf32>
    %401 = vector.shape_cast %398 : vector<1x16xf32> to vector<1x1x16xf32>
    tpu.vector_store %arg13[%c0_162, %c0_163, %c208], %401 {strides = array<i32>} : memref<1x1x256xf32, #tpu.memory_space<vmem>>, vector<1x1x16xf32>,
    %402 = vector.extract_strided_slice %345 {offsets = [14, 0], sizes = [1, 16], strides = [1, 1]} : vector<16x16xf32> to vector<1x16xf32>
    %c0_164 = arith.constant 0 : index
    %c0_165 = arith.constant 0 : index
    %c224 = arith.constant 224 : index
    %403 = vector.load %arg13[%c0_164, %c0_165, %c224] : memref<1x1x256xf32, #tpu.memory_space<vmem>>, vector<1x1x16xf32>
    %404 = vector.shape_cast %403 : vector<1x1x16xf32> to vector<1x16xf32>
    %405 = vector.shape_cast %402 : vector<1x16xf32> to vector<1x1x16xf32>
    tpu.vector_store %arg13[%c0_164, %c0_165, %c224], %405 {strides = array<i32>} : memref<1x1x256xf32, #tpu.memory_space<vmem>>, vector<1x1x16xf32>,
    %406 = vector.extract_strided_slice %345 {offsets = [15, 0], sizes = [1, 16], strides = [1, 1]} : vector<16x16xf32> to vector<1x16xf32>
    %c0_166 = arith.constant 0 : index
    %c0_167 = arith.constant 0 : index
    %c240 = arith.constant 240 : index
    %407 = vector.load %arg13[%c0_166, %c0_167, %c240] : memref<1x1x256xf32, #tpu.memory_space<vmem>>, vector<1x1x16xf32>
    %408 = vector.shape_cast %407 : vector<1x1x16xf32> to vector<1x16xf32>
    %409 = vector.shape_cast %406 : vector<1x16xf32> to vector<1x1x16xf32>
    tpu.vector_store %arg13[%c0_166, %c0_167, %c240], %409 {strides = array<i32>} : memref<1x1x256xf32, #tpu.memory_space<vmem>>, vector<1x1x16xf32>,
    return
  }
  func.func @transform_0(%arg0: i32) -> (i32, i32, i32) {
    %c0_i32 = arith.constant 0 : i32
    %c0_i32_0 = arith.constant 0 : i32
    %c0_i32_1 = arith.constant 0 : i32
    return %arg0, %c0_i32, %c0_i32_0 : i32, i32, i32
  }
  func.func @transform_1(%arg0: i32) -> (i32, i32) {
    %c0_i32 = arith.constant 0 : i32
    %c0_i32_0 = arith.constant 0 : i32
    %c0_i32_1 = arith.constant 0 : i32
    return %c0_i32, %c0_i32_0 : i32, i32
  }
  func.func @transform_2(%arg0: i32) -> (i32, i32) {
    %c0_i32 = arith.constant 0 : i32
    %c0_i32_0 = arith.constant 0 : i32
    %c0_i32_1 = arith.constant 0 : i32
    return %c0_i32, %c0_i32_0 : i32, i32
  }
  func.func @transform_3(%arg0: i32) -> (i32, i32, i32) {
    %c0_i32 = arith.constant 0 : i32
    %c0_i32_0 = arith.constant 0 : i32
    %c0_i32_1 = arith.constant 0 : i32
    %c0_i32_2 = arith.constant 0 : i32
    return %c0_i32, %c0_i32_0, %c0_i32_1 : i32, i32, i32
  }
  func.func @transform_4(%arg0: i32) -> (i32, i32, i32) {
    %c0_i32 = arith.constant 0 : i32
    %c0_i32_0 = arith.constant 0 : i32
    %c0_i32_1 = arith.constant 0 : i32
    %c0_i32_2 = arith.constant 0 : i32
    return %c0_i32, %c0_i32_0, %c0_i32_1 : i32, i32, i32
  }
  func.func @transform_5(%arg0: i32) -> (i32, i32, i32) {
    %c0_i32 = arith.constant 0 : i32
    %c0_i32_0 = arith.constant 0 : i32
    %c0_i32_1 = arith.constant 0 : i32
    %c0_i32_2 = arith.constant 0 : i32
    return %c0_i32, %c0_i32_0, %c0_i32_1 : i32, i32, i32
  }
  func.func @transform_6(%arg0: i32) -> (i32, i32, i32) {
    %c0_i32 = arith.constant 0 : i32
    %c0_i32_0 = arith.constant 0 : i32
    %c0_i32_1 = arith.constant 0 : i32
    %c0_i32_2 = arith.constant 0 : i32
    return %c0_i32, %c0_i32_0, %c0_i32_1 : i32, i32, i32
  }
  func.func @transform_7(%arg0: i32) -> (i32, i32, i32) {
    %c0_i32 = arith.constant 0 : i32
    %c0_i32_0 = arith.constant 0 : i32
    %c0_i32_1 = arith.constant 0 : i32
    %c0_i32_2 = arith.constant 0 : i32
    return %c0_i32, %c0_i32_0, %c0_i32_1 : i32, i32, i32
  }
  func.func @transform_8(%arg0: i32) -> (i32, i32, i32) {
    %c0_i32 = arith.constant 0 : i32
    %c0_i32_0 = arith.constant 0 : i32
    %c0_i32_1 = arith.constant 0 : i32
    %c0_i32_2 = arith.constant 0 : i32
    return %c0_i32, %c0_i32_0, %c0_i32_1 : i32, i32, i32
  }
  func.func @transform_9(%arg0: i32) -> (i32, i32) {
    %c0_i32 = arith.constant 0 : i32
    %c0_i32_0 = arith.constant 0 : i32
    %c0_i32_1 = arith.constant 0 : i32
    return %c0_i32, %c0_i32_0 : i32, i32
  }
  func.func @transform_10(%arg0: i32) -> (i32, i32) {
    %c0_i32 = arith.constant 0 : i32
    %c0_i32_0 = arith.constant 0 : i32
    %c0_i32_1 = arith.constant 0 : i32
    return %c0_i32, %c0_i32_0 : i32, i32
  }
  func.func @transform_11(%arg0: i32) -> (i32, i32) {
    %c0_i32 = arith.constant 0 : i32
    %c0_i32_0 = arith.constant 0 : i32
    %c0_i32_1 = arith.constant 0 : i32
    return %c0_i32, %c0_i32_0 : i32, i32
  }
  func.func @transform_12(%arg0: i32) -> (i32, i32, i32) {
    %c0_i32 = arith.constant 0 : i32
    %c0_i32_0 = arith.constant 0 : i32
    %c0_i32_1 = arith.constant 0 : i32
    return %arg0, %c0_i32, %c0_i32_0 : i32, i32, i32
  }
}

</mosaic_0001>

<llo_original>
// kernel: frame_predictor.1
$region0: #{frame_predictor.1}
  #allocation0 [shape = 'u32[]', space=smem, size = 0x4, offset = 0x4, fixed_abs, tag = 'smem constant byte address 0x4 - core index']
  #allocation1 [shape = 'u32[144,128]{1,0:T(1,128)}', space=vmem, size = 0x12000, scoped, tag = 'internal scratch']
  #allocation2 [shape = 'f32[16,32]{1,0:T(8,128)}', space=vmem, size = 0x2000, scoped, tag = 'scratch operand']
  %s0 = inlined_call_operand.vmem [shape: bf16[2,16,64], index: 0, kind: input, shape index: {}]
  %s1 = inlined_call_operand.vmem [shape: bf16[64,32], index: 1, kind: input, shape index: {}]
  %s2 = inlined_call_operand.vmem [shape: f32[16,32], index: 2, kind: input, shape index: {}]
  %s3 = inlined_call_operand.vmem [shape: f32[2,8,32], index: 3, kind: input, shape index: {}]
  %s4 = inlined_call_operand.vmem [shape: f32[2,1,128], index: 4, kind: input, shape index: {}]
  %s5 = inlined_call_operand.vmem [shape: bf16[2,32,96], index: 5, kind: input, shape index: {}]
  %s6 = inlined_call_operand.vmem [shape: bf16[2,32,32], index: 6, kind: input, shape index: {}]
  %s7 = inlined_call_operand.vmem [shape: bf16[2,32,128], index: 7, kind: input, shape index: {}]
  %s8 = inlined_call_operand.vmem [shape: bf16[2,128,32], index: 8, kind: input, shape index: {}]
  %s9 = inlined_call_operand.vmem [shape: f32[2,32], index: 9, kind: input, shape index: {}]
  %s10 = inlined_call_operand.vmem [shape: bf16[32,16], index: 10, kind: input, shape index: {}]
  %s11 = inlined_call_operand.vmem [shape: f32[1,16], index: 11, kind: input, shape index: {}]
  %s12 = inlined_call_operand.vmem [shape: f32[2,1,256], index: 12, kind: output, shape index: {}]
  %s13 = sld [smem:[#allocation0]]
  $region81: #{frame_predictor.1} parent=0
    _
  %s15 = ssub.s32 1, %s13
  %s16 = scalar_select 0, %s15, %s13
  loop: start=0, step=1, limit=4
  $region2: #{frame_predictor.1} parent=0 // loop_pre_header
    _
  $region3: #{frame_predictor.1} parent=0 // loop_header
    %s18 = sphi 0, %s22
    %p19 = scmp.ge.s32.totalorder %s18, 4
    %s28 = sphi 0, %s30
    %s31 = sphi 0, %s28
    %s32 = sphi 0, %s31
    %s48 = sphi 0, %s32
    %s52 = sphi 0, %s52
    %s54 = sphi 0, %s52
    %s55 = sphi 0, %s54
    %s69 = sphi 0, %s55
    %s73 = sphi 0, %s73
    %s75 = sphi 0, %s73
    %s76 = sphi 0, %s75
    %s90 = sphi 0, %s76
    %s94 = sphi 0, %s94
    %s96 = sphi 0, %s94
    %s97 = sphi 0, %s96
    %s111 = sphi 0, %s97
    %s115 = sphi 0, %s115
    %s117 = sphi 0, %s115
    %s118 = sphi 0, %s117
    %s132 = sphi 0, %s118
    %s136 = sphi 0, %s136
    %s138 = sphi 0, %s136
    %s139 = sphi 0, %s138
    %s153 = sphi 0, %s139
    %s157 = sphi 0, %s157
    %s159 = sphi 0, %s157
    %s160 = sphi 0, %s159
    %s174 = sphi 0, %s160
    %s178 = sphi 0, %s178
    %s180 = sphi 0, %s178
    %s181 = sphi 0, %s180
    %s195 = sphi 0, %s181
    %s199 = sphi 0, %s199
    %s201 = sphi 0, %s199
    %s202 = sphi 0, %s201
    %s216 = sphi 0, %s202
    %s220 = sphi 0, %s220
    %s222 = sphi 0, %s220
    %s223 = sphi 0, %s222
    %s237 = sphi 0, %s223
    %s241 = sphi 0, %s241
    %s243 = sphi 0, %s241
    %s244 = sphi 0, %s243
    %s258 = sphi 0, %s244
    %s262 = sphi 0, %s262
    %s264 = sphi 0, %s262
    %s265 = sphi 0, %s264
    %s279 = sphi 0, %s265
    %s285 = sphi 0, %s287
    %s288 = sphi 0, %s285
    %s289 = sphi 0, %s288
    %s305 = sphi 0, %s289
  $region4: #{frame_predictor.1} parent=0 // loop_header_branch
    %21 = sbr.rel (%p19) target = $region8
  $region5: #{frame_predictor.1} parent=0 // loop_body
    %s23 = ssub.s32 %s18, 1
    %s24 = ssub.s32 %s18, 2
    %s25 = sadd.s32 %s18, 1
    %s26 = ssub.s32 %s18, %s25
    %p27 = scmp.eq.s32.totalorder %s26, 0
    %s29 = sadd.s32 %s28, 1
    %s30 = scalar_select %p27, %s28, %s29
    %p33 = pneg %p27
    %p34 = scmp.eq.s32.totalorder %s18, 1
    %p35 = por %p33, %p34
    %p36 = scmp.ne.s32.totalorder %s28, %s31
    %p37 = scmp.eq.s32.totalorder %s18, 0
    %p38 = por %p36, %p37
    %p39 = scmp.ne.s32.totalorder %s28, %s31
    %p40 = scmp.eq.s32.totalorder %s23, 1
    %p41 = por %p39, %p40
    %p42 = scmp.ne.s32.totalorder %s31, %s32
    %p43 = scmp.eq.s32.totalorder %s23, 0
    %p44 = por %p42, %p43
    %p45 = scmp.ne.s32.totalorder %s31, %s32
    %p46 = scmp.eq.s32.totalorder %s24, 1
    %p47 = por %p45, %p46
    %p49 = scmp.ne.s32.totalorder %s32, %s48
    %p50 = scmp.eq.s32.totalorder %s24, 0
    %p51 = por %p49, %p50
    %s53 = sadd.s32 %s52, 1
    %p56 = scmp.eq.s32.totalorder %s18, 1
    %p57 = scmp.ne.s32.totalorder %s52, %s54
    %p58 = scmp.eq.s32.totalorder %s18, 0
    %p59 = por %p57, %p58
    %p60 = scmp.ne.s32.totalorder %s52, %s54
    %p61 = scmp.eq.s32.totalorder %s23, 1
    %p62 = por %p60, %p61
    %p63 = scmp.ne.s32.totalorder %s54, %s55
    %p64 = scmp.eq.s32.totalorder %s23, 0
    %p65 = por %p63, %p64
    %p66 = scmp.ne.s32.totalorder %s54, %s55
    %p67 = scmp.eq.s32.totalorder %s24, 1
    %p68 = por %p66, %p67
    %p70 = scmp.ne.s32.totalorder %s55, %s69
    %p71 = scmp.eq.s32.totalorder %s24, 0
    %p72 = por %p70, %p71
    %s74 = sadd.s32 %s73, 1
    %p77 = scmp.eq.s32.totalorder %s18, 1
    %p78 = scmp.ne.s32.totalorder %s73, %s75
    %p79 = scmp.eq.s32.totalorder %s18, 0
    %p80 = por %p78, %p79
    %p81 = scmp.ne.s32.totalorder %s73, %s75
    %p82 = scmp.eq.s32.totalorder %s23, 1
    %p83 = por %p81, %p82
    %p84 = scmp.ne.s32.totalorder %s75, %s76
    %p85 = scmp.eq.s32.totalorder %s23, 0
    %p86 = por %p84, %p85
    %p87 = scmp.ne.s32.totalorder %s75, %s76
    %p88 = scmp.eq.s32.totalorder %s24, 1
    %p89 = por %p87, %p88
    %p91 = scmp.ne.s32.totalorder %s76, %s90
    %p92 = scmp.eq.s32.totalorder %s24, 0
    %p93 = por %p91, %p92
    %s95 = sadd.s32 %s94, 1
    %p98 = scmp.eq.s32.totalorder %s18, 1
    %p99 = scmp.ne.s32.totalorder %s94, %s96
    %p100 = scmp.eq.s32.totalorder %s18, 0
    %p101 = por %p99, %p100
    %p102 = scmp.ne.s32.totalorder %s94, %s96
    %p103 = scmp.eq.s32.totalorder %s23, 1
    %p104 = por %p102, %p103
    %p105 = scmp.ne.s32.totalorder %s96, %s97
    %p106 = scmp.eq.s32.totalorder %s23, 0
    %p107 = por %p105, %p106
    %p108 = scmp.ne.s32.totalorder %s96, %s97
    %p109 = scmp.eq.s32.totalorder %s24, 1
    %p110 = por %p108, %p109
    %p112 = scmp.ne.s32.totalorder %s97, %s111
    %p113 = scmp.eq.s32.totalorder %s24, 0
    %p114 = por %p112, %p113
    %s116 = sadd.s32 %s115, 1
    %p119 = scmp.eq.s32.totalorder %s18, 1
    %p120 = scmp.ne.s32.totalorder %s115, %s117
    %p121 = scmp.eq.s32.totalorder %s18, 0
    %p122 = por %p120, %p121
    %p123 = scmp.ne.s32.totalorder %s115, %s117
    %p124 = scmp.eq.s32.totalorder %s23, 1
    %p125 = por %p123, %p124
    %p126 = scmp.ne.s32.totalorder %s117, %s118
    %p127 = scmp.eq.s32.totalorder %s23, 0
    %p128 = por %p126, %p127
    %p129 = scmp.ne.s32.totalorder %s117, %s118
    %p130 = scmp.eq.s32.totalorder %s24, 1
    %p131 = por %p129, %p130
    %p133 = scmp.ne.s32.totalorder %s118, %s132
    %p134 = scmp.eq.s32.totalorder %s24, 0
    %p135 = por %p133, %p134
    %s137 = sadd.s32 %s136, 1
    %p140 = scmp.eq.s32.totalorder %s18, 1
    %p141 = scmp.ne.s32.totalorder %s136, %s138
    %p142 = scmp.eq.s32.totalorder %s18, 0
    %p143 = por %p141, %p142
    %p144 = scmp.ne.s32.totalorder %s136, %s138
    %p145 = scmp.eq.s32.totalorder %s23, 1
    %p146 = por %p144, %p145
    %p147 = scmp.ne.s32.totalorder %s138, %s139
    %p148 = scmp.eq.s32.totalorder %s23, 0
    %p149 = por %p147, %p148
    %p150 = scmp.ne.s32.totalorder %s138, %s139
    %p151 = scmp.eq.s32.totalorder %s24, 1
    %p152 = por %p150, %p151
    %p154 = scmp.ne.s32.totalorder %s139, %s153
    %p155 = scmp.eq.s32.totalorder %s24, 0
    %p156 = por %p154, %p155
    %s158 = sadd.s32 %s157, 1
    %p161 = scmp.eq.s32.totalorder %s18, 1
    %p162 = scmp.ne.s32.totalorder %s157, %s159
    %p163 = scmp.eq.s32.totalorder %s18, 0
    %p164 = por %p162, %p163
    %p165 = scmp.ne.s32.totalorder %s157, %s159
    %p166 = scmp.eq.s32.totalorder %s23, 1
    %p167 = por %p165, %p166
    %p168 = scmp.ne.s32.totalorder %s159, %s160
    %p169 = scmp.eq.s32.totalorder %s23, 0
    %p170 = por %p168, %p169
    %p171 = scmp.ne.s32.totalorder %s159, %s160
    %p172 = scmp.eq.s32.totalorder %s24, 1
    %p173 = por %p171, %p172
    %p175 = scmp.ne.s32.totalorder %s160, %s174
    %p176 = scmp.eq.s32.totalorder %s24, 0
    %p177 = por %p175, %p176
    %s179 = sadd.s32 %s178, 1
    %p182 = scmp.eq.s32.totalorder %s18, 1
    %p183 = scmp.ne.s32.totalorder %s178, %s180
    %p184 = scmp.eq.s32.totalorder %s18, 0
    %p185 = por %p183, %p184
    %p186 = scmp.ne.s32.totalorder %s178, %s180
    %p187 = scmp.eq.s32.totalorder %s23, 1
    %p188 = por %p186, %p187
    %p189 = scmp.ne.s32.totalorder %s180, %s181
    %p190 = scmp.eq.s32.totalorder %s23, 0
    %p191 = por %p189, %p190
    %p192 = scmp.ne.s32.totalorder %s180, %s181
    %p193 = scmp.eq.s32.totalorder %s24, 1
    %p194 = por %p192, %p193
    %p196 = scmp.ne.s32.totalorder %s181, %s195
    %p197 = scmp.eq.s32.totalorder %s24, 0
    %p198 = por %p196, %p197
    %s200 = sadd.s32 %s199, 1
    %p203 = scmp.eq.s32.totalorder %s18, 1
    %p204 = scmp.ne.s32.totalorder %s199, %s201
    %p205 = scmp.eq.s32.totalorder %s18, 0
    %p206 = por %p204, %p205
    %p207 = scmp.ne.s32.totalorder %s199, %s201
    %p208 = scmp.eq.s32.totalorder %s23, 1
    %p209 = por %p207, %p208
    %p210 = scmp.ne.s32.totalorder %s201, %s202
    %p211 = scmp.eq.s32.totalorder %s23, 0
    %p212 = por %p210, %p211
    %p213 = scmp.ne.s32.totalorder %s201, %s202
    %p214 = scmp.eq.s32.totalorder %s24, 1
    %p215 = por %p213, %p214
    %p217 = scmp.ne.s32.totalorder %s202, %s216
    %p218 = scmp.eq.s32.totalorder %s24, 0
    %p219 = por %p217, %p218
    %s221 = sadd.s32 %s220, 1
    %p224 = scmp.eq.s32.totalorder %s18, 1
    %p225 = scmp.ne.s32.totalorder %s220, %s222
    %p226 = scmp.eq.s32.totalorder %s18, 0
    %p227 = por %p225, %p226
    %p228 = scmp.ne.s32.totalorder %s220, %s222
    %p229 = scmp.eq.s32.totalorder %s23, 1
    %p230 = por %p228, %p229
    %p231 = scmp.ne.s32.totalorder %s222, %s223
    %p232 = scmp.eq.s32.totalorder %s23, 0
    %p233 = por %p231, %p232
    %p234 = scmp.ne.s32.totalorder %s222, %s223
    %p235 = scmp.eq.s32.totalorder %s24, 1
    %p236 = por %p234, %p235
    %p238 = scmp.ne.s32.totalorder %s223, %s237
    %p239 = scmp.eq.s32.totalorder %s24, 0
    %p240 = por %p238, %p239
    %s242 = sadd.s32 %s241, 1
    %p245 = scmp.eq.s32.totalorder %s18, 1
    %p246 = scmp.ne.s32.totalorder %s241, %s243
    %p247 = scmp.eq.s32.totalorder %s18, 0
    %p248 = por %p246, %p247
    %p249 = scmp.ne.s32.totalorder %s241, %s243
    %p250 = scmp.eq.s32.totalorder %s23, 1
    %p251 = por %p249, %p250
    %p252 = scmp.ne.s32.totalorder %s243, %s244
    %p253 = scmp.eq.s32.totalorder %s23, 0
    %p254 = por %p252, %p253
    %p255 = scmp.ne.s32.totalorder %s243, %s244
    %p256 = scmp.eq.s32.totalorder %s24, 1
    %p257 = por %p255, %p256
    %p259 = scmp.ne.s32.totalorder %s244, %s258
    %p260 = scmp.eq.s32.totalorder %s24, 0
    %p261 = por %p259, %p260
    %s263 = sadd.s32 %s262, 1
    %p266 = scmp.eq.s32.totalorder %s18, 1
    %p267 = scmp.ne.s32.totalorder %s262, %s264
    %p268 = scmp.eq.s32.totalorder %s18, 0
    %p269 = por %p267, %p268
    %p270 = scmp.ne.s32.totalorder %s262, %s264
    %p271 = scmp.eq.s32.totalorder %s23, 1
    %p272 = por %p270, %p271
    %p273 = scmp.ne.s32.totalorder %s264, %s265
    %p274 = scmp.eq.s32.totalorder %s23, 0
    %p275 = por %p273, %p274
    %p276 = scmp.ne.s32.totalorder %s264, %s265
    %p277 = scmp.eq.s32.totalorder %s24, 1
    %p278 = por %p276, %p277
    %p280 = scmp.ne.s32.totalorder %s265, %s279
    %p281 = scmp.eq.s32.totalorder %s24, 0
    %p282 = por %p280, %p281
    %s283 = ssub.s32 %s18, %s25
    %p284 = scmp.eq.s32.totalorder %s283, 0
    %s286 = sadd.s32 %s285, 1
    %s287 = scalar_select %p284, %s285, %s286
    %p290 = pneg %p284
    %p291 = scmp.eq.s32.totalorder %s18, 1
    %p292 = por %p290, %p291
    %p293 = scmp.ne.s32.totalorder %s285, %s288
    %p294 = scmp.eq.s32.totalorder %s18, 0
    %p295 = por %p293, %p294
    %p296 = scmp.ne.s32.totalorder %s285, %s288
    %p297 = scmp.eq.s32.totalorder %s23, 1
    %p298 = por %p296, %p297
    %p299 = scmp.ne.s32.totalorder %s288, %s289
    %p300 = scmp.eq.s32.totalorder %s23, 0
    %p301 = por %p299, %p300
    %p302 = scmp.ne.s32.totalorder %s288, %s289
    %p303 = scmp.eq.s32.totalorder %s24, 1
    %p304 = por %p302, %p303
    %p306 = scmp.ne.s32.totalorder %s289, %s305
    %p307 = scmp.eq.s32.totalorder %s24, 0
    %p308 = por %p306, %p307
    %p309 = scmp.le.s32.totalorder 1, %s18
    %p310 = scmp.lt.s32.totalorder %s18, 3
    %p311 = pnand %p309, %p310
    %p312 = pneg %p311
    // Predicated region
    $region9: #{frame_predictor.1} parent=5 // pred_check
      _
    $region10: #{frame_predictor.1} parent=5 // pred_check_branch
      %314 = sbr.rel (%p311) target = $region12
    $region11: #{frame_predictor.1} parent=5 // pred_region
      %s315 = ssub.s32 %s18, 1
      // Predicated region
      $region13: #{frame_predictor.1} parent=11 // pred_check
        %p316 = pneg %p65
      $region14: #{frame_predictor.1} parent=11 // pred_check_branch
        %318 = sbr.rel (%p316) target = $region16
      $region15: #{frame_predictor.1} parent=11 // pred_region
        _
      $region16: #{frame_predictor.1} parent=11 // pred_fallthru
        _
      // Predicated region
      $region17: #{frame_predictor.1} parent=11 // pred_check
        %p319 = pneg %p86
      $region18: #{frame_predictor.1} parent=11 // pred_check_branch
        %321 = sbr.rel (%p319) target = $region20
      $region19: #{frame_predictor.1} parent=11 // pred_region
        _
      $region20: #{frame_predictor.1} parent=11 // pred_fallthru
        _
      // Predicated region
      $region21: #{frame_predictor.1} parent=11 // pred_check
        %p322 = pneg %p107
      $region22: #{frame_predictor.1} parent=11 // pred_check_branch
        %324 = sbr.rel (%p322) target = $region24
      $region23: #{frame_predictor.1} parent=11 // pred_region
        _
      $region24: #{frame_predictor.1} parent=11 // pred_fallthru
        _
      // Predicated region
      $region25: #{frame_predictor.1} parent=11 // pred_check
        %p325 = pneg %p128
      $region26: #{frame_predictor.1} parent=11 // pred_check_branch
        %327 = sbr.rel (%p325) target = $region28
      $region27: #{frame_predictor.1} parent=11 // pred_region
        _
      $region28: #{frame_predictor.1} parent=11 // pred_fallthru
        _
      // Predicated region
      $region29: #{frame_predictor.1} parent=11 // pred_check
        %p328 = pneg %p149
      $region30: #{frame_predictor.1} parent=11 // pred_check_branch
        %330 = sbr.rel (%p328) target = $region32
      $region31: #{frame_predictor.1} parent=11 // pred_region
        _
      $region32: #{frame_predictor.1} parent=11 // pred_fallthru
        _
      // Predicated region
      $region33: #{frame_predictor.1} parent=11 // pred_check
        %p331 = pneg %p170
      $region34: #{frame_predictor.1} parent=11 // pred_check_branch
        %333 = sbr.rel (%p331) target = $region36
      $region35: #{frame_predictor.1} parent=11 // pred_region
        _
      $region36: #{frame_predictor.1} parent=11 // pred_fallthru
        _
      // Predicated region
      $region37: #{frame_predictor.1} parent=11 // pred_check
        %p334 = pneg %p191
      $region38: #{frame_predictor.1} parent=11 // pred_check_branch
        %336 = sbr.rel (%p334) target = $region40
      $region39: #{frame_predictor.1} parent=11 // pred_region
        _
      $region40: #{frame_predictor.1} parent=11 // pred_fallthru
        _
      // Predicated region
      $region41: #{frame_predictor.1} parent=11 // pred_check
        %p337 = pneg %p212
      $region42: #{frame_predictor.1} parent=11 // pred_check_branch
        %339 = sbr.rel (%p337) target = $region44
      $region43: #{frame_predictor.1} parent=11 // pred_region
        _
      $region44: #{frame_predictor.1} parent=11 // pred_fallthru
        _
      // Predicated region
      $region45: #{frame_predictor.1} parent=11 // pred_check
        %p340 = pneg %p233
      $region46: #{frame_predictor.1} parent=11 // pred_check_branch
        %342 = sbr.rel (%p340) target = $region48
      $region47: #{frame_predictor.1} parent=11 // pred_region
        _
      $region48: #{frame_predictor.1} parent=11 // pred_fallthru
        _
      // Predicated region
      $region49: #{frame_predictor.1} parent=11 // pred_check
        %p343 = pneg %p254
      $region50: #{frame_predictor.1} parent=11 // pred_check_branch
        %345 = sbr.rel (%p343) target = $region52
      $region51: #{frame_predictor.1} parent=11 // pred_region
        _
      $region52: #{frame_predictor.1} parent=11 // pred_fallthru
        _
      // Predicated region
      $region53: #{frame_predictor.1} parent=11 // pred_check
        %p346 = pneg %p275
      $region54: #{frame_predictor.1} parent=11 // pred_check_branch
        %348 = sbr.rel (%p346) target = $region56
      $region55: #{frame_predictor.1} parent=11 // pred_region
        _
      $region56: #{frame_predictor.1} parent=11 // pred_fallthru
        _
    $region12: #{frame_predictor.1} parent=5 // pred_fallthru
      _
    %p349 = scmp.lt.s32.totalorder %s18, 2
    // Predicated region
    $region57: #{frame_predictor.1} parent=5 // pred_check
      %p350 = pneg %p349
    $region58: #{frame_predictor.1} parent=5 // pred_check_branch
      %352 = sbr.rel (%p350) target = $region60
    $region59: #{frame_predictor.1} parent=5 // pred_region
      // Predicated region
      $region61: #{frame_predictor.1} parent=59 // pred_check
        %p353 = pneg %p38
      $region62: #{frame_predictor.1} parent=59 // pred_check_branch
        %355 = sbr.rel (%p353) target = $region64
      $region63: #{frame_predictor.1} parent=59 // pred_region
        %p356 = scmp.lt.s32.totalorder %s18, 1
        %s357 = scalar_select %p356, %s18, 1
        %s358 = smul.addr %s357, 2
        %s359 = smul.addr %s358, 4
        %s360 = scalar_lea.vmem %s0, %s359
      $region64: #{frame_predictor.1} parent=59 // pred_fallthru
        _
    $region60: #{frame_predictor.1} parent=5 // pred_fallthru
      _
    %p361 = scmp.le.s32.totalorder 1, %s18
    %p362 = scmp.lt.s32.totalorder %s18, 3
    %p363 = pnand %p361, %p362
    %p364 = pneg %p363
    // Predicated region
    $region65: #{frame_predictor.1} parent=5 // pred_check
      _
    $region66: #{frame_predictor.1} parent=5 // pred_check_branch
      %366 = sbr.rel (%p363) target = $region68
    $region67: #{frame_predictor.1} parent=5 // pred_region
      %s367 = ssub.s32 %s18, 1
      %p368 = scmp.lt.s32.totalorder %s23, 1
      %s369 = scalar_select %p368, %s23, 1
      %s370 = smul.addr %s369, 2
      %s371 = smul.addr %s370, 4
      %s372 = scalar_lea.vmem %s0, %s371
      %p373 = pneg %p44
      %p374 = pneg %p41
      %p375 = pneg %p65
      %p376 = pneg %p62
      %p377 = pneg %p86
      %p378 = pneg %p83
      %p379 = pneg %p107
      %p380 = pneg %p104
      %p381 = pneg %p128
      %p382 = pneg %p125
      %p383 = pneg %p149
      %p384 = pneg %p146
      %p385 = pneg %p170
      %p386 = pneg %p167
      %p387 = pneg %p191
      %p388 = pneg %p188
      %p389 = pneg %p212
      %p390 = pneg %p209
      %p391 = pneg %p233
      %p392 = pneg %p230
      %p393 = pneg %p254
      %p394 = pneg %p251
      %p395 = pneg %p275
      %p396 = pneg %p272
      %p397 = pneg %p301
      %p398 = pneg %p298
      %p399 = scmp.lt.s32.totalorder %s23, 1
      %s400 = scalar_select %p399, %s23, 1
      %s401 = smul.addr %s400, 2
      %s402 = scalar_lea.vmem %s12, %s401
      %p403 = scmp.lt.s32.totalorder %s23, 1
      %s404 = scalar_select %p403, %s23, 1
      %s405 = smul.addr %s404, 2
      %s406 = smul.addr %s405, 4
      %s407 = scalar_lea.vmem %s0, %s406
      %p408 = scmp.lt.s32.totalorder %s23, 1
      %s409 = scalar_select %p408, %s23, 1
      %s410 = smul.addr %s409, 2
      %s411 = scalar_lea.vmem %s12, %s410
      %v413 = vld [vmem:[%s407] sm:$0xf]
      %v414 = vld [vmem:[%s407 + $0x4] sm:$0xf]
      %v415 = vld [vmem:[%s1] sm:$0xf]
      %v416 = vld [vmem:[%s1 + $0x4] sm:$0xf]
      %v417 = vld [vmem:[%s1 + $0x8] sm:$0xf]
      %v418 = vld [vmem:[%s1 + $0xc] sm:$0xf]
      %v419 = vld [vmem:[%s1 + $0x10] sm:$0xf]
      %v420 = vld [vmem:[%s1 + $0x14] sm:$0xf]
      %v421 = vld [vmem:[%s1 + $0x18] sm:$0xf]
      %v422 = vld [vmem:[%s1 + $0x1c] sm:$0xf]
      %v423 = vld [vmem:[%s2] sm:$0xff]
      %v424 = vld [vmem:[%s2 + $0x8] sm:$0xff]
      %v427 = vunpack.c.l.b16 %v413
      %v428 = vunpack.c.l.b16 %v414
      %v429 = vpack.c.b16 %v428, %v427
      %v438 = vunpack.c.l.b16 %v415
      %v439 = vunpack.c.l.b16 %v416
      %v440 = vunpack.c.l.b16 %v417
      %v441 = vunpack.c.l.b16 %v418
      %v442 = vunpack.c.l.b16 %v419
      %v443 = vunpack.c.l.b16 %v420
      %v444 = vunpack.c.l.b16 %v421
      %v445 = vunpack.c.l.b16 %v422
      %v446 = vpack.c.b16 %v439, %v438
      %v447 = vpack.c.b16 %v441, %v440
      %v448 = vpack.c.b16 %v443, %v442
      %v449 = vpack.c.b16 %v445, %v444
      %vm454 = vcmask 523264
      %v456 = vsel %vm454, %v429, 0
      %458 = vmatprep.subr.bf16.mxu0 0
      %459 = vmatpush1.bf16.msra.mxu0 %v446
      %460 = vmatprep.subr.bf16.mxu0 0
      %461 = vmatpush1.bf16.msra.mxu0 %v447
      %462 = vmatprep.subr.bf16.mxu0 0
      %463 = vmatpush1.bf16.msra.mxu0 %v448
      %464 = vmatprep.subr.bf16.mxu0 0
      %465 = vmatpush1.bf16.msra.mxu0 %v449
      %466 = vmatprep.subr.bf16.mxu0 0
      %467 = vmatpush1.bf16.msra.mxu0 0
      %468 = vmatprep.subr.bf16.mxu0 0
      %469 = vmatpush1.bf16.msra.mxu0 0
      %470 = vmatprep.subr.bf16.mxu0 0
      %471 = vmatpush1.bf16.msra.mxu0 0
      %472 = vmatprep.subr.bf16.mxu0 0
      %473 = vmatpush1.bf16.msra.mxu0 0
      %474 = vmatprep.subr.bf16.mxu0 0
      %475 = vmatpush1.bf16.msra.mxu0 0
      %476 = vmatprep.subr.bf16.mxu0 0
      %477 = vmatpush1.bf16.msra.mxu0 0
      %478 = vmatprep.subr.bf16.mxu0 0
      %479 = vmatpush1.bf16.msra.mxu0 0
      %480 = vmatprep.subr.bf16.mxu0 0
      %481 = vmatpush1.bf16.msra.mxu0 0
      %482 = vmatprep.subr.bf16.mxu0 0
      %483 = vmatpush1.bf16.msra.mxu0 0
      %484 = vmatprep.subr.bf16.mxu0 0
      %485 = vmatpush1.bf16.msra.mxu0 0
      %486 = vmatprep.subr.bf16.mxu0 0
      %487 = vmatpush1.bf16.msra.mxu0 0
      %488 = vmatprep.subr.bf16.mxu0 0
      %489 = vmatpush1.bf16.msra.mxu0 0
      %490 = vmatprep.mubr.bf16.mxu0 0
      %491 = vmatmul.mubr.bf16.gmra.mrb[0].mxu0 %v456
      %v492 = vpop.f32.mrb[0].mxu0
      %v493 = vadd.f32 %v423, %v492
      %v494 = vpop.f32.mrb[0].mxu0
      %v495 = vpop.f32.mrb[0].mxu0
      %v496 = vadd.f32 %v424, %v495
      %v497 = vpop.f32.mrb[0].mxu0
      %498 = vdwg.mxu0
      %v499 = vld [vmem:[%s3] sm:$0xff]
      %v500 = vld [vmem:[%s4] sm:$0x1]
      %vm501 = vcmask 261120
      %v502 = vsel %vm501, %v493, 0.0
      %503 = vadd.xlane.f32.xlu0 %v502
      %v504 = vpop.xlane.xlu0 %503
      %v505 = vsel %vm501, %v496, 0.0
      %506 = vadd.xlane.f32.xlu0 %v505
      %v507 = vpop.xlane.xlu0 %506
      %v508 = vrcp.pop 32.0
      %v509 = vmul.f32 %v504, %v508
      %v510 = vmul.f32 %v507, %v508
      %v511 = vsub.f32 %v493, %v509
      %v512 = vsub.f32 %v496, %v510
      %v513 = vmul.f32 %v511, %v511
      %v514 = vmul.f32 %v512, %v512
      %v515 = vsel %vm501, %v513, 0.0
      %516 = vadd.xlane.f32.xlu0 %v515
      %v517 = vpop.xlane.xlu0 %516
      %v518 = vsel %vm501, %v514, 0.0
      %519 = vadd.xlane.f32.xlu0 %v518
      %v520 = vpop.xlane.xlu0 %519
      %v521 = vmul.f32 %v517, %v508
      %v522 = vmul.f32 %v520, %v508
      %v523 = vadd.f32 %v521, 1e-05
      %v524 = vadd.f32 %v522, 1e-05
      %v525 = vrsqrt.pop %v523
      %v526 = vrsqrt.pop %v524
      %v527 = vmul.f32 %v511, %v525
      %v528 = vmul.f32 %v512, %v526
      %v529 = vlaneseq
      %v530 = vshrl.u32 %v529, 7
      %v531 = vsub.s32 0, %v530
      %v532 = vrot.slane %v499, %v531
      %v533 = vmul.f32 %v527, %v532
      %v534 = vmul.f32 %v528, %v532
      %v535 = vlaneseq
      %v536 = vshrl.u32 %v535, 7
      %v537 = vsub.s32 1, %v536
      %v538 = vrot.slane %v499, %v537
      %v539 = vadd.f32 %v533, %v538
      %v540 = vadd.f32 %v534, %v538
      %v541 = vpack.c.bf16 %v540, %v539
      %v542 = vld [vmem:[%s5] sm:$0xf]
      %v543 = vld [vmem:[%s5 + $0x4] sm:$0xf]
      %v544 = vld [vmem:[%s5 + $0x8] sm:$0xf]
      %v545 = vld [vmem:[%s5 + $0xc] sm:$0xf]
      %v550 = vunpack.c.l.b16 %v542
      %v551 = vunpack.c.l.b16 %v543
      %v552 = vunpack.c.l.b16 %v544
      %v553 = vunpack.c.l.b16 %v545
      %v554 = vpack.c.b16 %v551, %v550
      %v555 = vpack.c.b16 %v553, %v552
      %v559 = vsel %vm501, %v541, 0
      %561 = vmatprep.subr.bf16.mxu0 0
      %562 = vmatpush1.bf16.msra.mxu0 %v554
      %563 = vmatprep.subr.bf16.mxu0 0
      %564 = vmatpush1.bf16.msra.mxu0 %v555
      %565 = vmatprep.subr.bf16.mxu0 0
      %566 = vmatpush1.bf16.msra.mxu0 0
      %567 = vmatprep.subr.bf16.mxu0 0
      %568 = vmatpush1.bf16.msra.mxu0 0
      %569 = vmatprep.subr.bf16.mxu0 0
      %570 = vmatpush1.bf16.msra.mxu0 0
      %571 = vmatprep.subr.bf16.mxu0 0
      %572 = vmatpush1.bf16.msra.mxu0 0
      %573 = vmatprep.subr.bf16.mxu0 0
      %574 = vmatpush1.bf16.msra.mxu0 0
      %575 = vmatprep.subr.bf16.mxu0 0
      %576 = vmatpush1.bf16.msra.mxu0 0
      %577 = vmatprep.subr.bf16.mxu0 0
      %578 = vmatpush1.bf16.msra.mxu0 0
      %579 = vmatprep.subr.bf16.mxu0 0
      %580 = vmatpush1.bf16.msra.mxu0 0
      %581 = vmatprep.subr.bf16.mxu0 0
      %582 = vmatpush1.bf16.msra.mxu0 0
      %583 = vmatprep.subr.bf16.mxu0 0
      %584 = vmatpush1.bf16.msra.mxu0 0
      %585 = vmatprep.subr.bf16.mxu0 0
      %586 = vmatpush1.bf16.msra.mxu0 0
      %587 = vmatprep.subr.bf16.mxu0 0
      %588 = vmatpush1.bf16.msra.mxu0 0
      %589 = vmatprep.subr.bf16.mxu0 0
      %590 = vmatpush1.bf16.msra.mxu0 0
      %591 = vmatprep.subr.bf16.mxu0 0
      %592 = vmatpush1.bf16.msra.mxu0 0
      %593 = vmatprep.mubr.bf16.mxu0 0
      %594 = vmatmul.mubr.bf16.gmra.mrb[0].mxu0 %v559
      %v595 = vpop.f32.mrb[0].mxu0
      %v596 = vadd.f32 0.0, %v595
      %v597 = vpop.f32.mrb[0].mxu0
      %v598 = vpop.f32.mrb[0].mxu0
      %v599 = vadd.f32 0.0, %v598
      %v600 = vpop.f32.mrb[0].mxu0
      %601 = vdwg.mxu0
      %v602 = vpack.c.bf16 %v599, %v596
      %604 = vrot.lane.b32.xlu0 %v602, 96
      %v605 = vpop.permute.xlu0 %604
      %vm606 = vcmask 64512
      %v608 = vsel %vm606, %v602, 0
      %v611 = vsel %vm606, %v605, 0
      %613 = vmatprep.subr.bf16.mxu0 0
      %614 = vmatpush1.bf16.xpose.msra.mxu0 %v611
      %615 = vmatprep.subr.bf16.mxu0 0
      %616 = vmatpush1.bf16.xpose.msra.mxu0 0
      %617 = vmatprep.subr.bf16.mxu0 0
      %618 = vmatpush1.bf16.xpose.msra.mxu0 0
      %619 = vmatprep.subr.bf16.mxu0 0
      %620 = vmatpush1.bf16.xpose.msra.mxu0 0
      %621 = vmatprep.subr.bf16.mxu0 0
      %622 = vmatpush1.bf16.xpose.msra.mxu0 0
      %623 = vmatprep.subr.bf16.mxu0 0
      %624 = vmatpush1.bf16.xpose.msra.mxu0 0
      %625 = vmatprep.subr.bf16.mxu0 0
      %626 = vmatpush1.bf16.xpose.msra.mxu0 0
      %627 = vmatprep.subr.bf16.mxu0 0
      %628 = vmatpush1.bf16.xpose.msra.mxu0 0
      %629 = vmatprep.subr.bf16.mxu0 0
      %630 = vmatpush1.bf16.xpose.msra.mxu0 0
      %631 = vmatprep.subr.bf16.mxu0 0
      %632 = vmatpush1.bf16.xpose.msra.mxu0 0
      %633 = vmatprep.subr.bf16.mxu0 0
      %634 = vmatpush1.bf16.xpose.msra.mxu0 0
      %635 = vmatprep.subr.bf16.mxu0 0
      %636 = vmatpush1.bf16.xpose.msra.mxu0 0
      %637 = vmatprep.subr.bf16.mxu0 0
      %638 = vmatpush1.bf16.xpose.msra.mxu0 0
      %639 = vmatprep.subr.bf16.mxu0 0
      %640 = vmatpush1.bf16.xpose.msra.mxu0 0
      %641 = vmatprep.subr.bf16.mxu0 0
      %642 = vmatpush1.bf16.xpose.msra.mxu0 0
      %643 = vmatprep.subr.bf16.mxu0 0
      %644 = vmatpush1.bf16.xpose.msra.mxu0 0
      %645 = vmatprep.mubr.bf16.mxu0 0
      %646 = vmatmul.mubr.bf16.gmra.mrb[0].mxu0 %v608
      %v647 = vpop.f32.mrb[0].mxu0
      %v648 = vadd.f32 0.0, %v647
      %v649 = vpop.f32.mrb[0].mxu0
      %v650 = vpop.f32.mrb[0].mxu0
      %v651 = vadd.f32 0.0, %v650
      %v652 = vpop.f32.mrb[0].mxu0
      %653 = vdwg.mxu0
      %vm654 = vcmask 130048
      %v655 = vsel %vm654, %v648, -inf
      %656 = vmax.xlane.f32.xlu0 %v655
      %v657 = vpop.xlane.xlu0 %656
      %v658 = vsel %vm654, %v651, -inf
      %659 = vmax.xlane.f32.xlu0 %v658
      %v660 = vpop.xlane.xlu0 %659
      %v661 = vsub.f32 %v648, %v657
      %v662 = vsub.f32 %v651, %v660
      %v663 = vmul.f32 %v661, 1.442695
      %v664 = vpow.pop %v663
      %v665 = vmul.f32 %v662, 1.442695
      %v666 = vpow.pop %v665
      %v667 = vsel %vm654, %v664, 0.0
      %668 = vadd.xlane.f32.xlu0 %v667
      %v669 = vpop.xlane.xlu0 %668
      %v670 = vsel %vm654, %v666, 0.0
      %671 = vadd.xlane.f32.xlu0 %v670
      %v672 = vpop.xlane.xlu0 %671
      %v673 = vrcp.pop %v669
      %v674 = vrcp.pop %v672
      %v675 = vmul.f32 %v664, %v673
      %v676 = vmul.f32 %v666, %v674
      %v677 = vpack.c.bf16 %v676, %v675
      %678 = vrot.lane.b32.xlu0 %v602, 64
      %v679 = vpop.permute.xlu0 %678
      %v682 = vsel %vm654, %v677, 0
      %684 = vmatprep.subr.bf16.mxu0 0
      %685 = vmatpush1.bf16.msra.mxu0 %v679
      %686 = vmatprep.subr.bf16.mxu0 0
      %687 = vmatpush1.bf16.msra.mxu0 0
      %688 = vmatprep.subr.bf16.mxu0 0
      %689 = vmatpush1.bf16.msra.mxu0 0
      %690 = vmatprep.subr.bf16.mxu0 0
      %691 = vmatpush1.bf16.msra.mxu0 0
      %692 = vmatprep.subr.bf16.mxu0 0
      %693 = vmatpush1.bf16.msra.mxu0 0
      %694 = vmatprep.subr.bf16.mxu0 0
      %695 = vmatpush1.bf16.msra.mxu0 0
      %696 = vmatprep.subr.bf16.mxu0 0
      %697 = vmatpush1.bf16.msra.mxu0 0
      %698 = vmatprep.subr.bf16.mxu0 0
      %699 = vmatpush1.bf16.msra.mxu0 0
      %700 = vmatprep.subr.bf16.mxu0 0
      %701 = vmatpush1.bf16.msra.mxu0 0
      %702 = vmatprep.subr.bf16.mxu0 0
      %703 = vmatpush1.bf16.msra.mxu0 0
      %704 = vmatprep.subr.bf16.mxu0 0
      %705 = vmatpush1.bf16.msra.mxu0 0
      %706 = vmatprep.subr.bf16.mxu0 0
      %707 = vmatpush1.bf16.msra.mxu0 0
      %708 = vmatprep.subr.bf16.mxu0 0
      %709 = vmatpush1.bf16.msra.mxu0 0
      %710 = vmatprep.subr.bf16.mxu0 0
      %711 = vmatpush1.bf16.msra.mxu0 0
      %712 = vmatprep.subr.bf16.mxu0 0
      %713 = vmatpush1.bf16.msra.mxu0 0
      %714 = vmatprep.subr.bf16.mxu0 0
      %715 = vmatpush1.bf16.msra.mxu0 0
      %716 = vmatprep.mubr.bf16.mxu0 0
      %717 = vmatmul.mubr.bf16.gmra.mrb[0].mxu0 %v682
      %v718 = vpop.f32.mrb[0].mxu0
      %v719 = vadd.f32 0.0, %v718
      %v720 = vpop.f32.mrb[0].mxu0
      %v721 = vpop.f32.mrb[0].mxu0
      %v722 = vadd.f32 0.0, %v721
      %v723 = vpop.f32.mrb[0].mxu0
      %724 = vdwg.mxu0
      %725 = vst.msk [vmem:[#allocation2] sm:$0xff] %vm606, %v719
      %726 = vst.msk [vmem:[#allocation2 + $0x8] sm:$0xff] %vm606, %v722
      %727 = vrot.lane.b32.xlu0 %v602, 120
      %v728 = vpop.permute.xlu0 %727
      %729 = vrot.lane.b32.xlu0 %v602, 88
      %v730 = vpop.permute.xlu0 %729
      %v732 = vsel %vm606, %v728, 0
      %v735 = vsel %vm606, %v730, 0
      %737 = vmatprep.subr.bf16.mxu0 0
      %738 = vmatpush1.bf16.xpose.msra.mxu0 %v735
      %739 = vmatprep.subr.bf16.mxu0 0
      %740 = vmatpush1.bf16.xpose.msra.mxu0 0
      %741 = vmatprep.subr.bf16.mxu0 0
      %742 = vmatpush1.bf16.xpose.msra.mxu0 0
      %743 = vmatprep.subr.bf16.mxu0 0
      %744 = vmatpush1.bf16.xpose.msra.mxu0 0
      %745 = vmatprep.subr.bf16.mxu0 0
      %746 = vmatpush1.bf16.xpose.msra.mxu0 0
      %747 = vmatprep.subr.bf16.mxu0 0
      %748 = vmatpush1.bf16.xpose.msra.mxu0 0
      %749 = vmatprep.subr.bf16.mxu0 0
      %750 = vmatpush1.bf16.xpose.msra.mxu0 0
      %751 = vmatprep.subr.bf16.mxu0 0
      %752 = vmatpush1.bf16.xpose.msra.mxu0 0
      %753 = vmatprep.subr.bf16.mxu0 0
      %754 = vmatpush1.bf16.xpose.msra.mxu0 0
      %755 = vmatprep.subr.bf16.mxu0 0
      %756 = vmatpush1.bf16.xpose.msra.mxu0 0
      %757 = vmatprep.subr.bf16.mxu0 0
      %758 = vmatpush1.bf16.xpose.msra.mxu0 0
      %759 = vmatprep.subr.bf16.mxu0 0
      %760 = vmatpush1.bf16.xpose.msra.mxu0 0
      %761 = vmatprep.subr.bf16.mxu0 0
      %762 = vmatpush1.bf16.xpose.msra.mxu0 0
      %763 = vmatprep.subr.bf16.mxu0 0
      %764 = vmatpush1.bf16.xpose.msra.mxu0 0
      %765 = vmatprep.subr.bf16.mxu0 0
      %766 = vmatpush1.bf16.xpose.msra.mxu0 0
      %767 = vmatprep.subr.bf16.mxu0 0
      %768 = vmatpush1.bf16.xpose.msra.mxu0 0
      %769 = vmatprep.mubr.bf16.mxu0 0
      %770 = vmatmul.mubr.bf16.gmra.mrb[0].mxu0 %v732
      %v771 = vpop.f32.mrb[0].mxu0
      %v772 = vadd.f32 0.0, %v771
      %v773 = vpop.f32.mrb[0].mxu0
      %v774 = vpop.f32.mrb[0].mxu0
      %v775 = vadd.f32 0.0, %v774
      %v776 = vpop.f32.mrb[0].mxu0
      %777 = vdwg.mxu0
      %v778 = vsel %vm654, %v772, -inf
      %779 = vmax.xlane.f32.xlu0 %v778
      %v780 = vpop.xlane.xlu0 %779
      %v781 = vsel %vm654, %v775, -inf
      %782 = vmax.xlane.f32.xlu0 %v781
      %v783 = vpop.xlane.xlu0 %782
      %v784 = vsub.f32 %v772, %v780
      %v785 = vsub.f32 %v775, %v783
      %v786 = vmul.f32 %v784, 1.442695
      %v787 = vpow.pop %v786
      %v788 = vmul.f32 %v785, 1.442695
      %v789 = vpow.pop %v788
      %v790 = vsel %vm654, %v787, 0.0
      %791 = vadd.xlane.f32.xlu0 %v790
      %v792 = vpop.xlane.xlu0 %791
      %v793 = vsel %vm654, %v789, 0.0
      %794 = vadd.xlane.f32.xlu0 %v793
      %v795 = vpop.xlane.xlu0 %794
      %v796 = vrcp.pop %v792
      %v797 = vrcp.pop %v795
      %v798 = vmul.f32 %v787, %v796
      %v799 = vmul.f32 %v789, %v797
      %v800 = vpack.c.bf16 %v799, %v798
      %801 = vrot.lane.b32.xlu0 %v602, 56
      %v802 = vpop.permute.xlu0 %801
      %v805 = vsel %vm654, %v800, 0
      %807 = vmatprep.subr.bf16.mxu0 0
      %808 = vmatpush1.bf16.msra.mxu0 %v802
      %809 = vmatprep.subr.bf16.mxu0 0
      %810 = vmatpush1.bf16.msra.mxu0 0
      %811 = vmatprep.subr.bf16.mxu0 0
      %812 = vmatpush1.bf16.msra.mxu0 0
      %813 = vmatprep.subr.bf16.mxu0 0
      %814 = vmatpush1.bf16.msra.mxu0 0
      %815 = vmatprep.subr.bf16.mxu0 0
      %816 = vmatpush1.bf16.msra.mxu0 0
      %817 = vmatprep.subr.bf16.mxu0 0
      %818 = vmatpush1.bf16.msra.mxu0 0
      %819 = vmatprep.subr.bf16.mxu0 0
      %820 = vmatpush1.bf16.msra.mxu0 0
      %821 = vmatprep.subr.bf16.mxu0 0
      %822 = vmatpush1.bf16.msra.mxu0 0
      %823 = vmatprep.subr.bf16.mxu0 0
      %824 = vmatpush1.bf16.msra.mxu0 0
      %825 = vmatprep.subr.bf16.mxu0 0
      %826 = vmatpush1.bf16.msra.mxu0 0
      %827 = vmatprep.subr.bf16.mxu0 0
      %828 = vmatpush1.bf16.msra.mxu0 0
      %829 = vmatprep.subr.bf16.mxu0 0
      %830 = vmatpush1.bf16.msra.mxu0 0
      %831 = vmatprep.subr.bf16.mxu0 0
      %832 = vmatpush1.bf16.msra.mxu0 0
      %833 = vmatprep.subr.bf16.mxu0 0
      %834 = vmatpush1.bf16.msra.mxu0 0
      %835 = vmatprep.subr.bf16.mxu0 0
      %836 = vmatpush1.bf16.msra.mxu0 0
      %837 = vmatprep.subr.bf16.mxu0 0
      %838 = vmatpush1.bf16.msra.mxu0 0
      %839 = vmatprep.mubr.bf16.mxu0 0
      %840 = vmatmul.mubr.bf16.gmra.mrb[0].mxu0 %v805
      %v841 = vpop.f32.mrb[0].mxu0
      %v842 = vadd.f32 0.0, %v841
      %v843 = vpop.f32.mrb[0].mxu0
      %v844 = vpop.f32.mrb[0].mxu0
      %v845 = vadd.f32 0.0, %v844
      %v846 = vpop.f32.mrb[0].mxu0
      %847 = vdwg.mxu0
      %850 = vrot.lane.b32.xlu0 %v842, 8
      %v851 = vpop.permute.xlu0 %850
      %852 = vrot.lane.b32.xlu0 %v845, 8
      %v853 = vpop.permute.xlu0 %852
      %vm856 = vcmask 130112
      %857 = vst.msk [vmem:[#allocation2] sm:$0xff] %vm856, %v851
      %858 = vst.msk [vmem:[#allocation2 + $0x8] sm:$0xff] %vm856, %v853
      %859 = vrot.lane.b32.xlu0 %v602, 112
      %v860 = vpop.permute.xlu0 %859
      %861 = vrot.lane.b32.xlu0 %v602, 80
      %v862 = vpop.permute.xlu0 %861
      %v864 = vsel %vm606, %v860, 0
      %v867 = vsel %vm606, %v862, 0
      %869 = vmatprep.subr.bf16.mxu0 0
      %870 = vmatpush1.bf16.xpose.msra.mxu0 %v867
      %871 = vmatprep.subr.bf16.mxu0 0
      %872 = vmatpush1.bf16.xpose.msra.mxu0 0
      %873 = vmatprep.subr.bf16.mxu0 0
      %874 = vmatpush1.bf16.xpose.msra.mxu0 0
      %875 = vmatprep.subr.bf16.mxu0 0
      %876 = vmatpush1.bf16.xpose.msra.mxu0 0
      %877 = vmatprep.subr.bf16.mxu0 0
      %878 = vmatpush1.bf16.xpose.msra.mxu0 0
      %879 = vmatprep.subr.bf16.mxu0 0
      %880 = vmatpush1.bf16.xpose.msra.mxu0 0
      %881 = vmatprep.subr.bf16.mxu0 0
      %882 = vmatpush1.bf16.xpose.msra.mxu0 0
      %883 = vmatprep.subr.bf16.mxu0 0
      %884 = vmatpush1.bf16.xpose.msra.mxu0 0
      %885 = vmatprep.subr.bf16.mxu0 0
      %886 = vmatpush1.bf16.xpose.msra.mxu0 0
      %887 = vmatprep.subr.bf16.mxu0 0
      %888 = vmatpush1.bf16.xpose.msra.mxu0 0
      %889 = vmatprep.subr.bf16.mxu0 0
      %890 = vmatpush1.bf16.xpose.msra.mxu0 0
      %891 = vmatprep.subr.bf16.mxu0 0
      %892 = vmatpush1.bf16.xpose.msra.mxu0 0
      %893 = vmatprep.subr.bf16.mxu0 0
      %894 = vmatpush1.bf16.xpose.msra.mxu0 0
      %895 = vmatprep.subr.bf16.mxu0 0
      %896 = vmatpush1.bf16.xpose.msra.mxu0 0
      %897 = vmatprep.subr.bf16.mxu0 0
      %898 = vmatpush1.bf16.xpose.msra.mxu0 0
      %899 = vmatprep.subr.bf16.mxu0 0
      %900 = vmatpush1.bf16.xpose.msra.mxu0 0
      %901 = vmatprep.mubr.bf16.mxu0 0
      %902 = vmatmul.mubr.bf16.gmra.mrb[0].mxu0 %v864
      %v903 = vpop.f32.mrb[0].mxu0
      %v904 = vadd.f32 0.0, %v903
      %v905 = vpop.f32.mrb[0].mxu0
      %v906 = vpop.f32.mrb[0].mxu0
      %v907 = vadd.f32 0.0, %v906
      %v908 = vpop.f32.mrb[0].mxu0
      %909 = vdwg.mxu0
      %v910 = vsel %vm654, %v904, -inf
      %911 = vmax.xlane.f32.xlu0 %v910
      %v912 = vpop.xlane.xlu0 %911
      %v913 = vsel %vm654, %v907, -inf
      %914 = vmax.xlane.f32.xlu0 %v913
      %v915 = vpop.xlane.xlu0 %914
      %v916 = vsub.f32 %v904, %v912
      %v917 = vsub.f32 %v907, %v915
      %v918 = vmul.f32 %v916, 1.442695
      %v919 = vpow.pop %v918
      %v920 = vmul.f32 %v917, 1.442695
      %v921 = vpow.pop %v920
      %v922 = vsel %vm654, %v919, 0.0
      %923 = vadd.xlane.f32.xlu0 %v922
      %v924 = vpop.xlane.xlu0 %923
      %v925 = vsel %vm654, %v921, 0.0
      %926 = vadd.xlane.f32.xlu0 %v925
      %v927 = vpop.xlane.xlu0 %926
      %v928 = vrcp.pop %v924
      %v929 = vrcp.pop %v927
      %v930 = vmul.f32 %v919, %v928
      %v931 = vmul.f32 %v921, %v929
      %v932 = vpack.c.bf16 %v931, %v930
      %933 = vrot.lane.b32.xlu0 %v602, 48
      %v934 = vpop.permute.xlu0 %933
      %v937 = vsel %vm654, %v932, 0
      %939 = vmatprep.subr.bf16.mxu0 0
      %940 = vmatpush1.bf16.msra.mxu0 %v934
      %941 = vmatprep.subr.bf16.mxu0 0
      %942 = vmatpush1.bf16.msra.mxu0 0
      %943 = vmatprep.subr.bf16.mxu0 0
      %944 = vmatpush1.bf16.msra.mxu0 0
      %945 = vmatprep.subr.bf16.mxu0 0
      %946 = vmatpush1.bf16.msra.mxu0 0
      %947 = vmatprep.subr.bf16.mxu0 0
      %948 = vmatpush1.bf16.msra.mxu0 0
      %949 = vmatprep.subr.bf16.mxu0 0
      %950 = vmatpush1.bf16.msra.mxu0 0
      %951 = vmatprep.subr.bf16.mxu0 0
      %952 = vmatpush1.bf16.msra.mxu0 0
      %953 = vmatprep.subr.bf16.mxu0 0
      %954 = vmatpush1.bf16.msra.mxu0 0
      %955 = vmatprep.subr.bf16.mxu0 0
      %956 = vmatpush1.bf16.msra.mxu0 0
      %957 = vmatprep.subr.bf16.mxu0 0
      %958 = vmatpush1.bf16.msra.mxu0 0
      %959 = vmatprep.subr.bf16.mxu0 0
      %960 = vmatpush1.bf16.msra.mxu0 0
      %961 = vmatprep.subr.bf16.mxu0 0
      %962 = vmatpush1.bf16.msra.mxu0 0
      %963 = vmatprep.subr.bf16.mxu0 0
      %964 = vmatpush1.bf16.msra.mxu0 0
      %965 = vmatprep.subr.bf16.mxu0 0
      %966 = vmatpush1.bf16.msra.mxu0 0
      %967 = vmatprep.subr.bf16.mxu0 0
      %968 = vmatpush1.bf16.msra.mxu0 0
      %969 = vmatprep.subr.bf16.mxu0 0
      %970 = vmatpush1.bf16.msra.mxu0 0
      %971 = vmatprep.mubr.bf16.mxu0 0
      %972 = vmatmul.mubr.bf16.gmra.mrb[0].mxu0 %v937
      %v973 = vpop.f32.mrb[0].mxu0
      %v974 = vadd.f32 0.0, %v973
      %v975 = vpop.f32.mrb[0].mxu0
      %v976 = vpop.f32.mrb[0].mxu0
      %v977 = vadd.f32 0.0, %v976
      %v978 = vpop.f32.mrb[0].mxu0
      %979 = vdwg.mxu0
      %982 = vrot.lane.b32.xlu0 %v974, 16
      %v983 = vpop.permute.xlu0 %982
      %984 = vrot.lane.b32.xlu0 %v977, 16
      %v985 = vpop.permute.xlu0 %984
      %vm988 = vcmask 195712
      %989 = vst.msk [vmem:[#allocation2] sm:$0xff] %vm988, %v983
      %990 = vst.msk [vmem:[#allocation2 + $0x8] sm:$0xff] %vm988, %v985
      %991 = vrot.lane.b32.xlu0 %v602, 104
      %v992 = vpop.permute.xlu0 %991
      %993 = vrot.lane.b32.xlu0 %v602, 72
      %v994 = vpop.permute.xlu0 %993
      %v996 = vsel %vm606, %v992, 0
      %v999 = vsel %vm606, %v994, 0
      %1001 = vmatprep.subr.bf16.mxu0 0
      %1002 = vmatpush1.bf16.xpose.msra.mxu0 %v999
      %1003 = vmatprep.subr.bf16.mxu0 0
      %1004 = vmatpush1.bf16.xpose.msra.mxu0 0
      %1005 = vmatprep.subr.bf16.mxu0 0
      %1006 = vmatpush1.bf16.xpose.msra.mxu0 0
      %1007 = vmatprep.subr.bf16.mxu0 0
      %1008 = vmatpush1.bf16.xpose.msra.mxu0 0
      %1009 = vmatprep.subr.bf16.mxu0 0
      %1010 = vmatpush1.bf16.xpose.msra.mxu0 0
      %1011 = vmatprep.subr.bf16.mxu0 0
      %1012 = vmatpush1.bf16.xpose.msra.mxu0 0
      %1013 = vmatprep.subr.bf16.mxu0 0
      %1014 = vmatpush1.bf16.xpose.msra.mxu0 0
      %1015 = vmatprep.subr.bf16.mxu0 0
      %1016 = vmatpush1.bf16.xpose.msra.mxu0 0
      %1017 = vmatprep.subr.bf16.mxu0 0
      %1018 = vmatpush1.bf16.xpose.msra.mxu0 0
      %1019 = vmatprep.subr.bf16.mxu0 0
      %1020 = vmatpush1.bf16.xpose.msra.mxu0 0
      %1021 = vmatprep.subr.bf16.mxu0 0
      %1022 = vmatpush1.bf16.xpose.msra.mxu0 0
      %1023 = vmatprep.subr.bf16.mxu0 0
      %1024 = vmatpush1.bf16.xpose.msra.mxu0 0
      %1025 = vmatprep.subr.bf16.mxu0 0
      %1026 = vmatpush1.bf16.xpose.msra.mxu0 0
      %1027 = vmatprep.subr.bf16.mxu0 0
      %1028 = vmatpush1.bf16.xpose.msra.mxu0 0
      %1029 = vmatprep.subr.bf16.mxu0 0
      %1030 = vmatpush1.bf16.xpose.msra.mxu0 0
      %1031 = vmatprep.subr.bf16.mxu0 0
      %1032 = vmatpush1.bf16.xpose.msra.mxu0 0
      %1033 = vmatprep.mubr.bf16.mxu0 0
      %1034 = vmatmul.mubr.bf16.gmra.mrb[0].mxu0 %v996
      %v1035 = vpop.f32.mrb[0].mxu0
      %v1036 = vadd.f32 0.0, %v1035
      %v1037 = vpop.f32.mrb[0].mxu0
      %v1038 = vpop.f32.mrb[0].mxu0
      %v1039 = vadd.f32 0.0, %v1038
      %v1040 = vpop.f32.mrb[0].mxu0
      %1041 = vdwg.mxu0
      %v1042 = vsel %vm654, %v1036, -inf
      %1043 = vmax.xlane.f32.xlu0 %v1042
      %v1044 = vpop.xlane.xlu0 %1043
      %v1045 = vsel %vm654, %v1039, -inf
      %1046 = vmax.xlane.f32.xlu0 %v1045
      %v1047 = vpop.xlane.xlu0 %1046
      %v1048 = vsub.f32 %v1036, %v1044
      %v1049 = vsub.f32 %v1039, %v1047
      %v1050 = vmul.f32 %v1048, 1.442695
      %v1051 = vpow.pop %v1050
      %v1052 = vmul.f32 %v1049, 1.442695
      %v1053 = vpow.pop %v1052
      %v1054 = vsel %vm654, %v1051, 0.0
      %1055 = vadd.xlane.f32.xlu0 %v1054
      %v1056 = vpop.xlane.xlu0 %1055
      %v1057 = vsel %vm654, %v1053, 0.0
      %1058 = vadd.xlane.f32.xlu0 %v1057
      %v1059 = vpop.xlane.xlu0 %1058
      %v1060 = vrcp.pop %v1056
      %v1061 = vrcp.pop %v1059
      %v1062 = vmul.f32 %v1051, %v1060
      %v1063 = vmul.f32 %v1053, %v1061
      %v1064 = vpack.c.bf16 %v1063, %v1062
      %1065 = vrot.lane.b32.xlu0 %v602, 40
      %v1066 = vpop.permute.xlu0 %1065
      %v1069 = vsel %vm654, %v1064, 0
      %1071 = vmatprep.subr.bf16.mxu0 0
      %1072 = vmatpush1.bf16.msra.mxu0 %v1066
      %1073 = vmatprep.subr.bf16.mxu0 0
      %1074 = vmatpush1.bf16.msra.mxu0 0
      %1075 = vmatprep.subr.bf16.mxu0 0
      %1076 = vmatpush1.bf16.msra.mxu0 0
      %1077 = vmatprep.subr.bf16.mxu0 0
      %1078 = vmatpush1.bf16.msra.mxu0 0
      %1079 = vmatprep.subr.bf16.mxu0 0
      %1080 = vmatpush1.bf16.msra.mxu0 0
      %1081 = vmatprep.subr.bf16.mxu0 0
      %1082 = vmatpush1.bf16.msra.mxu0 0
      %1083 = vmatprep.subr.bf16.mxu0 0
      %1084 = vmatpush1.bf16.msra.mxu0 0
      %1085 = vmatprep.subr.bf16.mxu0 0
      %1086 = vmatpush1.bf16.msra.mxu0 0
      %1087 = vmatprep.subr.bf16.mxu0 0
      %1088 = vmatpush1.bf16.msra.mxu0 0
      %1089 = vmatprep.subr.bf16.mxu0 0
      %1090 = vmatpush1.bf16.msra.mxu0 0
      %1091 = vmatprep.subr.bf16.mxu0 0
      %1092 = vmatpush1.bf16.msra.mxu0 0
      %1093 = vmatprep.subr.bf16.mxu0 0
      %1094 = vmatpush1.bf16.msra.mxu0 0
      %1095 = vmatprep.subr.bf16.mxu0 0
      %1096 = vmatpush1.bf16.msra.mxu0 0
      %1097 = vmatprep.subr.bf16.mxu0 0
      %1098 = vmatpush1.bf16.msra.mxu0 0
      %1099 = vmatprep.subr.bf16.mxu0 0
      %1100 = vmatpush1.bf16.msra.mxu0 0
      %1101 = vmatprep.subr.bf16.mxu0 0
      %1102 = vmatpush1.bf16.msra.mxu0 0
      %1103 = vmatprep.mubr.bf16.mxu0 0
      %1104 = vmatmul.mubr.bf16.gmra.mrb[0].mxu0 %v1069
      %v1105 = vpop.f32.mrb[0].mxu0
      %v1106 = vadd.f32 0.0, %v1105
      %v1107 = vpop.f32.mrb[0].mxu0
      %v1108 = vpop.f32.mrb[0].mxu0
      %v1109 = vadd.f32 0.0, %v1108
      %v1110 = vpop.f32.mrb[0].mxu0
      %1111 = vdwg.mxu0
      %1114 = vrot.lane.b32.xlu0 %v1106, 24
      %v1115 = vpop.permute.xlu0 %1114
      %1116 = vrot.lane.b32.xlu0 %v1109, 24
      %v1117 = vpop.permute.xlu0 %1116
      %vm1120 = vcmask 261312
      %1121 = vst.msk [vmem:[#allocation2] sm:$0xff] %vm1120, %v1115
      %1122 = vst.msk [vmem:[#allocation2 + $0x8] sm:$0xff] %vm1120, %v1117
      %v1123 = vld [vmem:[#allocation2] sm:$0xff]
      %v1124 = vld [vmem:[#allocation2 + $0x8] sm:$0xff]
      %v1125 = vpack.c.bf16 %v1124, %v1123
      %v1126 = vld [vmem:[%s6] sm:$0xf]
      %v1127 = vld [vmem:[%s6 + $0x4] sm:$0xf]
      %v1128 = vld [vmem:[%s6 + $0x8] sm:$0xf]
      %v1129 = vld [vmem:[%s6 + $0xc] sm:$0xf]
      %v1134 = vunpack.c.l.b16 %v1126
      %v1135 = vunpack.c.l.b16 %v1127
      %v1136 = vunpack.c.l.b16 %v1128
      %v1137 = vunpack.c.l.b16 %v1129
      %v1138 = vpack.c.b16 %v1135, %v1134
      %v1139 = vpack.c.b16 %v1137, %v1136
      %v1143 = vsel %vm501, %v1125, 0
      %1145 = vmatprep.subr.bf16.mxu0 0
      %1146 = vmatpush1.bf16.msra.mxu0 %v1138
      %1147 = vmatprep.subr.bf16.mxu0 0
      %1148 = vmatpush1.bf16.msra.mxu0 %v1139
      %1149 = vmatprep.subr.bf16.mxu0 0
      %1150 = vmatpush1.bf16.msra.mxu0 0
      %1151 = vmatprep.subr.bf16.mxu0 0
      %1152 = vmatpush1.bf16.msra.mxu0 0
      %1153 = vmatprep.subr.bf16.mxu0 0
      %1154 = vmatpush1.bf16.msra.mxu0 0
      %1155 = vmatprep.subr.bf16.mxu0 0
      %1156 = vmatpush1.bf16.msra.mxu0 0
      %1157 = vmatprep.subr.bf16.mxu0 0
      %1158 = vmatpush1.bf16.msra.mxu0 0
      %1159 = vmatprep.subr.bf16.mxu0 0
      %1160 = vmatpush1.bf16.msra.mxu0 0
      %1161 = vmatprep.subr.bf16.mxu0 0
      %1162 = vmatpush1.bf16.msra.mxu0 0
      %1163 = vmatprep.subr.bf16.mxu0 0
      %1164 = vmatpush1.bf16.msra.mxu0 0
      %1165 = vmatprep.subr.bf16.mxu0 0
      %1166 = vmatpush1.bf16.msra.mxu0 0
      %1167 = vmatprep.subr.bf16.mxu0 0
      %1168 = vmatpush1.bf16.msra.mxu0 0
      %1169 = vmatprep.subr.bf16.mxu0 0
      %1170 = vmatpush1.bf16.msra.mxu0 0
      %1171 = vmatprep.subr.bf16.mxu0 0
      %1172 = vmatpush1.bf16.msra.mxu0 0
      %1173 = vmatprep.subr.bf16.mxu0 0
      %1174 = vmatpush1.bf16.msra.mxu0 0
      %1175 = vmatprep.subr.bf16.mxu0 0
      %1176 = vmatpush1.bf16.msra.mxu0 0
      %1177 = vmatprep.mubr.bf16.mxu0 0
      %1178 = vmatmul.mubr.bf16.gmra.mrb[0].mxu0 %v1143
      %v1179 = vpop.f32.mrb[0].mxu0
      %v1180 = vadd.f32 0.0, %v1179
      %v1181 = vpop.f32.mrb[0].mxu0
      %v1182 = vpop.f32.mrb[0].mxu0
      %v1183 = vadd.f32 0.0, %v1182
      %v1184 = vpop.f32.mrb[0].mxu0
      %1185 = vdwg.mxu0
      %v1186 = vadd.f32 %v493, %v1180
      %v1187 = vadd.f32 %v496, %v1183
      %v1188 = vlaneseq
      %v1189 = vshrl.u32 %v1188, 7
      %v1190 = vsub.s32 2, %v1189
      %v1191 = vrot.slane %v499, %v1190
      %v1192 = vadd.f32 %v1186, %v1191
      %v1193 = vadd.f32 %v1187, %v1191
      %v1194 = vsel %vm501, %v1192, 0.0
      %1195 = vadd.xlane.f32.xlu0 %v1194
      %v1196 = vpop.xlane.xlu0 %1195
      %v1197 = vsel %vm501, %v1193, 0.0
      %1198 = vadd.xlane.f32.xlu0 %v1197
      %v1199 = vpop.xlane.xlu0 %1198
      %v1200 = vmul.f32 %v1196, %v508
      %v1201 = vmul.f32 %v1199, %v508
      %v1202 = vsub.f32 %v1192, %v1200
      %v1203 = vsub.f32 %v1193, %v1201
      %v1204 = vmul.f32 %v1202, %v1202
      %v1205 = vmul.f32 %v1203, %v1203
      %v1206 = vsel %vm501, %v1204, 0.0
      %1207 = vadd.xlane.f32.xlu0 %v1206
      %v1208 = vpop.xlane.xlu0 %1207
      %v1209 = vsel %vm501, %v1205, 0.0
      %1210 = vadd.xlane.f32.xlu0 %v1209
      %v1211 = vpop.xlane.xlu0 %1210
      %v1212 = vmul.f32 %v1208, %v508
      %v1213 = vmul.f32 %v1211, %v508
      %v1214 = vadd.f32 %v1212, 1e-05
      %v1215 = vadd.f32 %v1213, 1e-05
      %v1216 = vrsqrt.pop %v1214
      %v1217 = vrsqrt.pop %v1215
      %v1218 = vmul.f32 %v1202, %v1216
      %v1219 = vmul.f32 %v1203, %v1217
      %v1220 = vlaneseq
      %v1221 = vshrl.u32 %v1220, 7
      %v1222 = vsub.s32 3, %v1221
      %v1223 = vrot.slane %v499, %v1222
      %v1224 = vmul.f32 %v1218, %v1223
      %v1225 = vmul.f32 %v1219, %v1223
      %v1226 = vlaneseq
      %v1227 = vshrl.u32 %v1226, 7
      %v1228 = vsub.s32 4, %v1227
      %v1229 = vrot.slane %v499, %v1228
      %v1230 = vadd.f32 %v1224, %v1229
      %v1231 = vadd.f32 %v1225, %v1229
      %v1232 = vpack.c.bf16 %v1231, %v1230
      %v1233 = vld [vmem:[%s7] sm:$0xf]
      %v1234 = vld [vmem:[%s7 + $0x4] sm:$0xf]
      %v1235 = vld [vmem:[%s7 + $0x8] sm:$0xf]
      %v1236 = vld [vmem:[%s7 + $0xc] sm:$0xf]
      %v1238 = vlaneseq
      %v1239 = vshrl.u32 %v1238, 7
      %v1240 = vsub.s32 0, %v1239
      %v1241 = vrot.slane %v500, %v1240
      %v1247 = vunpack.c.l.b16 %v1233
      %v1248 = vunpack.c.l.b16 %v1234
      %v1249 = vunpack.c.l.b16 %v1235
      %v1250 = vunpack.c.l.b16 %v1236
      %v1251 = vpack.c.b16 %v1248, %v1247
      %v1252 = vpack.c.b16 %v1250, %v1249
      %v1256 = vsel %vm501, %v1232, 0
      %1258 = vmatprep.subr.bf16.mxu0 0
      %1259 = vmatpush1.bf16.msra.mxu0 %v1251
      %1260 = vmatprep.subr.bf16.mxu0 0
      %1261 = vmatpush1.bf16.msra.mxu0 %v1252
      %1262 = vmatprep.subr.bf16.mxu0 0
      %1263 = vmatpush1.bf16.msra.mxu0 0
      %1264 = vmatprep.subr.bf16.mxu0 0
      %1265 = vmatpush1.bf16.msra.mxu0 0
      %1266 = vmatprep.subr.bf16.mxu0 0
      %1267 = vmatpush1.bf16.msra.mxu0 0
      %1268 = vmatprep.subr.bf16.mxu0 0
      %1269 = vmatpush1.bf16.msra.mxu0 0
      %1270 = vmatprep.subr.bf16.mxu0 0
      %1271 = vmatpush1.bf16.msra.mxu0 0
      %1272 = vmatprep.subr.bf16.mxu0 0
      %1273 = vmatpush1.bf16.msra.mxu0 0
      %1274 = vmatprep.subr.bf16.mxu0 0
      %1275 = vmatpush1.bf16.msra.mxu0 0
      %1276 = vmatprep.subr.bf16.mxu0 0
      %1277 = vmatpush1.bf16.msra.mxu0 0
      %1278 = vmatprep.subr.bf16.mxu0 0
      %1279 = vmatpush1.bf16.msra.mxu0 0
      %1280 = vmatprep.subr.bf16.mxu0 0
      %1281 = vmatpush1.bf16.msra.mxu0 0
      %1282 = vmatprep.subr.bf16.mxu0 0
      %1283 = vmatpush1.bf16.msra.mxu0 0
      %1284 = vmatprep.subr.bf16.mxu0 0
      %1285 = vmatpush1.bf16.msra.mxu0 0
      %1286 = vmatprep.subr.bf16.mxu0 0
      %1287 = vmatpush1.bf16.msra.mxu0 0
      %1288 = vmatprep.subr.bf16.mxu0 0
      %1289 = vmatpush1.bf16.msra.mxu0 0
      %1290 = vmatprep.mubr.bf16.mxu0 0
      %1291 = vmatmul.mubr.bf16.gmra.mrb[0].mxu0 %v1256
      %v1292 = vpop.f32.mrb[0].mxu0
      %v1293 = vadd.f32 %v1241, %v1292
      %v1294 = vpop.f32.mrb[0].mxu0
      %v1295 = vpop.f32.mrb[0].mxu0
      %v1296 = vadd.f32 %v1241, %v1295
      %v1297 = vpop.f32.mrb[0].mxu0
      %1298 = vdwg.mxu0
      %v1299 = vmax.f32 %v1293, 0.0
      %v1300 = vmax.f32 %v1296, 0.0
      %v1301 = vpack.c.bf16 %v1300, %v1299
      %v1302 = vld [vmem:[%s8] sm:$0xf]
      %v1303 = vld [vmem:[%s8 + $0x4] sm:$0xf]
      %v1304 = vld [vmem:[%s8 + $0x8] sm:$0xf]
      %v1305 = vld [vmem:[%s8 + $0xc] sm:$0xf]
      %v1306 = vld [vmem:[%s8 + $0x10] sm:$0xf]
      %v1307 = vld [vmem:[%s8 + $0x14] sm:$0xf]
      %v1308 = vld [vmem:[%s8 + $0x18] sm:$0xf]
      %v1309 = vld [vmem:[%s8 + $0x1c] sm:$0xf]
      %v1310 = vld [vmem:[%s8 + $0x20] sm:$0xf]
      %v1311 = vld [vmem:[%s8 + $0x24] sm:$0xf]
      %v1312 = vld [vmem:[%s8 + $0x28] sm:$0xf]
      %v1313 = vld [vmem:[%s8 + $0x2c] sm:$0xf]
      %v1314 = vld [vmem:[%s8 + $0x30] sm:$0xf]
      %v1315 = vld [vmem:[%s8 + $0x34] sm:$0xf]
      %v1316 = vld [vmem:[%s8 + $0x38] sm:$0xf]
      %v1317 = vld [vmem:[%s8 + $0x3c] sm:$0xf]
      %v1318 = vlaneseq
      %v1319 = vshrl.u32 %v1318, 7
      %v1320 = vsub.s32 5, %v1319
      %v1321 = vrot.slane %v499, %v1320
      %v1338 = vunpack.c.l.b16 %v1302
      %v1339 = vunpack.c.l.b16 %v1303
      %v1340 = vunpack.c.l.b16 %v1304
      %v1341 = vunpack.c.l.b16 %v1305
      %v1342 = vunpack.c.l.b16 %v1306
      %v1343 = vunpack.c.l.b16 %v1307
      %v1344 = vunpack.c.l.b16 %v1308
      %v1345 = vunpack.c.l.b16 %v1309
      %v1346 = vunpack.c.l.b16 %v1310
      %v1347 = vunpack.c.l.b16 %v1311
      %v1348 = vunpack.c.l.b16 %v1312
      %v1349 = vunpack.c.l.b16 %v1313
      %v1350 = vunpack.c.l.b16 %v1314
      %v1351 = vunpack.c.l.b16 %v1315
      %v1352 = vunpack.c.l.b16 %v1316
      %v1353 = vunpack.c.l.b16 %v1317
      %v1354 = vpack.c.b16 %v1339, %v1338
      %v1355 = vpack.c.b16 %v1341, %v1340
      %v1356 = vpack.c.b16 %v1343, %v1342
      %v1357 = vpack.c.b16 %v1345, %v1344
      %v1358 = vpack.c.b16 %v1347, %v1346
      %v1359 = vpack.c.b16 %v1349, %v1348
      %v1360 = vpack.c.b16 %v1351, %v1350
      %v1361 = vpack.c.b16 %v1353, %v1352
      %1370 = vmatprep.subr.bf16.mxu0 0
      %1371 = vmatpush1.bf16.msra.mxu0 %v1354
      %1372 = vmatprep.subr.bf16.mxu0 0
      %1373 = vmatpush1.bf16.msra.mxu0 %v1355
      %1374 = vmatprep.subr.bf16.mxu0 0
      %1375 = vmatpush1.bf16.msra.mxu0 %v1356
      %1376 = vmatprep.subr.bf16.mxu0 0
      %1377 = vmatpush1.bf16.msra.mxu0 %v1357
      %1378 = vmatprep.subr.bf16.mxu0 0
      %1379 = vmatpush1.bf16.msra.mxu0 %v1358
      %1380 = vmatprep.subr.bf16.mxu0 0
      %1381 = vmatpush1.bf16.msra.mxu0 %v1359
      %1382 = vmatprep.subr.bf16.mxu0 0
      %1383 = vmatpush1.bf16.msra.mxu0 %v1360
      %1384 = vmatprep.subr.bf16.mxu0 0
      %1385 = vmatpush1.bf16.msra.mxu0 %v1361
      %1386 = vmatprep.subr.bf16.mxu0 0
      %1387 = vmatpush1.bf16.msra.mxu0 0
      %1388 = vmatprep.subr.bf16.mxu0 0
      %1389 = vmatpush1.bf16.msra.mxu0 0
      %1390 = vmatprep.subr.bf16.mxu0 0
      %1391 = vmatpush1.bf16.msra.mxu0 0
      %1392 = vmatprep.subr.bf16.mxu0 0
      %1393 = vmatpush1.bf16.msra.mxu0 0
      %1394 = vmatprep.subr.bf16.mxu0 0
      %1395 = vmatpush1.bf16.msra.mxu0 0
      %1396 = vmatprep.subr.bf16.mxu0 0
      %1397 = vmatpush1.bf16.msra.mxu0 0
      %1398 = vmatprep.subr.bf16.mxu0 0
      %1399 = vmatpush1.bf16.msra.mxu0 0
      %1400 = vmatprep.subr.bf16.mxu0 0
      %1401 = vmatpush1.bf16.msra.mxu0 0
      %1402 = vmatprep.mubr.bf16.mxu0 0
      %1403 = vmatmul.mubr.bf16.gmra.mrb[0].mxu0 %v1301
      %v1404 = vpop.f32.mrb[0].mxu0
      %v1405 = vadd.f32 %v1321, %v1404
      %v1406 = vpop.f32.mrb[0].mxu0
      %v1407 = vpop.f32.mrb[0].mxu0
      %v1408 = vadd.f32 %v1321, %v1407
      %v1409 = vpop.f32.mrb[0].mxu0
      %1410 = vdwg.mxu0
      %v1411 = vadd.f32 %v1192, %v1405
      %v1412 = vadd.f32 %v1193, %v1408
      %s1413 = scalar_lea.vmem %s3, 8
      %v1414 = vld [vmem:[%s1413] sm:$0xff]
      %s1415 = scalar_lea.vmem %s4, 1
      %v1416 = vld [vmem:[%s1415] sm:$0x1]
      %v1417 = vsel %vm501, %v1411, 0.0
      %1418 = vadd.xlane.f32.xlu0 %v1417
      %v1419 = vpop.xlane.xlu0 %1418
      %v1420 = vsel %vm501, %v1412, 0.0
      %1421 = vadd.xlane.f32.xlu0 %v1420
      %v1422 = vpop.xlane.xlu0 %1421
      %v1423 = vmul.f32 %v1419, %v508
      %v1424 = vmul.f32 %v1422, %v508
      %v1425 = vsub.f32 %v1411, %v1423
      %v1426 = vsub.f32 %v1412, %v1424
      %v1427 = vmul.f32 %v1425, %v1425
      %v1428 = vmul.f32 %v1426, %v1426
      %v1429 = vsel %vm501, %v1427, 0.0
      %1430 = vadd.xlane.f32.xlu0 %v1429
      %v1431 = vpop.xlane.xlu0 %1430
      %v1432 = vsel %vm501, %v1428, 0.0
      %1433 = vadd.xlane.f32.xlu0 %v1432
      %v1434 = vpop.xlane.xlu0 %1433
      %v1435 = vmul.f32 %v1431, %v508
      %v1436 = vmul.f32 %v1434, %v508
      %v1437 = vadd.f32 %v1435, 1e-05
      %v1438 = vadd.f32 %v1436, 1e-05
      %v1439 = vrsqrt.pop %v1437
      %v1440 = vrsqrt.pop %v1438
      %v1441 = vmul.f32 %v1425, %v1439
      %v1442 = vmul.f32 %v1426, %v1440
      %v1443 = vlaneseq
      %v1444 = vshrl.u32 %v1443, 7
      %v1445 = vsub.s32 0, %v1444
      %v1446 = vrot.slane %v1414, %v1445
      %v1447 = vmul.f32 %v1441, %v1446
      %v1448 = vmul.f32 %v1442, %v1446
      %v1449 = vlaneseq
      %v1450 = vshrl.u32 %v1449, 7
      %v1451 = vsub.s32 1, %v1450
      %v1452 = vrot.slane %v1414, %v1451
      %v1453 = vadd.f32 %v1447, %v1452
      %v1454 = vadd.f32 %v1448, %v1452
      %v1455 = vpack.c.bf16 %v1454, %v1453
      %s1456 = scalar_lea.vmem %s5, 16
      %v1457 = vld [vmem:[%s1456] sm:$0xf]
      %v1458 = vld [vmem:[%s1456 + $0x4] sm:$0xf]
      %v1459 = vld [vmem:[%s1456 + $0x8] sm:$0xf]
      %v1460 = vld [vmem:[%s1456 + $0xc] sm:$0xf]
      %v1465 = vunpack.c.l.b16 %v1457
      %v1466 = vunpack.c.l.b16 %v1458
      %v1467 = vunpack.c.l.b16 %v1459
      %v1468 = vunpack.c.l.b16 %v1460
      %v1469 = vpack.c.b16 %v1466, %v1465
      %v1470 = vpack.c.b16 %v1468, %v1467
      %v1474 = vsel %vm501, %v1455, 0
      %1476 = vmatprep.subr.bf16.mxu0 0
      %1477 = vmatpush1.bf16.msra.mxu0 %v1469
      %1478 = vmatprep.subr.bf16.mxu0 0
      %1479 = vmatpush1.bf16.msra.mxu0 %v1470
      %1480 = vmatprep.subr.bf16.mxu0 0
      %1481 = vmatpush1.bf16.msra.mxu0 0
      %1482 = vmatprep.subr.bf16.mxu0 0
      %1483 = vmatpush1.bf16.msra.mxu0 0
      %1484 = vmatprep.subr.bf16.mxu0 0
      %1485 = vmatpush1.bf16.msra.mxu0 0
      %1486 = vmatprep.subr.bf16.mxu0 0
      %1487 = vmatpush1.bf16.msra.mxu0 0
      %1488 = vmatprep.subr.bf16.mxu0 0
      %1489 = vmatpush1.bf16.msra.mxu0 0
      %1490 = vmatprep.subr.bf16.mxu0 0
      %1491 = vmatpush1.bf16.msra.mxu0 0
      %1492 = vmatprep.subr.bf16.mxu0 0
      %1493 = vmatpush1.bf16.msra.mxu0 0
      %1494 = vmatprep.subr.bf16.mxu0 0
      %1495 = vmatpush1.bf16.msra.mxu0 0
      %1496 = vmatprep.subr.bf16.mxu0 0
      %1497 = vmatpush1.bf16.msra.mxu0 0
      %1498 = vmatprep.subr.bf16.mxu0 0
      %1499 = vmatpush1.bf16.msra.mxu0 0
      %1500 = vmatprep.subr.bf16.mxu0 0
      %1501 = vmatpush1.bf16.msra.mxu0 0
      %1502 = vmatprep.subr.bf16.mxu0 0
      %1503 = vmatpush1.bf16.msra.mxu0 0
      %1504 = vmatprep.subr.bf16.mxu0 0
      %1505 = vmatpush1.bf16.msra.mxu0 0
      %1506 = vmatprep.subr.bf16.mxu0 0
      %1507 = vmatpush1.bf16.msra.mxu0 0
      %1508 = vmatprep.mubr.bf16.mxu0 0
      %1509 = vmatmul.mubr.bf16.gmra.mrb[0].mxu0 %v1474
      %v1510 = vpop.f32.mrb[0].mxu0
      %v1511 = vadd.f32 0.0, %v1510
      %v1512 = vpop.f32.mrb[0].mxu0
      %v1513 = vpop.f32.mrb[0].mxu0
      %v1514 = vadd.f32 0.0, %v1513
      %v1515 = vpop.f32.mrb[0].mxu0
      %1516 = vdwg.mxu0
      %v1517 = vpack.c.bf16 %v1514, %v1511
      %1519 = vrot.lane.b32.xlu0 %v1517, 96
      %v1520 = vpop.permute.xlu0 %1519
      %v1522 = vsel %vm606, %v1517, 0
      %v1525 = vsel %vm606, %v1520, 0
      %1527 = vmatprep.subr.bf16.mxu0 0
      %1528 = vmatpush1.bf16.xpose.msra.mxu0 %v1525
      %1529 = vmatprep.subr.bf16.mxu0 0
      %1530 = vmatpush1.bf16.xpose.msra.mxu0 0
      %1531 = vmatprep.subr.bf16.mxu0 0
      %1532 = vmatpush1.bf16.xpose.msra.mxu0 0
      %1533 = vmatprep.subr.bf16.mxu0 0
      %1534 = vmatpush1.bf16.xpose.msra.mxu0 0
      %1535 = vmatprep.subr.bf16.mxu0 0
      %1536 = vmatpush1.bf16.xpose.msra.mxu0 0
      %1537 = vmatprep.subr.bf16.mxu0 0
      %1538 = vmatpush1.bf16.xpose.msra.mxu0 0
      %1539 = vmatprep.subr.bf16.mxu0 0
      %1540 = vmatpush1.bf16.xpose.msra.mxu0 0
      %1541 = vmatprep.subr.bf16.mxu0 0
      %1542 = vmatpush1.bf16.xpose.msra.mxu0 0
      %1543 = vmatprep.subr.bf16.mxu0 0
      %1544 = vmatpush1.bf16.xpose.msra.mxu0 0
      %1545 = vmatprep.subr.bf16.mxu0 0
      %1546 = vmatpush1.bf16.xpose.msra.mxu0 0
      %1547 = vmatprep.subr.bf16.mxu0 0
      %1548 = vmatpush1.bf16.xpose.msra.mxu0 0
      %1549 = vmatprep.subr.bf16.mxu0 0
      %1550 = vmatpush1.bf16.xpose.msra.mxu0 0
      %1551 = vmatprep.subr.bf16.mxu0 0
      %1552 = vmatpush1.bf16.xpose.msra.mxu0 0
      %1553 = vmatprep.subr.bf16.mxu0 0
      %1554 = vmatpush1.bf16.xpose.msra.mxu0 0
      %1555 = vmatprep.subr.bf16.mxu0 0
      %1556 = vmatpush1.bf16.xpose.msra.mxu0 0
      %1557 = vmatprep.subr.bf16.mxu0 0
      %1558 = vmatpush1.bf16.xpose.msra.mxu0 0
      %1559 = vmatprep.mubr.bf16.mxu0 0
      %1560 = vmatmul.mubr.bf16.gmra.mrb[0].mxu0 %v1522
      %v1561 = vpop.f32.mrb[0].mxu0
      %v1562 = vadd.f32 0.0, %v1561
      %v1563 = vpop.f32.mrb[0].mxu0
      %v1564 = vpop.f32.mrb[0].mxu0
      %v1565 = vadd.f32 0.0, %v1564
      %v1566 = vpop.f32.mrb[0].mxu0
      %1567 = vdwg.mxu0
      %v1568 = vsel %vm654, %v1562, -inf
      %1569 = vmax.xlane.f32.xlu0 %v1568
      %v1570 = vpop.xlane.xlu0 %1569
      %v1571 = vsel %vm654, %v1565, -inf
      %1572 = vmax.xlane.f32.xlu0 %v1571
      %v1573 = vpop.xlane.xlu0 %1572
      %v1574 = vsub.f32 %v1562, %v1570
      %v1575 = vsub.f32 %v1565, %v1573
      %v1576 = vmul.f32 %v1574, 1.442695
      %v1577 = vpow.pop %v1576
      %v1578 = vmul.f32 %v1575, 1.442695
      %v1579 = vpow.pop %v1578
      %v1580 = vsel %vm654, %v1577, 0.0
      %1581 = vadd.xlane.f32.xlu0 %v1580
      %v1582 = vpop.xlane.xlu0 %1581
      %v1583 = vsel %vm654, %v1579, 0.0
      %1584 = vadd.xlane.f32.xlu0 %v1583
      %v1585 = vpop.xlane.xlu0 %1584
      %v1586 = vrcp.pop %v1582
      %v1587 = vrcp.pop %v1585
      %v1588 = vmul.f32 %v1577, %v1586
      %v1589 = vmul.f32 %v1579, %v1587
      %v1590 = vpack.c.bf16 %v1589, %v1588
      %1591 = vrot.lane.b32.xlu0 %v1517, 64
      %v1592 = vpop.permute.xlu0 %1591
      %v1595 = vsel %vm654, %v1590, 0
      %1597 = vmatprep.subr.bf16.mxu0 0
      %1598 = vmatpush1.bf16.msra.mxu0 %v1592
      %1599 = vmatprep.subr.bf16.mxu0 0
      %1600 = vmatpush1.bf16.msra.mxu0 0
      %1601 = vmatprep.subr.bf16.mxu0 0
      %1602 = vmatpush1.bf16.msra.mxu0 0
      %1603 = vmatprep.subr.bf16.mxu0 0
      %1604 = vmatpush1.bf16.msra.mxu0 0
      %1605 = vmatprep.subr.bf16.mxu0 0
      %1606 = vmatpush1.bf16.msra.mxu0 0
      %1607 = vmatprep.subr.bf16.mxu0 0
      %1608 = vmatpush1.bf16.msra.mxu0 0
      %1609 = vmatprep.subr.bf16.mxu0 0
      %1610 = vmatpush1.bf16.msra.mxu0 0
      %1611 = vmatprep.subr.bf16.mxu0 0
      %1612 = vmatpush1.bf16.msra.mxu0 0
      %1613 = vmatprep.subr.bf16.mxu0 0
      %1614 = vmatpush1.bf16.msra.mxu0 0
      %1615 = vmatprep.subr.bf16.mxu0 0
      %1616 = vmatpush1.bf16.msra.mxu0 0
      %1617 = vmatprep.subr.bf16.mxu0 0
      %1618 = vmatpush1.bf16.msra.mxu0 0
      %1619 = vmatprep.subr.bf16.mxu0 0
      %1620 = vmatpush1.bf16.msra.mxu0 0
      %1621 = vmatprep.subr.bf16.mxu0 0
      %1622 = vmatpush1.bf16.msra.mxu0 0
      %1623 = vmatprep.subr.bf16.mxu0 0
      %1624 = vmatpush1.bf16.msra.mxu0 0
      %1625 = vmatprep.subr.bf16.mxu0 0
      %1626 = vmatpush1.bf16.msra.mxu0 0
      %1627 = vmatprep.subr.bf16.mxu0 0
      %1628 = vmatpush1.bf16.msra.mxu0 0
      %1629 = vmatprep.mubr.bf16.mxu0 0
      %1630 = vmatmul.mubr.bf16.gmra.mrb[0].mxu0 %v1595
      %v1631 = vpop.f32.mrb[0].mxu0
      %v1632 = vadd.f32 0.0, %v1631
      %v1633 = vpop.f32.mrb[0].mxu0
      %v1634 = vpop.f32.mrb[0].mxu0
      %v1635 = vadd.f32 0.0, %v1634
      %v1636 = vpop.f32.mrb[0].mxu0
      %1637 = vdwg.mxu0
      %1638 = vst.msk [vmem:[#allocation2] sm:$0xff] %vm606, %v1632
      %1639 = vst.msk [vmem:[#allocation2 + $0x8] sm:$0xff] %vm606, %v1635
      %1640 = vrot.lane.b32.xlu0 %v1517, 120
      %v1641 = vpop.permute.xlu0 %1640
      %1642 = vrot.lane.b32.xlu0 %v1517, 88
      %v1643 = vpop.permute.xlu0 %1642
      %v1645 = vsel %vm606, %v1641, 0
      %v1648 = vsel %vm606, %v1643, 0
      %1650 = vmatprep.subr.bf16.mxu0 0
      %1651 = vmatpush1.bf16.xpose.msra.mxu0 %v1648
      %1652 = vmatprep.subr.bf16.mxu0 0
      %1653 = vmatpush1.bf16.xpose.msra.mxu0 0
      %1654 = vmatprep.subr.bf16.mxu0 0
      %1655 = vmatpush1.bf16.xpose.msra.mxu0 0
      %1656 = vmatprep.subr.bf16.mxu0 0
      %1657 = vmatpush1.bf16.xpose.msra.mxu0 0
      %1658 = vmatprep.subr.bf16.mxu0 0
      %1659 = vmatpush1.bf16.xpose.msra.mxu0 0
      %1660 = vmatprep.subr.bf16.mxu0 0
      %1661 = vmatpush1.bf16.xpose.msra.mxu0 0
      %1662 = vmatprep.subr.bf16.mxu0 0
      %1663 = vmatpush1.bf16.xpose.msra.mxu0 0
      %1664 = vmatprep.subr.bf16.mxu0 0
      %1665 = vmatpush1.bf16.xpose.msra.mxu0 0
      %1666 = vmatprep.subr.bf16.mxu0 0
      %1667 = vmatpush1.bf16.xpose.msra.mxu0 0
      %1668 = vmatprep.subr.bf16.mxu0 0
      %1669 = vmatpush1.bf16.xpose.msra.mxu0 0
      %1670 = vmatprep.subr.bf16.mxu0 0
      %1671 = vmatpush1.bf16.xpose.msra.mxu0 0
      %1672 = vmatprep.subr.bf16.mxu0 0
      %1673 = vmatpush1.bf16.xpose.msra.mxu0 0
      %1674 = vmatprep.subr.bf16.mxu0 0
      %1675 = vmatpush1.bf16.xpose.msra.mxu0 0
      %1676 = vmatprep.subr.bf16.mxu0 0
      %1677 = vmatpush1.bf16.xpose.msra.mxu0 0
      %1678 = vmatprep.subr.bf16.mxu0 0
      %1679 = vmatpush1.bf16.xpose.msra.mxu0 0
      %1680 = vmatprep.subr.bf16.mxu0 0
      %1681 = vmatpush1.bf16.xpose.msra.mxu0 0
      %1682 = vmatprep.mubr.bf16.mxu0 0
      %1683 = vmatmul.mubr.bf16.gmra.mrb[0].mxu0 %v1645
      %v1684 = vpop.f32.mrb[0].mxu0
      %v1685 = vadd.f32 0.0, %v1684
      %v1686 = vpop.f32.mrb[0].mxu0
      %v1687 = vpop.f32.mrb[0].mxu0
      %v1688 = vadd.f32 0.0, %v1687
      %v1689 = vpop.f32.mrb[0].mxu0
      %1690 = vdwg.mxu0
      %v1691 = vsel %vm654, %v1685, -inf
      %1692 = vmax.xlane.f32.xlu0 %v1691
      %v1693 = vpop.xlane.xlu0 %1692
      %v1694 = vsel %vm654, %v1688, -inf
      %1695 = vmax.xlane.f32.xlu0 %v1694
      %v1696 = vpop.xlane.xlu0 %1695
      %v1697 = vsub.f32 %v1685, %v1693
      %v1698 = vsub.f32 %v1688, %v1696
      %v1699 = vmul.f32 %v1697, 1.442695
      %v1700 = vpow.pop %v1699
      %v1701 = vmul.f32 %v1698, 1.442695
      %v1702 = vpow.pop %v1701
      %v1703 = vsel %vm654, %v1700, 0.0
      %1704 = vadd.xlane.f32.xlu0 %v1703
      %v1705 = vpop.xlane.xlu0 %1704
      %v1706 = vsel %vm654, %v1702, 0.0
      %1707 = vadd.xlane.f32.xlu0 %v1706
      %v1708 = vpop.xlane.xlu0 %1707
      %v1709 = vrcp.pop %v1705
      %v1710 = vrcp.pop %v1708
      %v1711 = vmul.f32 %v1700, %v1709
      %v1712 = vmul.f32 %v1702, %v1710
      %v1713 = vpack.c.bf16 %v1712, %v1711
      %1714 = vrot.lane.b32.xlu0 %v1517, 56
      %v1715 = vpop.permute.xlu0 %1714
      %v1718 = vsel %vm654, %v1713, 0
      %1720 = vmatprep.subr.bf16.mxu0 0
      %1721 = vmatpush1.bf16.msra.mxu0 %v1715
      %1722 = vmatprep.subr.bf16.mxu0 0
      %1723 = vmatpush1.bf16.msra.mxu0 0
      %1724 = vmatprep.subr.bf16.mxu0 0
      %1725 = vmatpush1.bf16.msra.mxu0 0
      %1726 = vmatprep.subr.bf16.mxu0 0
      %1727 = vmatpush1.bf16.msra.mxu0 0
      %1728 = vmatprep.subr.bf16.mxu0 0
      %1729 = vmatpush1.bf16.msra.mxu0 0
      %1730 = vmatprep.subr.bf16.mxu0 0
      %1731 = vmatpush1.bf16.msra.mxu0 0
      %1732 = vmatprep.subr.bf16.mxu0 0
      %1733 = vmatpush1.bf16.msra.mxu0 0
      %1734 = vmatprep.subr.bf16.mxu0 0
      %1735 = vmatpush1.bf16.msra.mxu0 0
      %1736 = vmatprep.subr.bf16.mxu0 0
      %1737 = vmatpush1.bf16.msra.mxu0 0
      %1738 = vmatprep.subr.bf16.mxu0 0
      %1739 = vmatpush1.bf16.msra.mxu0 0
      %1740 = vmatprep.subr.bf16.mxu0 0
      %1741 = vmatpush1.bf16.msra.mxu0 0
      %1742 = vmatprep.subr.bf16.mxu0 0
      %1743 = vmatpush1.bf16.msra.mxu0 0
      %1744 = vmatprep.subr.bf16.mxu0 0
      %1745 = vmatpush1.bf16.msra.mxu0 0
      %1746 = vmatprep.subr.bf16.mxu0 0
      %1747 = vmatpush1.bf16.msra.mxu0 0
      %1748 = vmatprep.subr.bf16.mxu0 0
      %1749 = vmatpush1.bf16.msra.mxu0 0
      %1750 = vmatprep.subr.bf16.mxu0 0
      %1751 = vmatpush1.bf16.msra.mxu0 0
      %1752 = vmatprep.mubr.bf16.mxu0 0
      %1753 = vmatmul.mubr.bf16.gmra.mrb[0].mxu0 %v1718
      %v1754 = vpop.f32.mrb[0].mxu0
      %v1755 = vadd.f32 0.0, %v1754
      %v1756 = vpop.f32.mrb[0].mxu0
      %v1757 = vpop.f32.mrb[0].mxu0
      %v1758 = vadd.f32 0.0, %v1757
      %v1759 = vpop.f32.mrb[0].mxu0
      %1760 = vdwg.mxu0
      %1763 = vrot.lane.b32.xlu0 %v1755, 8
      %v1764 = vpop.permute.xlu0 %1763
      %1765 = vrot.lane.b32.xlu0 %v1758, 8
      %v1766 = vpop.permute.xlu0 %1765
      %1769 = vst.msk [vmem:[#allocation2] sm:$0xff] %vm856, %v1764
      %1770 = vst.msk [vmem:[#allocation2 + $0x8] sm:$0xff] %vm856, %v1766
      %1771 = vrot.lane.b32.xlu0 %v1517, 112
      %v1772 = vpop.permute.xlu0 %1771
      %1773 = vrot.lane.b32.xlu0 %v1517, 80
      %v1774 = vpop.permute.xlu0 %1773
      %v1776 = vsel %vm606, %v1772, 0
      %v1779 = vsel %vm606, %v1774, 0
      %1781 = vmatprep.subr.bf16.mxu0 0
      %1782 = vmatpush1.bf16.xpose.msra.mxu0 %v1779
      %1783 = vmatprep.subr.bf16.mxu0 0
      %1784 = vmatpush1.bf16.xpose.msra.mxu0 0
      %1785 = vmatprep.subr.bf16.mxu0 0
      %1786 = vmatpush1.bf16.xpose.msra.mxu0 0
      %1787 = vmatprep.subr.bf16.mxu0 0
      %1788 = vmatpush1.bf16.xpose.msra.mxu0 0
      %1789 = vmatprep.subr.bf16.mxu0 0
      %1790 = vmatpush1.bf16.xpose.msra.mxu0 0
      %1791 = vmatprep.subr.bf16.mxu0 0
      %1792 = vmatpush1.bf16.xpose.msra.mxu0 0
      %1793 = vmatprep.subr.bf16.mxu0 0
      %1794 = vmatpush1.bf16.xpose.msra.mxu0 0
      %1795 = vmatprep.subr.bf16.mxu0 0
      %1796 = vmatpush1.bf16.xpose.msra.mxu0 0
      %1797 = vmatprep.subr.bf16.mxu0 0
      %1798 = vmatpush1.bf16.xpose.msra.mxu0 0
      %1799 = vmatprep.subr.bf16.mxu0 0
      %1800 = vmatpush1.bf16.xpose.msra.mxu0 0
      %1801 = vmatprep.subr.bf16.mxu0 0
      %1802 = vmatpush1.bf16.xpose.msra.mxu0 0
      %1803 = vmatprep.subr.bf16.mxu0 0
      %1804 = vmatpush1.bf16.xpose.msra.mxu0 0
      %1805 = vmatprep.subr.bf16.mxu0 0
      %1806 = vmatpush1.bf16.xpose.msra.mxu0 0
      %1807 = vmatprep.subr.bf16.mxu0 0
      %1808 = vmatpush1.bf16.xpose.msra.mxu0 0
      %1809 = vmatprep.subr.bf16.mxu0 0
      %1810 = vmatpush1.bf16.xpose.msra.mxu0 0
      %1811 = vmatprep.subr.bf16.mxu0 0
      %1812 = vmatpush1.bf16.xpose.msra.mxu0 0
      %1813 = vmatprep.mubr.bf16.mxu0 0
      %1814 = vmatmul.mubr.bf16.gmra.mrb[0].mxu0 %v1776
      %v1815 = vpop.f32.mrb[0].mxu0
      %v1816 = vadd.f32 0.0, %v1815
      %v1817 = vpop.f32.mrb[0].mxu0
      %v1818 = vpop.f32.mrb[0].mxu0
      %v1819 = vadd.f32 0.0, %v1818
      %v1820 = vpop.f32.mrb[0].mxu0
      %1821 = vdwg.mxu0
      %v1822 = vsel %vm654, %v1816, -inf
      %1823 = vmax.xlane.f32.xlu0 %v1822
      %v1824 = vpop.xlane.xlu0 %1823
      %v1825 = vsel %vm654, %v1819, -inf
      %1826 = vmax.xlane.f32.xlu0 %v1825
      %v1827 = vpop.xlane.xlu0 %1826
      %v1828 = vsub.f32 %v1816, %v1824
      %v1829 = vsub.f32 %v1819, %v1827
      %v1830 = vmul.f32 %v1828, 1.442695
      %v1831 = vpow.pop %v1830
      %v1832 = vmul.f32 %v1829, 1.442695
      %v1833 = vpow.pop %v1832
      %v1834 = vsel %vm654, %v1831, 0.0
      %1835 = vadd.xlane.f32.xlu0 %v1834
      %v1836 = vpop.xlane.xlu0 %1835
      %v1837 = vsel %vm654, %v1833, 0.0
      %1838 = vadd.xlane.f32.xlu0 %v1837
      %v1839 = vpop.xlane.xlu0 %1838
      %v1840 = vrcp.pop %v1836
      %v1841 = vrcp.pop %v1839
      %v1842 = vmul.f32 %v1831, %v1840
      %v1843 = vmul.f32 %v1833, %v1841
      %v1844 = vpack.c.bf16 %v1843, %v1842
      %1845 = vrot.lane.b32.xlu0 %v1517, 48
      %v1846 = vpop.permute.xlu0 %1845
      %v1849 = vsel %vm654, %v1844, 0
      %1851 = vmatprep.subr.bf16.mxu0 0
      %1852 = vmatpush1.bf16.msra.mxu0 %v1846
      %1853 = vmatprep.subr.bf16.mxu0 0
      %1854 = vmatpush1.bf16.msra.mxu0 0
      %1855 = vmatprep.subr.bf16.mxu0 0
      %1856 = vmatpush1.bf16.msra.mxu0 0
      %1857 = vmatprep.subr.bf16.mxu0 0
      %1858 = vmatpush1.bf16.msra.mxu0 0
      %1859 = vmatprep.subr.bf16.mxu0 0
      %1860 = vmatpush1.bf16.msra.mxu0 0
      %1861 = vmatprep.subr.bf16.mxu0 0
      %1862 = vmatpush1.bf16.msra.mxu0 0
      %1863 = vmatprep.subr.bf16.mxu0 0
      %1864 = vmatpush1.bf16.msra.mxu0 0
      %1865 = vmatprep.subr.bf16.mxu0 0
      %1866 = vmatpush1.bf16.msra.mxu0 0
      %1867 = vmatprep.subr.bf16.mxu0 0
      %1868 = vmatpush1.bf16.msra.mxu0 0
      %1869 = vmatprep.subr.bf16.mxu0 0
      %1870 = vmatpush1.bf16.msra.mxu0 0
      %1871 = vmatprep.subr.bf16.mxu0 0
      %1872 = vmatpush1.bf16.msra.mxu0 0
      %1873 = vmatprep.subr.bf16.mxu0 0
      %1874 = vmatpush1.bf16.msra.mxu0 0
      %1875 = vmatprep.subr.bf16.mxu0 0
      %1876 = vmatpush1.bf16.msra.mxu0 0
      %1877 = vmatprep.subr.bf16.mxu0 0
      %1878 = vmatpush1.bf16.msra.mxu0 0
      %1879 = vmatprep.subr.bf16.mxu0 0
      %1880 = vmatpush1.bf16.msra.mxu0 0
      %1881 = vmatprep.subr.bf16.mxu0 0
      %1882 = vmatpush1.bf16.msra.mxu0 0
      %1883 = vmatprep.mubr.bf16.mxu0 0
      %1884 = vmatmul.mubr.bf16.gmra.mrb[0].mxu0 %v1849
      %v1885 = vpop.f32.mrb[0].mxu0
      %v1886 = vadd.f32 0.0, %v1885
      %v1887 = vpop.f32.mrb[0].mxu0
      %v1888 = vpop.f32.mrb[0].mxu0
      %v1889 = vadd.f32 0.0, %v1888
      %v1890 = vpop.f32.mrb[0].mxu0
      %1891 = vdwg.mxu0
      %1894 = vrot.lane.b32.xlu0 %v1886, 16
      %v1895 = vpop.permute.xlu0 %1894
      %1896 = vrot.lane.b32.xlu0 %v1889, 16
      %v1897 = vpop.permute.xlu0 %1896
      %1900 = vst.msk [vmem:[#allocation2] sm:$0xff] %vm988, %v1895
      %1901 = vst.msk [vmem:[#allocation2 + $0x8] sm:$0xff] %vm988, %v1897
      %1902 = vrot.lane.b32.xlu0 %v1517, 104
      %v1903 = vpop.permute.xlu0 %1902
      %1904 = vrot.lane.b32.xlu0 %v1517, 72
      %v1905 = vpop.permute.xlu0 %1904
      %v1907 = vsel %vm606, %v1903, 0
      %v1910 = vsel %vm606, %v1905, 0
      %1912 = vmatprep.subr.bf16.mxu0 0
      %1913 = vmatpush1.bf16.xpose.msra.mxu0 %v1910
      %1914 = vmatprep.subr.bf16.mxu0 0
      %1915 = vmatpush1.bf16.xpose.msra.mxu0 0
      %1916 = vmatprep.subr.bf16.mxu0 0
      %1917 = vmatpush1.bf16.xpose.msra.mxu0 0
      %1918 = vmatprep.subr.bf16.mxu0 0
      %1919 = vmatpush1.bf16.xpose.msra.mxu0 0
      %1920 = vmatprep.subr.bf16.mxu0 0
      %1921 = vmatpush1.bf16.xpose.msra.mxu0 0
      %1922 = vmatprep.subr.bf16.mxu0 0
      %1923 = vmatpush1.bf16.xpose.msra.mxu0 0
      %1924 = vmatprep.subr.bf16.mxu0 0
      %1925 = vmatpush1.bf16.xpose.msra.mxu0 0
      %1926 = vmatprep.subr.bf16.mxu0 0
      %1927 = vmatpush1.bf16.xpose.msra.mxu0 0
      %1928 = vmatprep.subr.bf16.mxu0 0
      %1929 = vmatpush1.bf16.xpose.msra.mxu0 0
      %1930 = vmatprep.subr.bf16.mxu0 0
      %1931 = vmatpush1.bf16.xpose.msra.mxu0 0
      %1932 = vmatprep.subr.bf16.mxu0 0
      %1933 = vmatpush1.bf16.xpose.msra.mxu0 0
      %1934 = vmatprep.subr.bf16.mxu0 0
      %1935 = vmatpush1.bf16.xpose.msra.mxu0 0
      %1936 = vmatprep.subr.bf16.mxu0 0
      %1937 = vmatpush1.bf16.xpose.msra.mxu0 0
      %1938 = vmatprep.subr.bf16.mxu0 0
      %1939 = vmatpush1.bf16.xpose.msra.mxu0 0
      %1940 = vmatprep.subr.bf16.mxu0 0
      %1941 = vmatpush1.bf16.xpose.msra.mxu0 0
      %1942 = vmatprep.subr.bf16.mxu0 0
      %1943 = vmatpush1.bf16.xpose.msra.mxu0 0
      %1944 = vmatprep.mubr.bf16.mxu0 0
      %1945 = vmatmul.mubr.bf16.gmra.mrb[0].mxu0 %v1907
      %v1946 = vpop.f32.mrb[0].mxu0
      %v1947 = vadd.f32 0.0, %v1946
      %v1948 = vpop.f32.mrb[0].mxu0
      %v1949 = vpop.f32.mrb[0].mxu0
      %v1950 = vadd.f32 0.0, %v1949
      %v1951 = vpop.f32.mrb[0].mxu0
      %1952 = vdwg.mxu0
      %v1953 = vsel %vm654, %v1947, -inf
      %1954 = vmax.xlane.f32.xlu0 %v1953
      %v1955 = vpop.xlane.xlu0 %1954
      %v1956 = vsel %vm654, %v1950, -inf
      %1957 = vmax.xlane.f32.xlu0 %v1956
      %v1958 = vpop.xlane.xlu0 %1957
      %v1959 = vsub.f32 %v1947, %v1955
      %v1960 = vsub.f32 %v1950, %v1958
      %v1961 = vmul.f32 %v1959, 1.442695
      %v1962 = vpow.pop %v1961
      %v1963 = vmul.f32 %v1960, 1.442695
      %v1964 = vpow.pop %v1963
      %v1965 = vsel %vm654, %v1962, 0.0
      %1966 = vadd.xlane.f32.xlu0 %v1965
      %v1967 = vpop.xlane.xlu0 %1966
      %v1968 = vsel %vm654, %v1964, 0.0
      %1969 = vadd.xlane.f32.xlu0 %v1968
      %v1970 = vpop.xlane.xlu0 %1969
      %v1971 = vrcp.pop %v1967
      %v1972 = vrcp.pop %v1970
      %v1973 = vmul.f32 %v1962, %v1971
      %v1974 = vmul.f32 %v1964, %v1972
      %v1975 = vpack.c.bf16 %v1974, %v1973
      %1976 = vrot.lane.b32.xlu0 %v1517, 40
      %v1977 = vpop.permute.xlu0 %1976
      %v1980 = vsel %vm654, %v1975, 0
      %1982 = vmatprep.subr.bf16.mxu0 0
      %1983 = vmatpush1.bf16.msra.mxu0 %v1977
      %1984 = vmatprep.subr.bf16.mxu0 0
      %1985 = vmatpush1.bf16.msra.mxu0 0
      %1986 = vmatprep.subr.bf16.mxu0 0
      %1987 = vmatpush1.bf16.msra.mxu0 0
      %1988 = vmatprep.subr.bf16.mxu0 0
      %1989 = vmatpush1.bf16.msra.mxu0 0
      %1990 = vmatprep.subr.bf16.mxu0 0
      %1991 = vmatpush1.bf16.msra.mxu0 0
      %1992 = vmatprep.subr.bf16.mxu0 0
      %1993 = vmatpush1.bf16.msra.mxu0 0
      %1994 = vmatprep.subr.bf16.mxu0 0
      %1995 = vmatpush1.bf16.msra.mxu0 0
      %1996 = vmatprep.subr.bf16.mxu0 0
      %1997 = vmatpush1.bf16.msra.mxu0 0
      %1998 = vmatprep.subr.bf16.mxu0 0
      %1999 = vmatpush1.bf16.msra.mxu0 0
      %2000 = vmatprep.subr.bf16.mxu0 0
      %2001 = vmatpush1.bf16.msra.mxu0 0
      %2002 = vmatprep.subr.bf16.mxu0 0
      %2003 = vmatpush1.bf16.msra.mxu0 0
      %2004 = vmatprep.subr.bf16.mxu0 0
      %2005 = vmatpush1.bf16.msra.mxu0 0
      %2006 = vmatprep.subr.bf16.mxu0 0
      %2007 = vmatpush1.bf16.msra.mxu0 0
      %2008 = vmatprep.subr.bf16.mxu0 0
      %2009 = vmatpush1.bf16.msra.mxu0 0
      %2010 = vmatprep.subr.bf16.mxu0 0
      %2011 = vmatpush1.bf16.msra.mxu0 0
      %2012 = vmatprep.subr.bf16.mxu0 0
      %2013 = vmatpush1.bf16.msra.mxu0 0
      %2014 = vmatprep.mubr.bf16.mxu0 0
      %2015 = vmatmul.mubr.bf16.gmra.mrb[0].mxu0 %v1980
      %v2016 = vpop.f32.mrb[0].mxu0
      %v2017 = vadd.f32 0.0, %v2016
      %v2018 = vpop.f32.mrb[0].mxu0
      %v2019 = vpop.f32.mrb[0].mxu0
      %v2020 = vadd.f32 0.0, %v2019
      %v2021 = vpop.f32.mrb[0].mxu0
      %2022 = vdwg.mxu0
      %2025 = vrot.lane.b32.xlu0 %v2017, 24
      %v2026 = vpop.permute.xlu0 %2025
      %2027 = vrot.lane.b32.xlu0 %v2020, 24
      %v2028 = vpop.permute.xlu0 %2027
      %2031 = vst.msk [vmem:[#allocation2] sm:$0xff] %vm1120, %v2026
      %2032 = vst.msk [vmem:[#allocation2 + $0x8] sm:$0xff] %vm1120, %v2028
      %v2033 = vld [vmem:[#allocation2] sm:$0xff]
      %v2034 = vld [vmem:[#allocation2 + $0x8] sm:$0xff]
      %v2035 = vpack.c.bf16 %v2034, %v2033
      %s2036 = scalar_lea.vmem %s6, 16
      %v2037 = vld [vmem:[%s2036] sm:$0xf]
      %v2038 = vld [vmem:[%s2036 + $0x4] sm:$0xf]
      %v2039 = vld [vmem:[%s2036 + $0x8] sm:$0xf]
      %v2040 = vld [vmem:[%s2036 + $0xc] sm:$0xf]
      %v2045 = vunpack.c.l.b16 %v2037
      %v2046 = vunpack.c.l.b16 %v2038
      %v2047 = vunpack.c.l.b16 %v2039
      %v2048 = vunpack.c.l.b16 %v2040
      %v2049 = vpack.c.b16 %v2046, %v2045
      %v2050 = vpack.c.b16 %v2048, %v2047
      %v2054 = vsel %vm501, %v2035, 0
      %2056 = vmatprep.subr.bf16.mxu0 0
      %2057 = vmatpush1.bf16.msra.mxu0 %v2049
      %2058 = vmatprep.subr.bf16.mxu0 0
      %2059 = vmatpush1.bf16.msra.mxu0 %v2050
      %2060 = vmatprep.subr.bf16.mxu0 0
      %2061 = vmatpush1.bf16.msra.mxu0 0
      %2062 = vmatprep.subr.bf16.mxu0 0
      %2063 = vmatpush1.bf16.msra.mxu0 0
      %2064 = vmatprep.subr.bf16.mxu0 0
      %2065 = vmatpush1.bf16.msra.mxu0 0
      %2066 = vmatprep.subr.bf16.mxu0 0
      %2067 = vmatpush1.bf16.msra.mxu0 0
      %2068 = vmatprep.subr.bf16.mxu0 0
      %2069 = vmatpush1.bf16.msra.mxu0 0
      %2070 = vmatprep.subr.bf16.mxu0 0
      %2071 = vmatpush1.bf16.msra.mxu0 0
      %2072 = vmatprep.subr.bf16.mxu0 0
      %2073 = vmatpush1.bf16.msra.mxu0 0
      %2074 = vmatprep.subr.bf16.mxu0 0
      %2075 = vmatpush1.bf16.msra.mxu0 0
      %2076 = vmatprep.subr.bf16.mxu0 0
      %2077 = vmatpush1.bf16.msra.mxu0 0
      %2078 = vmatprep.subr.bf16.mxu0 0
      %2079 = vmatpush1.bf16.msra.mxu0 0
      %2080 = vmatprep.subr.bf16.mxu0 0
      %2081 = vmatpush1.bf16.msra.mxu0 0
      %2082 = vmatprep.subr.bf16.mxu0 0
      %2083 = vmatpush1.bf16.msra.mxu0 0
      %2084 = vmatprep.subr.bf16.mxu0 0
      %2085 = vmatpush1.bf16.msra.mxu0 0
      %2086 = vmatprep.subr.bf16.mxu0 0
      %2087 = vmatpush1.bf16.msra.mxu0 0
      %2088 = vmatprep.mubr.bf16.mxu0 0
      %2089 = vmatmul.mubr.bf16.gmra.mrb[0].mxu0 %v2054
      %v2090 = vpop.f32.mrb[0].mxu0
      %v2091 = vadd.f32 0.0, %v2090
      %v2092 = vpop.f32.mrb[0].mxu0
      %v2093 = vpop.f32.mrb[0].mxu0
      %v2094 = vadd.f32 0.0, %v2093
      %v2095 = vpop.f32.mrb[0].mxu0
      %2096 = vdwg.mxu0
      %v2097 = vadd.f32 %v1411, %v2091
      %v2098 = vadd.f32 %v1412, %v2094
      %v2099 = vlaneseq
      %v2100 = vshrl.u32 %v2099, 7
      %v2101 = vsub.s32 2, %v2100
      %v2102 = vrot.slane %v1414, %v2101
      %v2103 = vadd.f32 %v2097, %v2102
      %v2104 = vadd.f32 %v2098, %v2102
      %v2105 = vsel %vm501, %v2103, 0.0
      %2106 = vadd.xlane.f32.xlu0 %v2105
      %v2107 = vpop.xlane.xlu0 %2106
      %v2108 = vsel %vm501, %v2104, 0.0
      %2109 = vadd.xlane.f32.xlu0 %v2108
      %v2110 = vpop.xlane.xlu0 %2109
      %v2111 = vmul.f32 %v2107, %v508
      %v2112 = vmul.f32 %v2110, %v508
      %v2113 = vsub.f32 %v2103, %v2111
      %v2114 = vsub.f32 %v2104, %v2112
      %v2115 = vmul.f32 %v2113, %v2113
      %v2116 = vmul.f32 %v2114, %v2114
      %v2117 = vsel %vm501, %v2115, 0.0
      %2118 = vadd.xlane.f32.xlu0 %v2117
      %v2119 = vpop.xlane.xlu0 %2118
      %v2120 = vsel %vm501, %v2116, 0.0
      %2121 = vadd.xlane.f32.xlu0 %v2120
      %v2122 = vpop.xlane.xlu0 %2121
      %v2123 = vmul.f32 %v2119, %v508
      %v2124 = vmul.f32 %v2122, %v508
      %v2125 = vadd.f32 %v2123, 1e-05
      %v2126 = vadd.f32 %v2124, 1e-05
      %v2127 = vrsqrt.pop %v2125
      %v2128 = vrsqrt.pop %v2126
      %v2129 = vmul.f32 %v2113, %v2127
      %v2130 = vmul.f32 %v2114, %v2128
      %v2131 = vlaneseq
      %v2132 = vshrl.u32 %v2131, 7
      %v2133 = vsub.s32 3, %v2132
      %v2134 = vrot.slane %v1414, %v2133
      %v2135 = vmul.f32 %v2129, %v2134
      %v2136 = vmul.f32 %v2130, %v2134
      %v2137 = vlaneseq
      %v2138 = vshrl.u32 %v2137, 7
      %v2139 = vsub.s32 4, %v2138
      %v2140 = vrot.slane %v1414, %v2139
      %v2141 = vadd.f32 %v2135, %v2140
      %v2142 = vadd.f32 %v2136, %v2140
      %v2143 = vpack.c.bf16 %v2142, %v2141
      %s2144 = scalar_lea.vmem %s7, 16
      %v2145 = vld [vmem:[%s2144] sm:$0xf]
      %v2146 = vld [vmem:[%s2144 + $0x4] sm:$0xf]
      %v2147 = vld [vmem:[%s2144 + $0x8] sm:$0xf]
      %v2148 = vld [vmem:[%s2144 + $0xc] sm:$0xf]
      %v2150 = vlaneseq
      %v2151 = vshrl.u32 %v2150, 7
      %v2152 = vsub.s32 0, %v2151
      %v2153 = vrot.slane %v1416, %v2152
      %v2159 = vunpack.c.l.b16 %v2145
      %v2160 = vunpack.c.l.b16 %v2146
      %v2161 = vunpack.c.l.b16 %v2147
      %v2162 = vunpack.c.l.b16 %v2148
      %v2163 = vpack.c.b16 %v2160, %v2159
      %v2164 = vpack.c.b16 %v2162, %v2161
      %v2168 = vsel %vm501, %v2143, 0
      %2170 = vmatprep.subr.bf16.mxu0 0
      %2171 = vmatpush1.bf16.msra.mxu0 %v2163
      %2172 = vmatprep.subr.bf16.mxu0 0
      %2173 = vmatpush1.bf16.msra.mxu0 %v2164
      %2174 = vmatprep.subr.bf16.mxu0 0
      %2175 = vmatpush1.bf16.msra.mxu0 0
      %2176 = vmatprep.subr.bf16.mxu0 0
      %2177 = vmatpush1.bf16.msra.mxu0 0
      %2178 = vmatprep.subr.bf16.mxu0 0
      %2179 = vmatpush1.bf16.msra.mxu0 0
      %2180 = vmatprep.subr.bf16.mxu0 0
      %2181 = vmatpush1.bf16.msra.mxu0 0
      %2182 = vmatprep.subr.bf16.mxu0 0
      %2183 = vmatpush1.bf16.msra.mxu0 0
      %2184 = vmatprep.subr.bf16.mxu0 0
      %2185 = vmatpush1.bf16.msra.mxu0 0
      %2186 = vmatprep.subr.bf16.mxu0 0
      %2187 = vmatpush1.bf16.msra.mxu0 0
      %2188 = vmatprep.subr.bf16.mxu0 0
      %2189 = vmatpush1.bf16.msra.mxu0 0
      %2190 = vmatprep.subr.bf16.mxu0 0
      %2191 = vmatpush1.bf16.msra.mxu0 0
      %2192 = vmatprep.subr.bf16.mxu0 0
      %2193 = vmatpush1.bf16.msra.mxu0 0
      %2194 = vmatprep.subr.bf16.mxu0 0
      %2195 = vmatpush1.bf16.msra.mxu0 0
      %2196 = vmatprep.subr.bf16.mxu0 0
      %2197 = vmatpush1.bf16.msra.mxu0 0
      %2198 = vmatprep.subr.bf16.mxu0 0
      %2199 = vmatpush1.bf16.msra.mxu0 0
      %2200 = vmatprep.subr.bf16.mxu0 0
      %2201 = vmatpush1.bf16.msra.mxu0 0
      %2202 = vmatprep.mubr.bf16.mxu0 0
      %2203 = vmatmul.mubr.bf16.gmra.mrb[0].mxu0 %v2168
      %v2204 = vpop.f32.mrb[0].mxu0
      %v2205 = vadd.f32 %v2153, %v2204
      %v2206 = vpop.f32.mrb[0].mxu0
      %v2207 = vpop.f32.mrb[0].mxu0
      %v2208 = vadd.f32 %v2153, %v2207
      %v2209 = vpop.f32.mrb[0].mxu0
      %2210 = vdwg.mxu0
      %v2211 = vmax.f32 %v2205, 0.0
      %v2212 = vmax.f32 %v2208, 0.0
      %v2213 = vpack.c.bf16 %v2212, %v2211
      %s2214 = scalar_lea.vmem %s8, 64
      %v2215 = vld [vmem:[%s2214] sm:$0xf]
      %v2216 = vld [vmem:[%s2214 + $0x4] sm:$0xf]
      %v2217 = vld [vmem:[%s2214 + $0x8] sm:$0xf]
      %v2218 = vld [vmem:[%s2214 + $0xc] sm:$0xf]
      %v2219 = vld [vmem:[%s2214 + $0x10] sm:$0xf]
      %v2220 = vld [vmem:[%s2214 + $0x14] sm:$0xf]
      %v2221 = vld [vmem:[%s2214 + $0x18] sm:$0xf]
      %v2222 = vld [vmem:[%s2214 + $0x1c] sm:$0xf]
      %v2223 = vld [vmem:[%s2214 + $0x20] sm:$0xf]
      %v2224 = vld [vmem:[%s2214 + $0x24] sm:$0xf]
      %v2225 = vld [vmem:[%s2214 + $0x28] sm:$0xf]
      %v2226 = vld [vmem:[%s2214 + $0x2c] sm:$0xf]
      %v2227 = vld [vmem:[%s2214 + $0x30] sm:$0xf]
      %v2228 = vld [vmem:[%s2214 + $0x34] sm:$0xf]
      %v2229 = vld [vmem:[%s2214 + $0x38] sm:$0xf]
      %v2230 = vld [vmem:[%s2214 + $0x3c] sm:$0xf]
      %v2231 = vlaneseq
      %v2232 = vshrl.u32 %v2231, 7
      %v2233 = vsub.s32 5, %v2232
      %v2234 = vrot.slane %v1414, %v2233
      %v2251 = vunpack.c.l.b16 %v2215
      %v2252 = vunpack.c.l.b16 %v2216
      %v2253 = vunpack.c.l.b16 %v2217
      %v2254 = vunpack.c.l.b16 %v2218
      %v2255 = vunpack.c.l.b16 %v2219
      %v2256 = vunpack.c.l.b16 %v2220
      %v2257 = vunpack.c.l.b16 %v2221
      %v2258 = vunpack.c.l.b16 %v2222
      %v2259 = vunpack.c.l.b16 %v2223
      %v2260 = vunpack.c.l.b16 %v2224
      %v2261 = vunpack.c.l.b16 %v2225
      %v2262 = vunpack.c.l.b16 %v2226
      %v2263 = vunpack.c.l.b16 %v2227
      %v2264 = vunpack.c.l.b16 %v2228
      %v2265 = vunpack.c.l.b16 %v2229
      %v2266 = vunpack.c.l.b16 %v2230
      %v2267 = vpack.c.b16 %v2252, %v2251
      %v2268 = vpack.c.b16 %v2254, %v2253
      %v2269 = vpack.c.b16 %v2256, %v2255
      %v2270 = vpack.c.b16 %v2258, %v2257
      %v2271 = vpack.c.b16 %v2260, %v2259
      %v2272 = vpack.c.b16 %v2262, %v2261
      %v2273 = vpack.c.b16 %v2264, %v2263
      %v2274 = vpack.c.b16 %v2266, %v2265
      %2283 = vmatprep.subr.bf16.mxu0 0
      %2284 = vmatpush1.bf16.msra.mxu0 %v2267
      %2285 = vmatprep.subr.bf16.mxu0 0
      %2286 = vmatpush1.bf16.msra.mxu0 %v2268
      %2287 = vmatprep.subr.bf16.mxu0 0
      %2288 = vmatpush1.bf16.msra.mxu0 %v2269
      %2289 = vmatprep.subr.bf16.mxu0 0
      %2290 = vmatpush1.bf16.msra.mxu0 %v2270
      %2291 = vmatprep.subr.bf16.mxu0 0
      %2292 = vmatpush1.bf16.msra.mxu0 %v2271
      %2293 = vmatprep.subr.bf16.mxu0 0
      %2294 = vmatpush1.bf16.msra.mxu0 %v2272
      %2295 = vmatprep.subr.bf16.mxu0 0
      %2296 = vmatpush1.bf16.msra.mxu0 %v2273
      %2297 = vmatprep.subr.bf16.mxu0 0
      %2298 = vmatpush1.bf16.msra.mxu0 %v2274
      %2299 = vmatprep.subr.bf16.mxu0 0
      %2300 = vmatpush1.bf16.msra.mxu0 0
      %2301 = vmatprep.subr.bf16.mxu0 0
      %2302 = vmatpush1.bf16.msra.mxu0 0
      %2303 = vmatprep.subr.bf16.mxu0 0
      %2304 = vmatpush1.bf16.msra.mxu0 0
      %2305 = vmatprep.subr.bf16.mxu0 0
      %2306 = vmatpush1.bf16.msra.mxu0 0
      %2307 = vmatprep.subr.bf16.mxu0 0
      %2308 = vmatpush1.bf16.msra.mxu0 0
      %2309 = vmatprep.subr.bf16.mxu0 0
      %2310 = vmatpush1.bf16.msra.mxu0 0
      %2311 = vmatprep.subr.bf16.mxu0 0
      %2312 = vmatpush1.bf16.msra.mxu0 0
      %2313 = vmatprep.subr.bf16.mxu0 0
      %2314 = vmatpush1.bf16.msra.mxu0 0
      %2315 = vmatprep.mubr.bf16.mxu0 0
      %2316 = vmatmul.mubr.bf16.gmra.mrb[0].mxu0 %v2213
      %v2317 = vpop.f32.mrb[0].mxu0
      %v2318 = vadd.f32 %v2234, %v2317
      %v2319 = vpop.f32.mrb[0].mxu0
      %v2320 = vpop.f32.mrb[0].mxu0
      %v2321 = vadd.f32 %v2234, %v2320
      %v2322 = vpop.f32.mrb[0].mxu0
      %2323 = vdwg.mxu0
      %v2324 = vadd.f32 %v2103, %v2318
      %v2325 = vadd.f32 %v2104, %v2321
      %v2326 = vld [vmem:[%s9] sm:$0x1]
      %v2327 = vld [vmem:[%s9 + $0x1] sm:$0x1]
      %v2328 = vsel %vm501, %v2324, 0.0
      %2329 = vadd.xlane.f32.xlu0 %v2328
      %v2330 = vpop.xlane.xlu0 %2329
      %v2331 = vsel %vm501, %v2325, 0.0
      %2332 = vadd.xlane.f32.xlu0 %v2331
      %v2333 = vpop.xlane.xlu0 %2332
      %v2334 = vmul.f32 %v2330, %v508
      %v2335 = vmul.f32 %v2333, %v508
      %v2336 = vsub.f32 %v2324, %v2334
      %v2337 = vsub.f32 %v2325, %v2335
      %v2338 = vmul.f32 %v2336, %v2336
      %v2339 = vmul.f32 %v2337, %v2337
      %v2340 = vsel %vm501, %v2338, 0.0
      %2341 = vadd.xlane.f32.xlu0 %v2340
      %v2342 = vpop.xlane.xlu0 %2341
      %v2343 = vsel %vm501, %v2339, 0.0
      %2344 = vadd.xlane.f32.xlu0 %v2343
      %v2345 = vpop.xlane.xlu0 %2344
      %v2346 = vmul.f32 %v2342, %v508
      %v2347 = vmul.f32 %v2345, %v508
      %v2348 = vadd.f32 %v2346, 1e-05
      %v2349 = vadd.f32 %v2347, 1e-05
      %v2350 = vrsqrt.pop %v2348
      %v2351 = vrsqrt.pop %v2349
      %v2352 = vmul.f32 %v2336, %v2350
      %v2353 = vmul.f32 %v2337, %v2351
      %v2354 = vlaneseq
      %v2355 = vshrl.u32 %v2354, 7
      %v2356 = vsub.s32 0, %v2355
      %v2357 = vrot.slane %v2326, %v2356
      %v2358 = vmul.f32 %v2352, %v2357
      %v2359 = vmul.f32 %v2353, %v2357
      %v2360 = vlaneseq
      %v2361 = vshrl.u32 %v2360, 7
      %v2362 = vsub.s32 0, %v2361
      %v2363 = vrot.slane %v2327, %v2362
      %v2364 = vadd.f32 %v2358, %v2363
      %v2365 = vadd.f32 %v2359, %v2363
      %v2366 = vpack.c.bf16 %v2365, %v2364
      %v2367 = vld [vmem:[%s10] sm:$0xf]
      %v2368 = vld [vmem:[%s10 + $0x4] sm:$0xf]
      %v2369 = vld [vmem:[%s10 + $0x8] sm:$0xf]
      %v2370 = vld [vmem:[%s10 + $0xc] sm:$0xf]
      %v2371 = vld [vmem:[%s11] sm:$0x1]
      %v2373 = vlaneseq
      %v2374 = vshrl.u32 %v2373, 7
      %v2375 = vsub.s32 0, %v2374
      %v2376 = vrot.slane %v2371, %v2375
      %v2382 = vunpack.c.l.b16 %v2367
      %v2383 = vunpack.c.l.b16 %v2368
      %v2384 = vunpack.c.l.b16 %v2369
      %v2385 = vunpack.c.l.b16 %v2370
      %v2386 = vpack.c.b16 %v2383, %v2382
      %v2387 = vpack.c.b16 %v2385, %v2384
      %v2391 = vsel %vm501, %v2366, 0
      %2393 = vmatprep.subr.bf16.mxu0 0
      %2394 = vmatpush1.bf16.msra.mxu0 %v2386
      %2395 = vmatprep.subr.bf16.mxu0 0
      %2396 = vmatpush1.bf16.msra.mxu0 %v2387
      %2397 = vmatprep.subr.bf16.mxu0 0
      %2398 = vmatpush1.bf16.msra.mxu0 0
      %2399 = vmatprep.subr.bf16.mxu0 0
      %2400 = vmatpush1.bf16.msra.mxu0 0
      %2401 = vmatprep.subr.bf16.mxu0 0
      %2402 = vmatpush1.bf16.msra.mxu0 0
      %2403 = vmatprep.subr.bf16.mxu0 0
      %2404 = vmatpush1.bf16.msra.mxu0 0
      %2405 = vmatprep.subr.bf16.mxu0 0
      %2406 = vmatpush1.bf16.msra.mxu0 0
      %2407 = vmatprep.subr.bf16.mxu0 0
      %2408 = vmatpush1.bf16.msra.mxu0 0
      %2409 = vmatprep.subr.bf16.mxu0 0
      %2410 = vmatpush1.bf16.msra.mxu0 0
      %2411 = vmatprep.subr.bf16.mxu0 0
      %2412 = vmatpush1.bf16.msra.mxu0 0
      %2413 = vmatprep.subr.bf16.mxu0 0
      %2414 = vmatpush1.bf16.msra.mxu0 0
      %2415 = vmatprep.subr.bf16.mxu0 0
      %2416 = vmatpush1.bf16.msra.mxu0 0
      %2417 = vmatprep.subr.bf16.mxu0 0
      %2418 = vmatpush1.bf16.msra.mxu0 0
      %2419 = vmatprep.subr.bf16.mxu0 0
      %2420 = vmatpush1.bf16.msra.mxu0 0
      %2421 = vmatprep.subr.bf16.mxu0 0
      %2422 = vmatpush1.bf16.msra.mxu0 0
      %2423 = vmatprep.subr.bf16.mxu0 0
      %2424 = vmatpush1.bf16.msra.mxu0 0
      %2425 = vmatprep.mubr.bf16.mxu0 0
      %2426 = vmatmul.mubr.bf16.gmra.mrb[0].mxu0 %v2391
      %v2427 = vpop.f32.mrb[0].mxu0
      %v2428 = vadd.f32 %v2376, %v2427
      %v2429 = vpop.f32.mrb[0].mxu0
      %v2430 = vpop.f32.mrb[0].mxu0
      %v2431 = vadd.f32 %v2376, %v2430
      %v2432 = vpop.f32.mrb[0].mxu0
      %2433 = vdwg.mxu0
      %v2434 = vlaneseq
      %vm2435 = vcmp.ge.s32.totalorder %v2434, 0
      %vm2436 = vcmp.lt.s32.totalorder %v2434, 16
      %vm2437 = vmand %vm2435, %vm2436
      %2438 = vst.msk [vmem:[%s411] sm:$0x1] %vm2437, %v2428
      %v2441 = vunpack.c.l.s4 1966171168
      %v2442 = vunpack.c.0.s8 %v2441
      %v2443 = vlaneseq
      %v2444 = vshrl.u32 %v2443, 7
      %v2445 = vsub.s32 %v2442, %v2444
      %v2446 = vrot.slane %v2428, %v2445
      %v2447 = vcombine.high %v2446, %v2446
      %v2449 = vunpack.c.l.s4 1966171168
      %v2450 = vunpack.c.0.s8 %v2449
      %v2451 = vlaneseq
      %v2452 = vshrl.u32 %v2451, 7
      %v2453 = vsub.s32 %v2450, %v2452
      %v2454 = vrot.slane %v2446, %v2453
      %v2456 = vunpack.c.l.s4 1966171168
      %v2457 = vunpack.c.0.s8 %v2456
      %v2458 = vlaneseq
      %v2459 = vshrl.u32 %v2458, 7
      %v2460 = vsub.s32 %v2457, %v2459
      %v2461 = vrot.slane %v2447, %v2460
      %2462 = vrot.lane.b32.xlu0 %v2461, 16
      %v2463 = vpop.permute.xlu0 %2462
      %vm2465 = vcmp.ge.s32.totalorder %v2434, 16
      %vm2466 = vcmp.lt.s32.totalorder %v2434, 32
      %vm2467 = vmand %vm2465, %vm2466
      %2468 = vst.msk [vmem:[%s411] sm:$0x1] %vm2467, %v2463
      %v2469 = vcombine.high %v2454, %v2454
      %2470 = vrot.lane.b32.xlu0 %v2469, 32
      %v2471 = vpop.permute.xlu0 %2470
      %vm2473 = vcmp.ge.s32.totalorder %v2434, 32
      %vm2474 = vcmp.lt.s32.totalorder %v2434, 48
      %vm2475 = vmand %vm2473, %vm2474
      %2476 = vst.msk [vmem:[%s411] sm:$0x1] %vm2475, %v2471
      %v2477 = vcombine.high %v2461, %v2461
      %2478 = vrot.lane.b32.xlu0 %v2477, 48
      %v2479 = vpop.permute.xlu0 %2478
      %vm2481 = vcmp.ge.s32.totalorder %v2434, 48
      %vm2482 = vcmp.lt.s32.totalorder %v2434, 64
      %vm2483 = vmand %vm2481, %vm2482
      %2484 = vst.msk [vmem:[%s411] sm:$0x1] %vm2483, %v2479
      %v2485 = vcombine.high %v2428, %v2428
      %v2487 = vunpack.c.l.s4 1966171168
      %v2488 = vunpack.c.0.s8 %v2487
      %v2489 = vlaneseq
      %v2490 = vshrl.u32 %v2489, 7
      %v2491 = vsub.s32 %v2488, %v2490
      %v2492 = vrot.slane %v2485, %v2491
      %v2494 = vunpack.c.l.s4 1966171168
      %v2495 = vunpack.c.0.s8 %v2494
      %v2496 = vlaneseq
      %v2497 = vshrl.u32 %v2496, 7
      %v2498 = vsub.s32 %v2495, %v2497
      %v2499 = vrot.slane %v2492, %v2498
      %2500 = vrot.lane.b32.xlu0 %v2499, 64
      %v2501 = vpop.permute.xlu0 %2500
      %vm2503 = vcmp.ge.s32.totalorder %v2434, 64
      %vm2504 = vcmp.lt.s32.totalorder %v2434, 80
      %vm2505 = vmand %vm2503, %vm2504
      %2506 = vst.msk [vmem:[%s411] sm:$0x1] %vm2505, %v2501
      %v2507 = vcombine.high %v2492, %v2492
      %v2509 = vunpack.c.l.s4 1966171168
      %v2510 = vunpack.c.0.s8 %v2509
      %v2511 = vlaneseq
      %v2512 = vshrl.u32 %v2511, 7
      %v2513 = vsub.s32 %v2510, %v2512
      %v2514 = vrot.slane %v2507, %v2513
      %2515 = vrot.lane.b32.xlu0 %v2514, 80
      %v2516 = vpop.permute.xlu0 %2515
      %vm2518 = vcmp.ge.s32.totalorder %v2434, 80
      %vm2519 = vcmp.lt.s32.totalorder %v2434, 96
      %vm2520 = vmand %vm2518, %vm2519
      %2521 = vst.msk [vmem:[%s411] sm:$0x1] %vm2520, %v2516
      %v2522 = vcombine.high %v2499, %v2499
      %2523 = vrot.lane.b32.xlu0 %v2522, 96
      %v2524 = vpop.permute.xlu0 %2523
      %vm2526 = vcmp.ge.s32.totalorder %v2434, 96
      %vm2527 = vcmp.lt.s32.totalorder %v2434, 112
      %vm2528 = vmand %vm2526, %vm2527
      %2529 = vst.msk [vmem:[%s411] sm:$0x1] %vm2528, %v2524
      %v2530 = vcombine.high %v2514, %v2514
      %2531 = vrot.lane.b32.xlu0 %v2530, 112
      %v2532 = vpop.permute.xlu0 %2531
      %vm2534 = vcmp.ge.s32.totalorder %v2434, 112
      %vm2535 = vcmp.lt.s32.totalorder %v2434, 128
      %vm2536 = vmand %vm2534, %vm2535
      %2537 = vst.msk [vmem:[%s411] sm:$0x1] %vm2536, %v2532
      %2538 = vst.msk [vmem:[%s411 + $0x1] sm:$0x1] %vm2437, %v2431
      %v2541 = vunpack.c.l.s4 1966171168
      %v2542 = vunpack.c.0.s8 %v2541
      %v2543 = vlaneseq
      %v2544 = vshrl.u32 %v2543, 7
      %v2545 = vsub.s32 %v2542, %v2544
      %v2546 = vrot.slane %v2431, %v2545
      %v2547 = vcombine.high %v2546, %v2546
      %v2549 = vunpack.c.l.s4 1966171168
      %v2550 = vunpack.c.0.s8 %v2549
      %v2551 = vlaneseq
      %v2552 = vshrl.u32 %v2551, 7
      %v2553 = vsub.s32 %v2550, %v2552
      %v2554 = vrot.slane %v2546, %v2553
      %v2556 = vunpack.c.l.s4 1966171168
      %v2557 = vunpack.c.0.s8 %v2556
      %v2558 = vlaneseq
      %v2559 = vshrl.u32 %v2558, 7
      %v2560 = vsub.s32 %v2557, %v2559
      %v2561 = vrot.slane %v2547, %v2560
      %2562 = vrot.lane.b32.xlu0 %v2561, 16
      %v2563 = vpop.permute.xlu0 %2562
      %2565 = vst.msk [vmem:[%s411 + $0x1] sm:$0x1] %vm2467, %v2563
      %v2566 = vcombine.high %v2554, %v2554
      %2567 = vrot.lane.b32.xlu0 %v2566, 32
      %v2568 = vpop.permute.xlu0 %2567
      %2570 = vst.msk [vmem:[%s411 + $0x1] sm:$0x1] %vm2475, %v2568
      %v2571 = vcombine.high %v2561, %v2561
      %2572 = vrot.lane.b32.xlu0 %v2571, 48
      %v2573 = vpop.permute.xlu0 %2572
      %2575 = vst.msk [vmem:[%s411 + $0x1] sm:$0x1] %vm2483, %v2573
      %v2576 = vcombine.high %v2431, %v2431
      %v2578 = vunpack.c.l.s4 1966171168
      %v2579 = vunpack.c.0.s8 %v2578
      %v2580 = vlaneseq
      %v2581 = vshrl.u32 %v2580, 7
      %v2582 = vsub.s32 %v2579, %v2581
      %v2583 = vrot.slane %v2576, %v2582
      %v2585 = vunpack.c.l.s4 1966171168
      %v2586 = vunpack.c.0.s8 %v2585
      %v2587 = vlaneseq
      %v2588 = vshrl.u32 %v2587, 7
      %v2589 = vsub.s32 %v2586, %v2588
      %v2590 = vrot.slane %v2583, %v2589
      %2591 = vrot.lane.b32.xlu0 %v2590, 64
      %v2592 = vpop.permute.xlu0 %2591
      %2594 = vst.msk [vmem:[%s411 + $0x1] sm:$0x1] %vm2505, %v2592
      %v2595 = vcombine.high %v2583, %v2583
      %v2597 = vunpack.c.l.s4 1966171168
      %v2598 = vunpack.c.0.s8 %v2597
      %v2599 = vlaneseq
      %v2600 = vshrl.u32 %v2599, 7
      %v2601 = vsub.s32 %v2598, %v2600
      %v2602 = vrot.slane %v2595, %v2601
      %2603 = vrot.lane.b32.xlu0 %v2602, 80
      %v2604 = vpop.permute.xlu0 %2603
      %2606 = vst.msk [vmem:[%s411 + $0x1] sm:$0x1] %vm2520, %v2604
      %v2607 = vcombine.high %v2590, %v2590
      %2608 = vrot.lane.b32.xlu0 %v2607, 96
      %v2609 = vpop.permute.xlu0 %2608
      %2611 = vst.msk [vmem:[%s411 + $0x1] sm:$0x1] %vm2528, %v2609
      %v2612 = vcombine.high %v2602, %v2602
      %2613 = vrot.lane.b32.xlu0 %v2612, 112
      %v2614 = vpop.permute.xlu0 %2613
      %2616 = vst.msk [vmem:[%s411 + $0x1] sm:$0x1] %vm2536, %v2614
      %p2617 = scmp.lt.s32.totalorder %s23, 1
      %s2618 = scalar_select %p2617, %s23, 1
      %s2619 = smul.addr %s2618, 2
      %s2620 = scalar_lea.vmem %s12, %s2619
      // Predicated region
      $region69: #{frame_predictor.1} parent=67 // pred_check
        %p2621 = pneg %p298
      $region70: #{frame_predictor.1} parent=67 // pred_check_branch
        %2623 = sbr.rel (%p2621) target = $region72
      $region71: #{frame_predictor.1} parent=67 // pred_region
        _
      $region72: #{frame_predictor.1} parent=67 // pred_fallthru
        _
    $region68: #{frame_predictor.1} parent=5 // pred_fallthru
      _
    %p2624 = scmp.le.s32.totalorder 2, %s18
    // Predicated region
    $region73: #{frame_predictor.1} parent=5 // pred_check
      %p2625 = pneg %p2624
    $region74: #{frame_predictor.1} parent=5 // pred_check_branch
      %2627 = sbr.rel (%p2625) target = $region76
    $region75: #{frame_predictor.1} parent=5 // pred_region
      %s2628 = ssub.s32 %s18, 2
      // Predicated region
      $region77: #{frame_predictor.1} parent=75 // pred_check
        %p2629 = pneg %p304
      $region78: #{frame_predictor.1} parent=75 // pred_check_branch
        %2631 = sbr.rel (%p2629) target = $region80
      $region79: #{frame_predictor.1} parent=75 // pred_region
        %p2632 = scmp.lt.s32.totalorder %s24, 1
        %s2633 = scalar_select %p2632, %s24, 1
        %s2634 = smul.addr %s2633, 2
        %s2635 = scalar_lea.vmem %s12, %s2634
      $region80: #{frame_predictor.1} parent=75 // pred_fallthru
        _
    $region76: #{frame_predictor.1} parent=5 // pred_fallthru
      _
  $region6: #{frame_predictor.1} parent=0 // loop_footer
    %s22 = sadd.s32 1, %s18
  $region7: #{frame_predictor.1} parent=0 // loop_footer_branch
    %17 = sbr.rel target = $region3
  $region8: #{frame_predictor.1} parent=0 // loop_exit
    _

</llo_original>
